<compile_context>
chip_gen: v7x
topology: tpu7x:2x2x1
jax: 0.10.0
libtpu: 0.0.40
codegen_flags: <defaults>
</compile_context>

<pallas_src>
import functools

import jax
import jax.numpy as jnp
import numpy as np
from jax import lax
from jax.experimental import pallas as pl
from jax.experimental.pallas import tpu as pltpu

LANE = 128
SUBLANE = 8


def _round_up(x, m):
    return (x + m - 1) // m * m


# ----------------------------------------------------------------------------
# Kernel
# ----------------------------------------------------------------------------
def bottleneck_kernel(xp_ref, xc_ref, xn_ref,
                      w1_ref, s1_ref, b1_ref,
                      w2_ref, s2_ref, b2_ref,
                      w3_ref, s3_ref, b3_ref,
                      o_ref, *, width, use_roll):
    # xc_ref: (1, TH, Wp, C) bf16 tile; xp_ref / xn_ref: (1, 1, Wp, C) bf16
    # halo rows (image rows t*th-1 and t*th+th, clamped at the boundary).
    TH, Wp, C = xc_ref.shape[1], xc_ref.shape[2], xc_ref.shape[3]
    Pp = w1_ref.shape[1]           # bottleneck width, padded to a lane multiple
    M = TH * Wp                    # output rows (flattened h*w)
    R = (TH + 2) * Wp              # rows incl. the two halo rows

    t = pl.program_id(1)
    n_tiles = pl.num_programs(1)

    # ---- stage 1: 1x1 conv (bf16 MXU, f32 acc) + folded BN + ReLU ----------
    w1 = w1_ref[...]
    h1p = jnp.dot(xp_ref[0, 0], w1, preferred_element_type=jnp.float32)
    h1c = jnp.dot(xc_ref[0].reshape(M, C), w1,
                  preferred_element_type=jnp.float32)
    h1n = jnp.dot(xn_ref[0, 0], w1, preferred_element_type=jnp.float32)
    h1 = jnp.concatenate([h1p, h1c, h1n], axis=0)                    # (R, Pp)
    h1 = jnp.maximum(h1 * s1_ref[...] + b1_ref[...], 0.0)

    # Halo rows outside the image must be zero *after* stage 1 (the 3x3 conv
    # zero-pads its input and relu(bn(conv1(0))) != 0).
    row = lax.broadcasted_iota(jnp.int32, (R, 1), 0)
    oob = ((t == 0) & (row < Wp)) | ((t == n_tiles - 1) & (row >= (TH + 1) * Wp))
    h1 = jnp.where(oob, 0.0, h1)

    # ---- stage 2: 3x3 conv (pad=1, stride=1) + BN + ReLU --------------------
    # kw taps in the flattened (row-major) spatial index: "left" reads j-1,
    # "right" reads j+1; image-width boundary columns are masked to zero
    # (also covers the wrap-around row of the roll / shift).
    col = lax.broadcasted_iota(jnp.int32, (R, 1), 0) % Wp
    if use_roll:
        # 1-row shift on the XLU instead of vld/vst copies.
        left = jnp.where(col == 0, 0.0, pltpu.roll(h1, shift=1, axis=0))
        right = jnp.where(col == width - 1, 0.0,
                          pltpu.roll(h1, shift=-1, axis=0))
    else:
        zrow = jnp.zeros((1, Pp), jnp.float32)
        left = jnp.where(col == 0, 0.0,
                         jnp.concatenate([zrow, h1[:R - 1]], axis=0))
        right = jnp.where(col == width - 1, 0.0,
                          jnp.concatenate([h1[1:], zrow], axis=0))

    # One lane-concat into (R, 3*Pp) bf16; the per-kh LHS are then aligned
    # (Wp is a sublane multiple) row-slice views of it.
    lcr = jnp.concatenate([left.astype(jnp.bfloat16),
                           h1.astype(jnp.bfloat16),
                           right.astype(jnp.bfloat16)], axis=1)      # (R, 3Pp)
    # TODO(synk): on v6e a single K=9*Pp dot (im2col over kh as well) may win;
    # the 3-dot form is kept as the portable default (v5e/v7x).
    acc = jnp.zeros((M, Pp), jnp.float32)
    for kh in range(3):
        r0 = kh * Wp
        acc = acc + jnp.dot(lcr[r0:r0 + M], w2_ref[kh],
                            preferred_element_type=jnp.float32)
    h2 = jnp.maximum(acc * s2_ref[...] + b2_ref[...], 0.0)           # (M, Pp)

    # ---- stage 3: 1x1 conv + BN --------------------------------------------
    h3 = jnp.dot(h2.astype(jnp.bfloat16), w3_ref[...],
                 preferred_element_type=jnp.float32)
    h3 = h3 * s3_ref[...] + b3_ref[...]                              # (M, C)

    # ---- identity residual (re-read x, upcast to f32) + ReLU ----------------
    res = xc_ref[0].reshape(M, C).astype(jnp.float32)
    out = jnp.maximum(h3 + res, 0.0)
    o_ref[0] = out.reshape(TH, Wp, C).astype(o_ref.dtype)


# ----------------------------------------------------------------------------
# Tiling / VMEM heuristics
# ----------------------------------------------------------------------------
def _vmem_limit_bytes():
    cap = 128 * 1024 * 1024
    try:
        cap = int(getattr(pltpu.get_tpu_info(), "vmem_capacity_bytes", cap))
    except Exception:
        pass
    # v5e/v6e (128 MiB) -> ~100 MiB; v7x (64 MiB / TC) -> ~50 MiB.
    return min(int(cap * 0.78), 100 * 1024 * 1024)


def _per_step_vmem_bytes(th, Wp, C, Pp):
    R, M = (th + 2) * Wp, th * Wp
    x_io = 2 * (th + 2) * Wp * C * 2            # x tile + halo rows, bf16, 2x buf
    out_io = 2 * M * C * 2                      # out tile, bf16, 2x buffered
    weights = 2 * 2 * (C * Pp + 9 * Pp * Pp + Pp * C)
    temps = (3 * R * Pp * 4                     # h1 / left / right (f32)
             + R * 3 * Pp * 2                   # lcr (bf16)
             + 2 * M * Pp * 4                   # acc / h2 (f32)
             + 3 * M * C * 4)                   # h3 / res / out (f32)
    return x_io + out_io + weights + temps


def _pick_tile_rows(H, Wp, C, Pp, budget_bytes, target_rows=1024):
    divisors = [d for d in range(1, H + 1) if H % d == 0]
    fits = [d for d in divisors
            if _per_step_vmem_bytes(d, Wp, C, Pp) <= budget_bytes]
    if not fits:
        return 1
    big = [d for d in fits if d * Wp >= target_rows]
    return min(big) if big else max(fits)


# ----------------------------------------------------------------------------
# Wrappers
# ----------------------------------------------------------------------------
def pad_params(params):
    """Pad channel dims to lane multiples; conv weights in bf16, BN in f32."""
    (w1, s1, b1, w2, s2, b2, w3, s3, b3) = params
    Cin, P = w1.shape
    Cout = w3.shape[1]
    C = _round_up(Cin, LANE)
    Pp = _round_up(P, LANE)
    Co = _round_up(Cout, LANE)
    w1p = jnp.pad(w1, ((0, C - Cin), (0, Pp - P))).astype(jnp.bfloat16)
    w2p = jnp.pad(w2, ((0, 0), (0, 0), (0, Pp - P), (0, Pp - P)))
    w2p = w2p.reshape(3, 3 * Pp, Pp).astype(jnp.bfloat16)   # (kh, kw*P + ci, co)
    w3p = jnp.pad(w3, ((0, Pp - P), (0, Co - Cout))).astype(jnp.bfloat16)
    pvec = lambda v, c: jnp.pad(v, ((0, 0), (0, c - v.shape[1])))
    return (w1p, pvec(s1, Pp), pvec(b1, Pp),
            w2p, pvec(s2, Pp), pvec(b2, Pp),
            w3p, pvec(s3, Co), pvec(b3, Co))


def bottleneck_nhwc(x_pad, padded_params, *, width, cin, planes, cout,
                    use_roll=True):
    """x_pad: (N, H, Wp, C) bf16 channel/width zero-padded NHWC.
    Returns the same padded layout in bf16 (directly chainable)."""
    (w1p, s1p, b1p, w2p, s2p, b2p, w3p, s3p, b3p) = padded_params
    N, H, Wp, C = x_pad.shape
    Pp = w1p.shape[1]

    vmem_limit = _vmem_limit_bytes()
    th = _pick_tile_rows(H, Wp, C, Pp, int(vmem_limit * 0.7))
    n_tiles = H // th

    # Scheduler hint from unpadded dims and true bf16 HBM traffic.
    flops = int(2 * N * H * width *
                (cin * planes + 9 * planes * planes + planes * cout))
    bytes_accessed = int(N * (H + 2 * n_tiles) * Wp * C * 2      # x + halo reads
                         + N * H * Wp * C * 2                    # out writes
                         + (w1p.size + w2p.size + w3p.size) * 2
                         + (s1p.size + b1p.size + s2p.size + b2p.size
                            + s3p.size + b3p.size) * 4)

    full = lambda a: pl.BlockSpec(a.shape, lambda n, t: (0,) * a.ndim)
    prev_map = lambda n, t: (n, jnp.maximum(t * th - 1, 0), 0, 0)
    next_map = lambda n, t: (n, jnp.minimum(t * th + th, H - 1), 0, 0)

    kernel = functools.partial(bottleneck_kernel, width=width, use_roll=use_roll)
    return pl.pallas_call(
        kernel,
        out_shape=jax.ShapeDtypeStruct((N, H, Wp, C), jnp.bfloat16),
        grid_spec=pltpu.PrefetchScalarGridSpec(
            num_scalar_prefetch=0,
            grid=(N, n_tiles),
            in_specs=[
                pl.BlockSpec((1, 1, Wp, C), prev_map),               # halo above
                pl.BlockSpec((1, th, Wp, C), lambda n, t: (n, t, 0, 0)),
                pl.BlockSpec((1, 1, Wp, C), next_map),               # halo below
                full(w1p), full(s1p), full(b1p),
                full(w2p), full(s2p), full(b2p),
                full(w3p), full(s3p), full(b3p),
            ],
            out_specs=pl.BlockSpec((1, th, Wp, C), lambda n, t: (n, t, 0, 0)),
        ),
        compiler_params=pltpu.CompilerParams(
            dimension_semantics=("parallel", "parallel"),
            vmem_limit_bytes=vmem_limit),
        cost_estimate=pl.CostEstimate(flops=flops, transcendentals=0,
                                      bytes_accessed=bytes_accessed),
    )(x_pad, x_pad, x_pad, w1p, s1p, b1p, w2p, s2p, b2p, w3p, s3p, b3p)


def bottleneck_forward(x_nchw, params):
    """NCHW f32 -> NCHW f32 convenience wrapper around the NHWC bf16 core."""
    (w1, s1, b1, w2, s2, b2, w3, s3, b3) = params
    N, Cin, H, W = x_nchw.shape
    P = w1.shape[1]
    Cout = w3.shape[1]
    assert Cout == Cin, "identity residual requires inplanes == planes * 4"
    C = _round_up(Cin, LANE)
    Wp = _round_up(W, SUBLANE)

    padded = pad_params(params)
    x = jnp.transpose(x_nchw, (0, 2, 3, 1)).astype(jnp.bfloat16)
    x = jnp.pad(x, ((0, 0), (0, 0), (0, Wp - W), (0, C - Cin)))

    def run(use_roll):
        o = bottleneck_nhwc(x, padded, width=W, cin=Cin, planes=P, cout=Cout,
                            use_roll=use_roll)
        return jax.block_until_ready(o)

    try:
        out = run(True)
    except Exception:
        # Fallback: concat-based column shift if the sublane roll is rejected
        # by this backend build (identical numerics, slightly more vst work).
        out = run(False)

    out = out[:, :, :W, :Cout].astype(jnp.float32)
    return jnp.transpose(out, (0, 3, 1, 2))      # NHWC -> NCHW


# ----------------------------------------------------------------------------
# Synthetic params + pure-JAX reference
# ----------------------------------------------------------------------------
def make_params(key, inplanes, planes, eps=1e-5):
    """Deterministic synthetic weights; BN folded into scale/bias (eval mode)."""
    ks = jax.random.split(key, 12)
    cout3 = planes * 4

    def bn_fold(kg, kb, km, kv, c):
        gamma = jax.random.uniform(kg, (c,), jnp.float32, 0.5, 1.5)
        beta = jax.random.normal(kb, (c,), jnp.float32) * 0.1
        mean = jax.random.normal(km, (c,), jnp.float32) * 0.1
        var = jax.random.uniform(kv, (c,), jnp.float32, 0.5, 1.5)
        scale = gamma / jnp.sqrt(var + eps)
        bias = beta - mean * scale
        return scale.reshape(1, c), bias.reshape(1, c)

    # conv weights stored as (Cin, Cout) / (kh, kw, Cin, Cout) for NHWC matmuls
    w1 = jax.random.normal(ks[0], (inplanes, planes), jnp.float32) * (1.0 / np.sqrt(inplanes))
    w2 = jax.random.normal(ks[1], (3, 3, planes, planes), jnp.float32) * (1.0 / np.sqrt(9 * planes))
    w3 = jax.random.normal(ks[2], (planes, cout3), jnp.float32) * (1.0 / np.sqrt(planes))
    s1, b1 = bn_fold(ks[3], ks[4], ks[5], ks[6], planes)
    s2, b2 = bn_fold(ks[7], ks[8], ks[9], ks[10], planes)
    s3, b3 = bn_fold(ks[11], ks[3], ks[7], ks[0], cout3)
    return (w1, s1, b1, w2, s2, b2, w3, s3, b3)


def bottleneck_reference(x_nchw, params):
    """Pure-JAX reference: lax.conv with bf16 inputs / f32 accumulation."""
    (w1, s1, b1, w2, s2, b2, w3, s3, b3) = params
    x = jnp.transpose(x_nchw, (0, 2, 3, 1))
    dn = ("NHWC", "HWIO", "NHWC")

    def conv(h, w_hwio):
        return lax.conv_general_dilated(
            h.astype(jnp.bfloat16), w_hwio.astype(jnp.bfloat16), (1, 1), "SAME",
            dimension_numbers=dn, preferred_element_type=jnp.float32)

    h = conv(x, w1.reshape(1, 1, *w1.shape)) * s1 + b1
    h = jnp.maximum(h, 0.0)
    h = conv(h, w2) * s2 + b2
    h = jnp.maximum(h, 0.0)
    h = conv(h, w3.reshape(1, 1, *w3.shape)) * s3 + b3
    out = jnp.maximum(h + x, 0.0)
    return jnp.transpose(out, (0, 3, 1, 2))


if __name__ == "__main__":
    key = jax.random.PRNGKey(0)
    k_x, k_p = jax.random.split(key)

    # inplanes == 4*planes -> identity residual (the default Bottleneck case)
    N, inplanes, planes, H, W = 2, 32, 8, 16, 16
    x = jax.random.normal(k_x, (N, inplanes, H, W), jnp.float32)
    params = make_params(k_p, inplanes, planes)

    out = jax.block_until_ready(bottleneck_forward(x, params))
    ref = jax.block_until_ready(bottleneck_reference(x, params))
    np.testing.assert_allclose(np.asarray(out), np.asarray(ref),
                               rtol=2e-2, atol=4e-2)
    print("KERNEL_OK")
</pallas_src>

<mosaic_0001>
module attributes {stable_mosaic.version = 11 : i64} {
  func.func @bottleneck_kernel(%arg0: i32, %arg1: i32, %arg2: memref<1x1x16x128xbf16, #tpu.memory_space<vmem>>, %arg3: memref<1x16x16x128xbf16, #tpu.memory_space<vmem>>, %arg4: memref<1x1x16x128xbf16, #tpu.memory_space<vmem>>, %arg5: memref<128x128xbf16, #tpu.memory_space<vmem>>, %arg6: memref<1x128xf32, #tpu.memory_space<vmem>>, %arg7: memref<1x128xf32, #tpu.memory_space<vmem>>, %arg8: memref<3x384x128xbf16, #tpu.memory_space<vmem>>, %arg9: memref<1x128xf32, #tpu.memory_space<vmem>>, %arg10: memref<1x128xf32, #tpu.memory_space<vmem>>, %arg11: memref<128x128xbf16, #tpu.memory_space<vmem>>, %arg12: memref<1x128xf32, #tpu.memory_space<vmem>>, %arg13: memref<1x128xf32, #tpu.memory_space<vmem>>, %arg14: memref<1x16x16x128xbf16, #tpu.memory_space<vmem>>) attributes {dimension_semantics = [#tpu.dimension_semantics<parallel>, #tpu.dimension_semantics<parallel>], iteration_bounds = array<i64: 2, 1>, scalar_prefetch = 0 : i64, scratch_operands = 0 : i64, tpu.core_type = #tpu.core_type<tc>, window_params = [{transform_indices = @transform_0, window_bounds = array<i64: 1, 1, 16, 128>}, {transform_indices = @transform_1, window_bounds = array<i64: 1, 16, 16, 128>}, {transform_indices = @transform_2, window_bounds = array<i64: 1, 1, 16, 128>}, {pipeline_mode = #tpu.pipeline_mode<synchronous>, transform_indices = @transform_3, window_bounds = array<i64: 128, 128>}, {pipeline_mode = #tpu.pipeline_mode<synchronous>, transform_indices = @transform_4, window_bounds = array<i64: 1, 128>}, {pipeline_mode = #tpu.pipeline_mode<synchronous>, transform_indices = @transform_5, window_bounds = array<i64: 1, 128>}, {pipeline_mode = #tpu.pipeline_mode<synchronous>, transform_indices = @transform_6, window_bounds = array<i64: 3, 384, 128>}, {pipeline_mode = #tpu.pipeline_mode<synchronous>, transform_indices = @transform_7, window_bounds = array<i64: 1, 128>}, {pipeline_mode = #tpu.pipeline_mode<synchronous>, transform_indices = @transform_8, window_bounds = array<i64: 1, 128>}, {pipeline_mode = #tpu.pipeline_mode<synchronous>, transform_indices = @transform_9, window_bounds = array<i64: 128, 128>}, {pipeline_mode = #tpu.pipeline_mode<synchronous>, transform_indices = @transform_10, window_bounds = array<i64: 1, 128>}, {pipeline_mode = #tpu.pipeline_mode<synchronous>, transform_indices = @transform_11, window_bounds = array<i64: 1, 128>}, {transform_indices = @transform_12, window_bounds = array<i64: 1, 16, 16, 128>}]} {
    %c0 = arith.constant 0 : index
    %c0_0 = arith.constant 0 : index
    %0 = vector.load %arg5[%c0, %c0_0] : memref<128x128xbf16, #tpu.memory_space<vmem>>, vector<128x128xbf16>
    %c0_1 = arith.constant 0 : index
    %c0_2 = arith.constant 0 : index
    %c0_3 = arith.constant 0 : index
    %c0_4 = arith.constant 0 : index
    %1 = vector.load %arg2[%c0_1, %c0_2, %c0_3, %c0_4] : memref<1x1x16x128xbf16, #tpu.memory_space<vmem>>, vector<1x1x16x128xbf16>
    %2 = vector.shape_cast %1 : vector<1x1x16x128xbf16> to vector<16x128xbf16>
    %cst = arith.constant dense<0.000000e+00> : vector<16x128xf32>
    %3 = tpu.matmul %2, %0, %cst {dimension_numbers = #tpu.dot_dimension_numbers<[1], [0], [0], [1], [0, 0, 1, 1], [], []>} : vector<16x128xbf16>, vector<128x128xbf16>, vector<16x128xf32> -> vector<16x128xf32>
    %c0_5 = arith.constant 0 : index
    %c0_6 = arith.constant 0 : index
    %c0_7 = arith.constant 0 : index
    %c0_8 = arith.constant 0 : index
    %4 = vector.load %arg3[%c0_5, %c0_6, %c0_7, %c0_8] : memref<1x16x16x128xbf16, #tpu.memory_space<vmem>>, vector<1x16x16x128xbf16>
    %5 = vector.shape_cast %4 : vector<1x16x16x128xbf16> to vector<16x16x128xbf16>
    %6 = vector.shape_cast %5 : vector<16x16x128xbf16> to vector<256x128xbf16>
    %cst_9 = arith.constant dense<0.000000e+00> : vector<256x128xf32>
    %7 = tpu.matmul %6, %0, %cst_9 {dimension_numbers = #tpu.dot_dimension_numbers<[1], [0], [0], [1], [0, 0, 1, 1], [], []>} : vector<256x128xbf16>, vector<128x128xbf16>, vector<256x128xf32> -> vector<256x128xf32>
    %c0_10 = arith.constant 0 : index
    %c0_11 = arith.constant 0 : index
    %c0_12 = arith.constant 0 : index
    %c0_13 = arith.constant 0 : index
    %8 = vector.load %arg4[%c0_10, %c0_11, %c0_12, %c0_13] : memref<1x1x16x128xbf16, #tpu.memory_space<vmem>>, vector<1x1x16x128xbf16>
    %9 = vector.shape_cast %8 : vector<1x1x16x128xbf16> to vector<16x128xbf16>
    %cst_14 = arith.constant dense<0.000000e+00> : vector<16x128xf32>
    %10 = tpu.matmul %9, %0, %cst_14 {dimension_numbers = #tpu.dot_dimension_numbers<[1], [0], [0], [1], [0, 0, 1, 1], [], []>} : vector<16x128xbf16>, vector<128x128xbf16>, vector<16x128xf32> -> vector<16x128xf32>
    %11 = tpu.concatenate %3, %7, %10 in 0 : vector<16x128xf32>, vector<256x128xf32>, vector<16x128xf32> -> vector<288x128xf32>
    %c0_15 = arith.constant 0 : index
    %c0_16 = arith.constant 0 : index
    %12 = vector.load %arg6[%c0_15, %c0_16] : memref<1x128xf32, #tpu.memory_space<vmem>>, vector<1x128xf32>
    %13 = vector.broadcast %12 : vector<1x128xf32> to vector<288x128xf32>
    %14 = arith.mulf %11, %13 : vector<288x128xf32>
    %c0_17 = arith.constant 0 : index
    %c0_18 = arith.constant 0 : index
    %15 = vector.load %arg7[%c0_17, %c0_18] : memref<1x128xf32, #tpu.memory_space<vmem>>, vector<1x128xf32>
    %16 = vector.broadcast %15 : vector<1x128xf32> to vector<288x128xf32>
    %17 = arith.addf %14, %16 : vector<288x128xf32>
    %cst_19 = arith.constant 0.000000e+00 : f32
    %18 = vector.broadcast %cst_19 : f32 to vector<288x128xf32>
    %19 = arith.maximumf %17, %18 : vector<288x128xf32>
    %20 = tpu.iota {dimensions = array<i32: 0>} : vector<288x1xi32>
    %c0_i32 = arith.constant 0 : i32
    %21 = arith.cmpi eq, %arg1, %c0_i32 : i32
    %c16_i32 = arith.constant 16 : i32
    %22 = vector.broadcast %c16_i32 : i32 to vector<288x1xi32>
    %23 = arith.cmpi slt, %20, %22 : vector<288x1xi32>
    %24 = vector.broadcast %21 : i1 to vector<288x1xi1>
    %25 = arith.andi %24, %23 : vector<288x1xi1>
    %c0_i32_20 = arith.constant 0 : i32
    %26 = arith.cmpi eq, %arg1, %c0_i32_20 : i32
    %c272_i32 = arith.constant 272 : i32
    %27 = vector.broadcast %c272_i32 : i32 to vector<288x1xi32>
    %28 = arith.cmpi sge, %20, %27 : vector<288x1xi32>
    %29 = vector.broadcast %26 : i1 to vector<288x1xi1>
    %30 = arith.andi %29, %28 : vector<288x1xi1>
    %31 = arith.ori %25, %30 : vector<288x1xi1>
    %cst_21 = arith.constant 0.000000e+00 : f32
    %32 = vector.shape_cast %31 : vector<288x1xi1> to vector<288x1xi1>
    %33 = vector.broadcast %32 : vector<288x1xi1> to vector<288x128xi1>
    %34 = vector.broadcast %cst_21 : f32 to vector<288x128xf32>
    %35 = arith.select %33, %34, %19 : vector<288x128xi1>, vector<288x128xf32>
    %36 = tpu.iota {dimensions = array<i32: 0>} : vector<288x1xi32>
    %c16_i32_22 = arith.constant 16 : i32
    %c0_i32_23 = arith.constant 0 : i32
    %37 = arith.cmpi eq, %c16_i32_22, %c0_i32_23 : i32
    %c1_i32 = arith.constant 1 : i32
    %38 = arith.select %37, %c1_i32, %c16_i32_22 : i32
    %39 = vector.broadcast %38 : i32 to vector<288x1xi32>
    %40 = arith.remsi %36, %39 : vector<288x1xi32>
    %c0_i32_24 = arith.constant 0 : i32
    %41 = vector.broadcast %c0_i32_24 : i32 to vector<288x1xi32>
    %42 = arith.cmpi ne, %40, %41 : vector<288x1xi32>
    %c0_i32_25 = arith.constant 0 : i32
    %43 = vector.broadcast %c0_i32_25 : i32 to vector<288x1xi32>
    %44 = arith.cmpi slt, %40, %43 : vector<288x1xi32>
    %c0_i32_26 = arith.constant 0 : i32
    %45 = arith.cmpi slt, %38, %c0_i32_26 : i32
    %46 = vector.broadcast %45 : i1 to vector<288x1xi1>
    %47 = vector.broadcast %46 : vector<288x1xi1> to vector<288x1xi1>
    %48 = arith.xori %44, %47 : vector<288x1xi1>
    %49 = arith.andi %48, %42 : vector<288x1xi1>
    %50 = vector.broadcast %38 : i32 to vector<288x1xi32>
    %51 = arith.addi %40, %50 : vector<288x1xi32>
    %52 = arith.select %49, %51, %40 : vector<288x1xi1>, vector<288x1xi32>
    %cst_27 = arith.constant 0.000000e+00 : f32
    %53 = vector.broadcast %cst_27 : f32 to vector<1x128xf32>
    %c0_i32_28 = arith.constant 0 : i32
    %54 = vector.broadcast %c0_i32_28 : i32 to vector<288x1xi32>
    %55 = arith.cmpi eq, %52, %54 : vector<288x1xi32>
    %56 = vector.extract_strided_slice %35 {offsets = [0, 0], sizes = [287, 128], strides = [1, 1]} : vector<288x128xf32> to vector<287x128xf32>
    %57 = tpu.concatenate %53, %56 in 0 : vector<1x128xf32>, vector<287x128xf32> -> vector<288x128xf32>
    %cst_29 = arith.constant 0.000000e+00 : f32
    %58 = vector.shape_cast %55 : vector<288x1xi1> to vector<288x1xi1>
    %59 = vector.broadcast %58 : vector<288x1xi1> to vector<288x128xi1>
    %60 = vector.broadcast %cst_29 : f32 to vector<288x128xf32>
    %61 = arith.select %59, %60, %57 : vector<288x128xi1>, vector<288x128xf32>
    %c15_i32 = arith.constant 15 : i32
    %62 = vector.broadcast %c15_i32 : i32 to vector<288x1xi32>
    %63 = arith.cmpi eq, %52, %62 : vector<288x1xi32>
    %64 = vector.extract_strided_slice %35 {offsets = [1, 0], sizes = [287, 128], strides = [1, 1]} : vector<288x128xf32> to vector<287x128xf32>
    %65 = tpu.concatenate %64, %53 in 0 : vector<287x128xf32>, vector<1x128xf32> -> vector<288x128xf32>
    %cst_30 = arith.constant 0.000000e+00 : f32
    %66 = vector.shape_cast %63 : vector<288x1xi1> to vector<288x1xi1>
    %67 = vector.broadcast %66 : vector<288x1xi1> to vector<288x128xi1>
    %68 = vector.broadcast %cst_30 : f32 to vector<288x128xf32>
    %69 = arith.select %67, %68, %65 : vector<288x128xi1>, vector<288x128xf32>
    %70 = arith.truncf %61 : vector<288x128xf32> to vector<288x128xbf16>
    %71 = arith.truncf %35 : vector<288x128xf32> to vector<288x128xbf16>
    %72 = arith.truncf %69 : vector<288x128xf32> to vector<288x128xbf16>
    %73 = tpu.concatenate %70, %71, %72 in 1 : vector<288x128xbf16>, vector<288x128xbf16>, vector<288x128xbf16> -> vector<288x384xbf16>
    %cst_31 = arith.constant 0.000000e+00 : f32
    %74 = vector.broadcast %cst_31 : f32 to vector<256x128xf32>
    %75 = vector.extract_strided_slice %73 {offsets = [0, 0], sizes = [256, 384], strides = [1, 1]} : vector<288x384xbf16> to vector<256x384xbf16>
    %c0_32 = arith.constant 0 : index
    %c0_33 = arith.constant 0 : index
    %c0_34 = arith.constant 0 : index
    %76 = vector.load %arg8[%c0_32, %c0_33, %c0_34] : memref<3x384x128xbf16, #tpu.memory_space<vmem>>, vector<1x384x128xbf16>
    %77 = vector.shape_cast %76 : vector<1x384x128xbf16> to vector<384x128xbf16>
    %cst_35 = arith.constant dense<0.000000e+00> : vector<256x128xf32>
    %78 = tpu.matmul %75, %77, %cst_35 {dimension_numbers = #tpu.dot_dimension_numbers<[1], [0], [0], [1], [0, 0, 1, 1], [], []>} : vector<256x384xbf16>, vector<384x128xbf16>, vector<256x128xf32> -> vector<256x128xf32>
    %79 = arith.addf %74, %78 : vector<256x128xf32>
    %80 = vector.extract_strided_slice %73 {offsets = [16, 0], sizes = [256, 384], strides = [1, 1]} : vector<288x384xbf16> to vector<256x384xbf16>
    %c1 = arith.constant 1 : index
    %c0_36 = arith.constant 0 : index
    %c0_37 = arith.constant 0 : index
    %81 = vector.load %arg8[%c1, %c0_36, %c0_37] : memref<3x384x128xbf16, #tpu.memory_space<vmem>>, vector<1x384x128xbf16>
    %82 = vector.shape_cast %81 : vector<1x384x128xbf16> to vector<384x128xbf16>
    %cst_38 = arith.constant dense<0.000000e+00> : vector<256x128xf32>
    %83 = tpu.matmul %80, %82, %cst_38 {dimension_numbers = #tpu.dot_dimension_numbers<[1], [0], [0], [1], [0, 0, 1, 1], [], []>} : vector<256x384xbf16>, vector<384x128xbf16>, vector<256x128xf32> -> vector<256x128xf32>
    %84 = arith.addf %79, %83 : vector<256x128xf32>
    %85 = vector.extract_strided_slice %73 {offsets = [32, 0], sizes = [256, 384], strides = [1, 1]} : vector<288x384xbf16> to vector<256x384xbf16>
    %c2 = arith.constant 2 : index
    %c0_39 = arith.constant 0 : index
    %c0_40 = arith.constant 0 : index
    %86 = vector.load %arg8[%c2, %c0_39, %c0_40] : memref<3x384x128xbf16, #tpu.memory_space<vmem>>, vector<1x384x128xbf16>
    %87 = vector.shape_cast %86 : vector<1x384x128xbf16> to vector<384x128xbf16>
    %cst_41 = arith.constant dense<0.000000e+00> : vector<256x128xf32>
    %88 = tpu.matmul %85, %87, %cst_41 {dimension_numbers = #tpu.dot_dimension_numbers<[1], [0], [0], [1], [0, 0, 1, 1], [], []>} : vector<256x384xbf16>, vector<384x128xbf16>, vector<256x128xf32> -> vector<256x128xf32>
    %89 = arith.addf %84, %88 : vector<256x128xf32>
    %c0_42 = arith.constant 0 : index
    %c0_43 = arith.constant 0 : index
    %90 = vector.load %arg9[%c0_42, %c0_43] : memref<1x128xf32, #tpu.memory_space<vmem>>, vector<1x128xf32>
    %91 = vector.broadcast %90 : vector<1x128xf32> to vector<256x128xf32>
    %92 = arith.mulf %89, %91 : vector<256x128xf32>
    %c0_44 = arith.constant 0 : index
    %c0_45 = arith.constant 0 : index
    %93 = vector.load %arg10[%c0_44, %c0_45] : memref<1x128xf32, #tpu.memory_space<vmem>>, vector<1x128xf32>
    %94 = vector.broadcast %93 : vector<1x128xf32> to vector<256x128xf32>
    %95 = arith.addf %92, %94 : vector<256x128xf32>
    %cst_46 = arith.constant 0.000000e+00 : f32
    %96 = vector.broadcast %cst_46 : f32 to vector<256x128xf32>
    %97 = arith.maximumf %95, %96 : vector<256x128xf32>
    %98 = arith.truncf %97 : vector<256x128xf32> to vector<256x128xbf16>
    %c0_47 = arith.constant 0 : index
    %c0_48 = arith.constant 0 : index
    %99 = vector.load %arg11[%c0_47, %c0_48] : memref<128x128xbf16, #tpu.memory_space<vmem>>, vector<128x128xbf16>
    %cst_49 = arith.constant dense<0.000000e+00> : vector<256x128xf32>
    %100 = tpu.matmul %98, %99, %cst_49 {dimension_numbers = #tpu.dot_dimension_numbers<[1], [0], [0], [1], [0, 0, 1, 1], [], []>} : vector<256x128xbf16>, vector<128x128xbf16>, vector<256x128xf32> -> vector<256x128xf32>
    %c0_50 = arith.constant 0 : index
    %c0_51 = arith.constant 0 : index
    %101 = vector.load %arg12[%c0_50, %c0_51] : memref<1x128xf32, #tpu.memory_space<vmem>>, vector<1x128xf32>
    %102 = vector.broadcast %101 : vector<1x128xf32> to vector<256x128xf32>
    %103 = arith.mulf %100, %102 : vector<256x128xf32>
    %c0_52 = arith.constant 0 : index
    %c0_53 = arith.constant 0 : index
    %104 = vector.load %arg13[%c0_52, %c0_53] : memref<1x128xf32, #tpu.memory_space<vmem>>, vector<1x128xf32>
    %105 = vector.broadcast %104 : vector<1x128xf32> to vector<256x128xf32>
    %106 = arith.addf %103, %105 : vector<256x128xf32>
    %c0_54 = arith.constant 0 : index
    %c0_55 = arith.constant 0 : index
    %c0_56 = arith.constant 0 : index
    %c0_57 = arith.constant 0 : index
    %107 = vector.load %arg3[%c0_54, %c0_55, %c0_56, %c0_57] : memref<1x16x16x128xbf16, #tpu.memory_space<vmem>>, vector<1x16x16x128xbf16>
    %108 = vector.shape_cast %107 : vector<1x16x16x128xbf16> to vector<16x16x128xbf16>
    %109 = vector.shape_cast %108 : vector<16x16x128xbf16> to vector<256x128xbf16>
    %110 = arith.extf %109 : vector<256x128xbf16> to vector<256x128xf32>
    %111 = arith.addf %106, %110 : vector<256x128xf32>
    %cst_58 = arith.constant 0.000000e+00 : f32
    %112 = vector.broadcast %cst_58 : f32 to vector<256x128xf32>
    %113 = arith.maximumf %111, %112 : vector<256x128xf32>
    %114 = vector.shape_cast %113 : vector<256x128xf32> to vector<16x16x128xf32>
    %115 = arith.truncf %114 : vector<16x16x128xf32> to vector<16x16x128xbf16>
    %c0_59 = arith.constant 0 : index
    %c0_60 = arith.constant 0 : index
    %c0_61 = arith.constant 0 : index
    %c0_62 = arith.constant 0 : index
    %116 = vector.load %arg14[%c0_59, %c0_60, %c0_61, %c0_62] : memref<1x16x16x128xbf16, #tpu.memory_space<vmem>>, vector<1x16x16x128xbf16>
    %117 = vector.shape_cast %116 : vector<1x16x16x128xbf16> to vector<16x16x128xbf16>
    %118 = vector.shape_cast %115 : vector<16x16x128xbf16> to vector<1x16x16x128xbf16>
    tpu.vector_store %arg14[%c0_59, %c0_60, %c0_61, %c0_62], %118 {strides = array<i32>} : memref<1x16x16x128xbf16, #tpu.memory_space<vmem>>, vector<1x16x16x128xbf16>,
    return
  }
  func.func @transform_0(%arg0: i32, %arg1: i32) -> (i32, i32, i32, i32) {
    %c16_i32 = arith.constant 16 : i32
    %0 = arith.muli %arg1, %c16_i32 : i32
    %c1_i32 = arith.constant 1 : i32
    %1 = arith.subi %0, %c1_i32 : i32
    %c0_i32 = arith.constant 0 : i32
    %2 = arith.maxsi %1, %c0_i32 : i32
    %c0_i32_0 = arith.constant 0 : i32
    %c0_i32_1 = arith.constant 0 : i32
    %c0_i32_2 = arith.constant 0 : i32
    return %arg0, %2, %c0_i32_0, %c0_i32_1 : i32, i32, i32, i32
  }
  func.func @transform_1(%arg0: i32, %arg1: i32) -> (i32, i32, i32, i32) {
    %c0_i32 = arith.constant 0 : i32
    %c0_i32_0 = arith.constant 0 : i32
    %c0_i32_1 = arith.constant 0 : i32
    return %arg0, %arg1, %c0_i32, %c0_i32_0 : i32, i32, i32, i32
  }
  func.func @transform_2(%arg0: i32, %arg1: i32) -> (i32, i32, i32, i32) {
    %c16_i32 = arith.constant 16 : i32
    %0 = arith.muli %arg1, %c16_i32 : i32
    %c16_i32_0 = arith.constant 16 : i32
    %1 = arith.addi %0, %c16_i32_0 : i32
    %c15_i32 = arith.constant 15 : i32
    %2 = arith.minsi %1, %c15_i32 : i32
    %c0_i32 = arith.constant 0 : i32
    %c0_i32_1 = arith.constant 0 : i32
    %c0_i32_2 = arith.constant 0 : i32
    return %arg0, %2, %c0_i32, %c0_i32_1 : i32, i32, i32, i32
  }
  func.func @transform_3(%arg0: i32, %arg1: i32) -> (i32, i32) {
    %c0_i32 = arith.constant 0 : i32
    %c0_i32_0 = arith.constant 0 : i32
    %c0_i32_1 = arith.constant 0 : i32
    return %c0_i32, %c0_i32_0 : i32, i32
  }
  func.func @transform_4(%arg0: i32, %arg1: i32) -> (i32, i32) {
    %c0_i32 = arith.constant 0 : i32
    %c0_i32_0 = arith.constant 0 : i32
    %c0_i32_1 = arith.constant 0 : i32
    return %c0_i32, %c0_i32_0 : i32, i32
  }
  func.func @transform_5(%arg0: i32, %arg1: i32) -> (i32, i32) {
    %c0_i32 = arith.constant 0 : i32
    %c0_i32_0 = arith.constant 0 : i32
    %c0_i32_1 = arith.constant 0 : i32
    return %c0_i32, %c0_i32_0 : i32, i32
  }
  func.func @transform_6(%arg0: i32, %arg1: i32) -> (i32, i32, i32) {
    %c0_i32 = arith.constant 0 : i32
    %c0_i32_0 = arith.constant 0 : i32
    %c0_i32_1 = arith.constant 0 : i32
    %c0_i32_2 = arith.constant 0 : i32
    return %c0_i32, %c0_i32_0, %c0_i32_1 : i32, i32, i32
  }
  func.func @transform_7(%arg0: i32, %arg1: i32) -> (i32, i32) {
    %c0_i32 = arith.constant 0 : i32
    %c0_i32_0 = arith.constant 0 : i32
    %c0_i32_1 = arith.constant 0 : i32
    return %c0_i32, %c0_i32_0 : i32, i32
  }
  func.func @transform_8(%arg0: i32, %arg1: i32) -> (i32, i32) {
    %c0_i32 = arith.constant 0 : i32
    %c0_i32_0 = arith.constant 0 : i32
    %c0_i32_1 = arith.constant 0 : i32
    return %c0_i32, %c0_i32_0 : i32, i32
  }
  func.func @transform_9(%arg0: i32, %arg1: i32) -> (i32, i32) {
    %c0_i32 = arith.constant 0 : i32
    %c0_i32_0 = arith.constant 0 : i32
    %c0_i32_1 = arith.constant 0 : i32
    return %c0_i32, %c0_i32_0 : i32, i32
  }
  func.func @transform_10(%arg0: i32, %arg1: i32) -> (i32, i32) {
    %c0_i32 = arith.constant 0 : i32
    %c0_i32_0 = arith.constant 0 : i32
    %c0_i32_1 = arith.constant 0 : i32
    return %c0_i32, %c0_i32_0 : i32, i32
  }
  func.func @transform_11(%arg0: i32, %arg1: i32) -> (i32, i32) {
    %c0_i32 = arith.constant 0 : i32
    %c0_i32_0 = arith.constant 0 : i32
    %c0_i32_1 = arith.constant 0 : i32
    return %c0_i32, %c0_i32_0 : i32, i32
  }
  func.func @transform_12(%arg0: i32, %arg1: i32) -> (i32, i32, i32, i32) {
    %c0_i32 = arith.constant 0 : i32
    %c0_i32_0 = arith.constant 0 : i32
    %c0_i32_1 = arith.constant 0 : i32
    return %arg0, %arg1, %c0_i32, %c0_i32_0 : i32, i32, i32, i32
  }
}

</mosaic_0001>

<llo_original>
// kernel: tpu_custom_call.1
$region0: #{tpu_custom_call.1}
  #allocation0 [shape = 'u32[]', space=smem, size = 0x4, offset = 0x4, fixed_abs, tag = 'smem constant byte address 0x4 - core index']
  #allocation1 [shape = 'u32[144,128]{1,0:T(1,128)}', space=vmem, size = 0x12000, scoped, tag = 'internal scratch']
  %s0 = inlined_call_operand.hbm [shape: bf16[2,16,16,128], index: 0, kind: input, shape index: {}]
  %s1 = inlined_call_operand.hbm [shape: bf16[2,16,16,128], index: 1, kind: input, shape index: {}]
  %s2 = inlined_call_operand.hbm [shape: bf16[2,16,16,128], index: 2, kind: input, shape index: {}]
  %s3 = inlined_call_operand.hbm [shape: bf16[128,128], index: 3, kind: input, shape index: {}]
  %s4 = inlined_call_operand.hbm [shape: f32[1,128], index: 4, kind: input, shape index: {}]
  %s5 = inlined_call_operand.hbm [shape: f32[1,128], index: 5, kind: input, shape index: {}]
  %s6 = inlined_call_operand.hbm [shape: bf16[3,384,128], index: 6, kind: input, shape index: {}]
  %s7 = inlined_call_operand.hbm [shape: f32[1,128], index: 7, kind: input, shape index: {}]
  %s8 = inlined_call_operand.hbm [shape: f32[1,128], index: 8, kind: input, shape index: {}]
  %s9 = inlined_call_operand.hbm [shape: bf16[128,128], index: 9, kind: input, shape index: {}]
  %s10 = inlined_call_operand.hbm [shape: f32[1,128], index: 10, kind: input, shape index: {}]
  %s11 = inlined_call_operand.hbm [shape: f32[1,128], index: 11, kind: input, shape index: {}]
  %s12 = inlined_call_operand.hbm [shape: bf16[2,16,16,128], index: 12, kind: output, shape index: {}]
  %s13 = sld [smem:[#allocation0]]
  $region129: #{tpu_custom_call.1} parent=0
    _
  %s15 = ssub.s32 1, %s13
  %s16 = scalar_select 0, %s15, %s13
  $region1: #{tpu_custom_call.1} parent=0
    #allocation2 [shape = 'u8[8192]{0}', space=vmem, size = 0x2000, scoped, tag = 'input window, operand 0']
    #allocation3 [shape = 's32[2]{0}', space=sflag, size = 0x8, scoped, tag = 'scoped memory for tpu_custom_call.1']
    #allocation4 [shape = 's32[2]{0}', space=sflag, size = 0x8, scoped, tag = 'scoped memory for tpu_custom_call.1']
    #allocation5 [shape = 'u8[131072]{0}', space=vmem, size = 0x20000, scoped, tag = 'input window, operand 1']
    #allocation6 [shape = 's32[2]{0}', space=sflag, size = 0x8, scoped, tag = 'scoped memory for tpu_custom_call.1']
    #allocation7 [shape = 'u8[8192]{0}', space=vmem, size = 0x2000, scoped, tag = 'input window, operand 2']
    #allocation8 [shape = 'u8[32768]{0}', space=vmem, size = 0x8000, scoped, tag = 'input window, operand 3, single buffered']
    #allocation9 [shape = 's32[1]{0}', space=sflag, size = 0x4, scoped, tag = 'scoped memory for tpu_custom_call.1']
    #allocation10 [shape = 'u8[512]{0}', space=vmem, size = 0x400, scoped, tag = 'input window, operand 4, single buffered']
    #allocation11 [shape = 'u8[512]{0}', space=vmem, size = 0x400, scoped, tag = 'input window, operand 5, single buffered']
    #allocation12 [shape = 's32[1]{0}', space=sflag, size = 0x4, scoped, tag = 'scoped memory for tpu_custom_call.1']
    #allocation13 [shape = 'u8[294912]{0}', space=vmem, size = 0x48000, scoped, tag = 'input window, operand 6, single buffered']
    #allocation14 [shape = 'u8[512]{0}', space=vmem, size = 0x400, scoped, tag = 'input window, operand 7, single buffered']
    #allocation15 [shape = 's32[1]{0}', space=sflag, size = 0x4, scoped, tag = 'scoped memory for tpu_custom_call.1']
    #allocation16 [shape = 'u8[512]{0}', space=vmem, size = 0x400, scoped, tag = 'input window, operand 8, single buffered']
    #allocation17 [shape = 'u8[32768]{0}', space=vmem, size = 0x8000, scoped, tag = 'input window, operand 9, single buffered']
    #allocation18 [shape = 's32[1]{0}', space=sflag, size = 0x4, scoped, tag = 'scoped memory for tpu_custom_call.1']
    #allocation19 [shape = 'u8[512]{0}', space=vmem, size = 0x400, scoped, tag = 'input window, operand 10, single buffered']
    #allocation20 [shape = 'u8[512]{0}', space=vmem, size = 0x400, scoped, tag = 'input window, operand 11, single buffered']
    #allocation21 [shape = 's32[1]{0}', space=sflag, size = 0x4, scoped, tag = 'scoped memory for tpu_custom_call.1']
    #allocation22 [shape = 'u8[131072]{0}', space=vmem, size = 0x20000, scoped, tag = 'output window, operand 0']
    %17 = vsyncpa [#allocation3], 0
    %s18 = scalar_lea.sflag [#allocation3], 1
    %19 = vsyncpa %s18, 0
    %20 = vsyncpa [#allocation6], 0
    %s21 = scalar_lea.sflag [#allocation6], 1
    %22 = vsyncpa %s21, 0
    %23 = vsyncpa [#allocation9], 0
    %24 = vsyncpa [#allocation12], 0
    %25 = vsyncpa [#allocation15], 0
    %26 = vsyncpa [#allocation18], 0
    %27 = vsyncpa [#allocation21], 0
    %28 = vsyncpa [#allocation4], 0
    %s29 = scalar_lea.sflag [#allocation4], 1
    %30 = vsyncpa %s29, 0
    loop: start=0, step=1, limit=4
    $region2: #{tpu_custom_call.1} parent=1 // loop_pre_header
      _
    $region3: #{tpu_custom_call.1} parent=1 // loop_header
      %s32 = sphi 0, %s36
      %p33 = scmp.ge.s32.totalorder %s32, 4
      %s39 = sphi 0, %s51
      %s40 = sphi 0, %s47
      %s41 = sphi 0, %s39
      %s42 = sphi 0, %s40
      %s43 = sphi 0, %s41
      %s44 = sphi 0, %s42
      %s64 = sphi 0, %s66
      %s67 = sphi 0, %s64
      %s68 = sphi 0, %s67
      %s84 = sphi 0, %s68
      %s92 = sphi 0, %s94
      %s95 = sphi 0, %s92
      %s96 = sphi 0, %s95
      %s112 = sphi 0, %s96
      %s128 = sphi 0, %s130
      %s131 = sphi 0, %s128
      %s132 = sphi 0, %s131
      %s148 = sphi 0, %s132
      %s152 = sphi 0, %s152
      %s154 = sphi 0, %s152
      %s155 = sphi 0, %s154
      %s169 = sphi 0, %s155
      %s173 = sphi 0, %s173
      %s175 = sphi 0, %s173
      %s176 = sphi 0, %s175
      %s190 = sphi 0, %s176
      %s194 = sphi 0, %s194
      %s196 = sphi 0, %s194
      %s197 = sphi 0, %s196
      %s211 = sphi 0, %s197
      %s215 = sphi 0, %s215
      %s217 = sphi 0, %s215
      %s218 = sphi 0, %s217
      %s232 = sphi 0, %s218
      %s236 = sphi 0, %s236
      %s238 = sphi 0, %s236
      %s239 = sphi 0, %s238
      %s253 = sphi 0, %s239
      %s257 = sphi 0, %s257
      %s259 = sphi 0, %s257
      %s260 = sphi 0, %s259
      %s274 = sphi 0, %s260
      %s278 = sphi 0, %s278
      %s280 = sphi 0, %s278
      %s281 = sphi 0, %s280
      %s295 = sphi 0, %s281
      %s299 = sphi 0, %s299
      %s301 = sphi 0, %s299
      %s302 = sphi 0, %s301
      %s316 = sphi 0, %s302
      %s320 = sphi 0, %s320
      %s322 = sphi 0, %s320
      %s323 = sphi 0, %s322
      %s337 = sphi 0, %s323
      %s345 = sphi 0, %s347
      %s348 = sphi 0, %s345
      %s349 = sphi 0, %s348
      %s365 = sphi 0, %s349
    $region4: #{tpu_custom_call.1} parent=1 // loop_header_branch
      %35 = sbr.rel (%p33) target = $region8
    $region5: #{tpu_custom_call.1} parent=1 // loop_body
      %s37 = ssub.s32 %s32, 1
      %s38 = ssub.s32 %s32, 2
      %s45 = sadd.s32 1, %s40
      %p46 = scmp.ge.s32.totalorder %s45, 1
      %s47 = scalar_select %p46, 0, %s45
      %s48 = sadd.s32 1, %s39
      %s49 = scalar_select %p46, %s48, %s39
      %p50 = scmp.ge.s32.totalorder %s49, 2
      %s51 = scalar_select %p50, 0, %s49
      %s52 = smul.u32 %s40, 16
      %s53 = ssub.s32 %s52, 1
      %p54 = scmp.gt.s32.totalorder %s53, 0
      %s55 = scalar_select %p54, %s53, 0
      %s56 = smul.u32 %s47, 16
      %s57 = ssub.s32 %s56, 1
      %p58 = scmp.gt.s32.totalorder %s57, 0
      %s59 = scalar_select %p58, %s57, 0
      %s60 = ssub.s32 %s39, %s51
      %s61 = ssub.s32 %s55, %s59
      %s62 = sor.u32 %s60, %s61
      %p63 = scmp.eq.s32.totalorder %s62, 0
      %s65 = sadd.s32 %s64, 1
      %s66 = scalar_select %p63, %s64, %s65
      %p69 = pneg %p63
      %p70 = scmp.eq.s32.totalorder %s32, 1
      %p71 = por %p69, %p70
      %p72 = scmp.ne.s32.totalorder %s64, %s67
      %p73 = scmp.eq.s32.totalorder %s32, 0
      %p74 = por %p72, %p73
      %p75 = scmp.ne.s32.totalorder %s64, %s67
      %p76 = scmp.eq.s32.totalorder %s37, 1
      %p77 = por %p75, %p76
      %p78 = scmp.ne.s32.totalorder %s67, %s68
      %p79 = scmp.eq.s32.totalorder %s37, 0
      %p80 = por %p78, %p79
      %p81 = scmp.ne.s32.totalorder %s67, %s68
      %p82 = scmp.eq.s32.totalorder %s38, 1
      %p83 = por %p81, %p82
      %p85 = scmp.ne.s32.totalorder %s68, %s84
      %p86 = scmp.eq.s32.totalorder %s38, 0
      %p87 = por %p85, %p86
      %s88 = ssub.s32 %s39, %s51
      %s89 = ssub.s32 %s40, %s47
      %s90 = sor.u32 %s88, %s89
      %p91 = scmp.eq.s32.totalorder %s90, 0
      %s93 = sadd.s32 %s92, 1
      %s94 = scalar_select %p91, %s92, %s93
      %p97 = pneg %p91
      %p98 = scmp.eq.s32.totalorder %s32, 1
      %p99 = por %p97, %p98
      %p100 = scmp.ne.s32.totalorder %s92, %s95
      %p101 = scmp.eq.s32.totalorder %s32, 0
      %p102 = por %p100, %p101
      %p103 = scmp.ne.s32.totalorder %s92, %s95
      %p104 = scmp.eq.s32.totalorder %s37, 1
      %p105 = por %p103, %p104
      %p106 = scmp.ne.s32.totalorder %s95, %s96
      %p107 = scmp.eq.s32.totalorder %s37, 0
      %p108 = por %p106, %p107
      %p109 = scmp.ne.s32.totalorder %s95, %s96
      %p110 = scmp.eq.s32.totalorder %s38, 1
      %p111 = por %p109, %p110
      %p113 = scmp.ne.s32.totalorder %s96, %s112
      %p114 = scmp.eq.s32.totalorder %s38, 0
      %p115 = por %p113, %p114
      %s116 = smul.u32 %s40, 16
      %s117 = sadd.s32 %s116, 16
      %p118 = scmp.lt.s32.totalorder %s117, 15
      %s119 = scalar_select %p118, %s117, 15
      %s120 = smul.u32 %s47, 16
      %s121 = sadd.s32 %s120, 16
      %p122 = scmp.lt.s32.totalorder %s121, 15
      %s123 = scalar_select %p122, %s121, 15
      %s124 = ssub.s32 %s39, %s51
      %s125 = ssub.s32 %s119, %s123
      %s126 = sor.u32 %s124, %s125
      %p127 = scmp.eq.s32.totalorder %s126, 0
      %s129 = sadd.s32 %s128, 1
      %s130 = scalar_select %p127, %s128, %s129
      %p133 = pneg %p127
      %p134 = scmp.eq.s32.totalorder %s32, 1
      %p135 = por %p133, %p134
      %p136 = scmp.ne.s32.totalorder %s128, %s131
      %p137 = scmp.eq.s32.totalorder %s32, 0
      %p138 = por %p136, %p137
      %p139 = scmp.ne.s32.totalorder %s128, %s131
      %p140 = scmp.eq.s32.totalorder %s37, 1
      %p141 = por %p139, %p140
      %p142 = scmp.ne.s32.totalorder %s131, %s132
      %p143 = scmp.eq.s32.totalorder %s37, 0
      %p144 = por %p142, %p143
      %p145 = scmp.ne.s32.totalorder %s131, %s132
      %p146 = scmp.eq.s32.totalorder %s38, 1
      %p147 = por %p145, %p146
      %p149 = scmp.ne.s32.totalorder %s132, %s148
      %p150 = scmp.eq.s32.totalorder %s38, 0
      %p151 = por %p149, %p150
      %s153 = sadd.s32 %s152, 1
      %p156 = scmp.eq.s32.totalorder %s32, 1
      %p157 = scmp.ne.s32.totalorder %s152, %s154
      %p158 = scmp.eq.s32.totalorder %s32, 0
      %p159 = por %p157, %p158
      %p160 = scmp.ne.s32.totalorder %s152, %s154
      %p161 = scmp.eq.s32.totalorder %s37, 1
      %p162 = por %p160, %p161
      %p163 = scmp.ne.s32.totalorder %s154, %s155
      %p164 = scmp.eq.s32.totalorder %s37, 0
      %p165 = por %p163, %p164
      %p166 = scmp.ne.s32.totalorder %s154, %s155
      %p167 = scmp.eq.s32.totalorder %s38, 1
      %p168 = por %p166, %p167
      %p170 = scmp.ne.s32.totalorder %s155, %s169
      %p171 = scmp.eq.s32.totalorder %s38, 0
      %p172 = por %p170, %p171
      %s174 = sadd.s32 %s173, 1
      %p177 = scmp.eq.s32.totalorder %s32, 1
      %p178 = scmp.ne.s32.totalorder %s173, %s175
      %p179 = scmp.eq.s32.totalorder %s32, 0
      %p180 = por %p178, %p179
      %p181 = scmp.ne.s32.totalorder %s173, %s175
      %p182 = scmp.eq.s32.totalorder %s37, 1
      %p183 = por %p181, %p182
      %p184 = scmp.ne.s32.totalorder %s175, %s176
      %p185 = scmp.eq.s32.totalorder %s37, 0
      %p186 = por %p184, %p185
      %p187 = scmp.ne.s32.totalorder %s175, %s176
      %p188 = scmp.eq.s32.totalorder %s38, 1
      %p189 = por %p187, %p188
      %p191 = scmp.ne.s32.totalorder %s176, %s190
      %p192 = scmp.eq.s32.totalorder %s38, 0
      %p193 = por %p191, %p192
      %s195 = sadd.s32 %s194, 1
      %p198 = scmp.eq.s32.totalorder %s32, 1
      %p199 = scmp.ne.s32.totalorder %s194, %s196
      %p200 = scmp.eq.s32.totalorder %s32, 0
      %p201 = por %p199, %p200
      %p202 = scmp.ne.s32.totalorder %s194, %s196
      %p203 = scmp.eq.s32.totalorder %s37, 1
      %p204 = por %p202, %p203
      %p205 = scmp.ne.s32.totalorder %s196, %s197
      %p206 = scmp.eq.s32.totalorder %s37, 0
      %p207 = por %p205, %p206
      %p208 = scmp.ne.s32.totalorder %s196, %s197
      %p209 = scmp.eq.s32.totalorder %s38, 1
      %p210 = por %p208, %p209
      %p212 = scmp.ne.s32.totalorder %s197, %s211
      %p213 = scmp.eq.s32.totalorder %s38, 0
      %p214 = por %p212, %p213
      %s216 = sadd.s32 %s215, 1
      %p219 = scmp.eq.s32.totalorder %s32, 1
      %p220 = scmp.ne.s32.totalorder %s215, %s217
      %p221 = scmp.eq.s32.totalorder %s32, 0
      %p222 = por %p220, %p221
      %p223 = scmp.ne.s32.totalorder %s215, %s217
      %p224 = scmp.eq.s32.totalorder %s37, 1
      %p225 = por %p223, %p224
      %p226 = scmp.ne.s32.totalorder %s217, %s218
      %p227 = scmp.eq.s32.totalorder %s37, 0
      %p228 = por %p226, %p227
      %p229 = scmp.ne.s32.totalorder %s217, %s218
      %p230 = scmp.eq.s32.totalorder %s38, 1
      %p231 = por %p229, %p230
      %p233 = scmp.ne.s32.totalorder %s218, %s232
      %p234 = scmp.eq.s32.totalorder %s38, 0
      %p235 = por %p233, %p234
      %s237 = sadd.s32 %s236, 1
      %p240 = scmp.eq.s32.totalorder %s32, 1
      %p241 = scmp.ne.s32.totalorder %s236, %s238
      %p242 = scmp.eq.s32.totalorder %s32, 0
      %p243 = por %p241, %p242
      %p244 = scmp.ne.s32.totalorder %s236, %s238
      %p245 = scmp.eq.s32.totalorder %s37, 1
      %p246 = por %p244, %p245
      %p247 = scmp.ne.s32.totalorder %s238, %s239
      %p248 = scmp.eq.s32.totalorder %s37, 0
      %p249 = por %p247, %p248
      %p250 = scmp.ne.s32.totalorder %s238, %s239
      %p251 = scmp.eq.s32.totalorder %s38, 1
      %p252 = por %p250, %p251
      %p254 = scmp.ne.s32.totalorder %s239, %s253
      %p255 = scmp.eq.s32.totalorder %s38, 0
      %p256 = por %p254, %p255
      %s258 = sadd.s32 %s257, 1
      %p261 = scmp.eq.s32.totalorder %s32, 1
      %p262 = scmp.ne.s32.totalorder %s257, %s259
      %p263 = scmp.eq.s32.totalorder %s32, 0
      %p264 = por %p262, %p263
      %p265 = scmp.ne.s32.totalorder %s257, %s259
      %p266 = scmp.eq.s32.totalorder %s37, 1
      %p267 = por %p265, %p266
      %p268 = scmp.ne.s32.totalorder %s259, %s260
      %p269 = scmp.eq.s32.totalorder %s37, 0
      %p270 = por %p268, %p269
      %p271 = scmp.ne.s32.totalorder %s259, %s260
      %p272 = scmp.eq.s32.totalorder %s38, 1
      %p273 = por %p271, %p272
      %p275 = scmp.ne.s32.totalorder %s260, %s274
      %p276 = scmp.eq.s32.totalorder %s38, 0
      %p277 = por %p275, %p276
      %s279 = sadd.s32 %s278, 1
      %p282 = scmp.eq.s32.totalorder %s32, 1
      %p283 = scmp.ne.s32.totalorder %s278, %s280
      %p284 = scmp.eq.s32.totalorder %s32, 0
      %p285 = por %p283, %p284
      %p286 = scmp.ne.s32.totalorder %s278, %s280
      %p287 = scmp.eq.s32.totalorder %s37, 1
      %p288 = por %p286, %p287
      %p289 = scmp.ne.s32.totalorder %s280, %s281
      %p290 = scmp.eq.s32.totalorder %s37, 0
      %p291 = por %p289, %p290
      %p292 = scmp.ne.s32.totalorder %s280, %s281
      %p293 = scmp.eq.s32.totalorder %s38, 1
      %p294 = por %p292, %p293
      %p296 = scmp.ne.s32.totalorder %s281, %s295
      %p297 = scmp.eq.s32.totalorder %s38, 0
      %p298 = por %p296, %p297
      %s300 = sadd.s32 %s299, 1
      %p303 = scmp.eq.s32.totalorder %s32, 1
      %p304 = scmp.ne.s32.totalorder %s299, %s301
      %p305 = scmp.eq.s32.totalorder %s32, 0
      %p306 = por %p304, %p305
      %p307 = scmp.ne.s32.totalorder %s299, %s301
      %p308 = scmp.eq.s32.totalorder %s37, 1
      %p309 = por %p307, %p308
      %p310 = scmp.ne.s32.totalorder %s301, %s302
      %p311 = scmp.eq.s32.totalorder %s37, 0
      %p312 = por %p310, %p311
      %p313 = scmp.ne.s32.totalorder %s301, %s302
      %p314 = scmp.eq.s32.totalorder %s38, 1
      %p315 = por %p313, %p314
      %p317 = scmp.ne.s32.totalorder %s302, %s316
      %p318 = scmp.eq.s32.totalorder %s38, 0
      %p319 = por %p317, %p318
      %s321 = sadd.s32 %s320, 1
      %p324 = scmp.eq.s32.totalorder %s32, 1
      %p325 = scmp.ne.s32.totalorder %s320, %s322
      %p326 = scmp.eq.s32.totalorder %s32, 0
      %p327 = por %p325, %p326
      %p328 = scmp.ne.s32.totalorder %s320, %s322
      %p329 = scmp.eq.s32.totalorder %s37, 1
      %p330 = por %p328, %p329
      %p331 = scmp.ne.s32.totalorder %s322, %s323
      %p332 = scmp.eq.s32.totalorder %s37, 0
      %p333 = por %p331, %p332
      %p334 = scmp.ne.s32.totalorder %s322, %s323
      %p335 = scmp.eq.s32.totalorder %s38, 1
      %p336 = por %p334, %p335
      %p338 = scmp.ne.s32.totalorder %s323, %s337
      %p339 = scmp.eq.s32.totalorder %s38, 0
      %p340 = por %p338, %p339
      %s341 = ssub.s32 %s39, %s51
      %s342 = ssub.s32 %s40, %s47
      %s343 = sor.u32 %s341, %s342
      %p344 = scmp.eq.s32.totalorder %s343, 0
      %s346 = sadd.s32 %s345, 1
      %s347 = scalar_select %p344, %s345, %s346
      %p350 = pneg %p344
      %p351 = scmp.eq.s32.totalorder %s32, 1
      %p352 = por %p350, %p351
      %p353 = scmp.ne.s32.totalorder %s345, %s348
      %p354 = scmp.eq.s32.totalorder %s32, 0
      %p355 = por %p353, %p354
      %p356 = scmp.ne.s32.totalorder %s345, %s348
      %p357 = scmp.eq.s32.totalorder %s37, 1
      %p358 = por %p356, %p357
      %p359 = scmp.ne.s32.totalorder %s348, %s349
      %p360 = scmp.eq.s32.totalorder %s37, 0
      %p361 = por %p359, %p360
      %p362 = scmp.ne.s32.totalorder %s348, %s349
      %p363 = scmp.eq.s32.totalorder %s38, 1
      %p364 = por %p362, %p363
      %p366 = scmp.ne.s32.totalorder %s349, %s365
      %p367 = scmp.eq.s32.totalorder %s38, 0
      %p368 = por %p366, %p367
      %p369 = scmp.le.s32.totalorder 1, %s32
      %p370 = scmp.lt.s32.totalorder %s32, 3
      %p371 = pnand %p369, %p370
      %p372 = pneg %p371
      // Predicated region
      $region9: #{tpu_custom_call.1} parent=5 // pred_check
        _
      $region10: #{tpu_custom_call.1} parent=5 // pred_check_branch
        %374 = sbr.rel (%p371) target = $region12
      $region11: #{tpu_custom_call.1} parent=5 // pred_region
        %s375 = ssub.s32 %s32, 1
        // Predicated region
        $region13: #{tpu_custom_call.1} parent=11 // pred_check
          %p376 = pneg %p165
        $region14: #{tpu_custom_call.1} parent=11 // pred_check_branch
          %378 = sbr.rel (%p376) target = $region16
        $region15: #{tpu_custom_call.1} parent=11 // pred_region
          %s380 = ssub.s32 1024, 1024
          %381 = vsyncadd [#allocation9], %s380
          %s382 = sshll.u32 [#allocation8], 4
          %s383 = int_to_ptr.vmem [resolvable:$true] %s382
          %388 = dma.hbm_to_vmem [thread:$0]  %s3, 1024, %s383, [#allocation9], 64, 64, 4
        $region16: #{tpu_custom_call.1} parent=11 // pred_fallthru
          _
        // Predicated region
        $region17: #{tpu_custom_call.1} parent=11 // pred_check
          %p389 = pneg %p186
        $region18: #{tpu_custom_call.1} parent=11 // pred_check_branch
          %391 = sbr.rel (%p389) target = $region20
        $region19: #{tpu_custom_call.1} parent=11 // pred_region
          %s393 = ssub.s32 16, 16
          %394 = vsyncadd [#allocation9], %s393
          %s396 = sshll.u32 [#allocation10], 4
          %s397 = int_to_ptr.vmem [resolvable:$true] %s396
          %399 = dma.hbm_to_vmem [thread:$0]  %s4, 16, %s397, [#allocation9]
        $region20: #{tpu_custom_call.1} parent=11 // pred_fallthru
          _
        // Predicated region
        $region21: #{tpu_custom_call.1} parent=11 // pred_check
          %p400 = pneg %p207
        $region22: #{tpu_custom_call.1} parent=11 // pred_check_branch
          %402 = sbr.rel (%p400) target = $region24
        $region23: #{tpu_custom_call.1} parent=11 // pred_region
          %s404 = ssub.s32 16, 16
          %405 = vsyncadd [#allocation12], %s404
          %s407 = sshll.u32 [#allocation11], 4
          %s408 = int_to_ptr.vmem [resolvable:$true] %s407
          %410 = dma.hbm_to_vmem [thread:$0]  %s5, 16, %s408, [#allocation12]
        $region24: #{tpu_custom_call.1} parent=11 // pred_fallthru
          _
        // Predicated region
        $region25: #{tpu_custom_call.1} parent=11 // pred_check
          %p411 = pneg %p228
        $region26: #{tpu_custom_call.1} parent=11 // pred_check_branch
          %413 = sbr.rel (%p411) target = $region28
        $region27: #{tpu_custom_call.1} parent=11 // pred_region
          %s415 = ssub.s32 9216, 9216
          %416 = vsyncadd [#allocation12], %s415
          %s417 = sshll.u32 [#allocation13], 4
          %s418 = int_to_ptr.vmem [resolvable:$true] %s417
          %423 = dma.hbm_to_vmem [thread:$0]  %s6, 9216, %s418, [#allocation12], 64, 64, 4
        $region28: #{tpu_custom_call.1} parent=11 // pred_fallthru
          _
        // Predicated region
        $region29: #{tpu_custom_call.1} parent=11 // pred_check
          %p424 = pneg %p249
        $region30: #{tpu_custom_call.1} parent=11 // pred_check_branch
          %426 = sbr.rel (%p424) target = $region32
        $region31: #{tpu_custom_call.1} parent=11 // pred_region
          %s428 = ssub.s32 16, 16
          %429 = vsyncadd [#allocation15], %s428
          %s431 = sshll.u32 [#allocation14], 4
          %s432 = int_to_ptr.vmem [resolvable:$true] %s431
          %434 = dma.hbm_to_vmem [thread:$0]  %s7, 16, %s432, [#allocation15]
        $region32: #{tpu_custom_call.1} parent=11 // pred_fallthru
          _
        // Predicated region
        $region33: #{tpu_custom_call.1} parent=11 // pred_check
          %p435 = pneg %p270
        $region34: #{tpu_custom_call.1} parent=11 // pred_check_branch
          %437 = sbr.rel (%p435) target = $region36
        $region35: #{tpu_custom_call.1} parent=11 // pred_region
          %s439 = ssub.s32 16, 16
          %440 = vsyncadd [#allocation15], %s439
          %s442 = sshll.u32 [#allocation16], 4
          %s443 = int_to_ptr.vmem [resolvable:$true] %s442
          %445 = dma.hbm_to_vmem [thread:$0]  %s8, 16, %s443, [#allocation15]
        $region36: #{tpu_custom_call.1} parent=11 // pred_fallthru
          _
        // Predicated region
        $region37: #{tpu_custom_call.1} parent=11 // pred_check
          %p446 = pneg %p291
        $region38: #{tpu_custom_call.1} parent=11 // pred_check_branch
          %448 = sbr.rel (%p446) target = $region40
        $region39: #{tpu_custom_call.1} parent=11 // pred_region
          %s450 = ssub.s32 1024, 1024
          %451 = vsyncadd [#allocation18], %s450
          %s452 = sshll.u32 [#allocation17], 4
          %s453 = int_to_ptr.vmem [resolvable:$true] %s452
          %458 = dma.hbm_to_vmem [thread:$0]  %s9, 1024, %s453, [#allocation18], 64, 64, 4
        $region40: #{tpu_custom_call.1} parent=11 // pred_fallthru
          _
        // Predicated region
        $region41: #{tpu_custom_call.1} parent=11 // pred_check
          %p459 = pneg %p312
        $region42: #{tpu_custom_call.1} parent=11 // pred_check_branch
          %461 = sbr.rel (%p459) target = $region44
        $region43: #{tpu_custom_call.1} parent=11 // pred_region
          %s463 = ssub.s32 16, 16
          %464 = vsyncadd [#allocation18], %s463
          %s466 = sshll.u32 [#allocation19], 4
          %s467 = int_to_ptr.vmem [resolvable:$true] %s466
          %469 = dma.hbm_to_vmem [thread:$0]  %s10, 16, %s467, [#allocation18]
        $region44: #{tpu_custom_call.1} parent=11 // pred_fallthru
          _
        // Predicated region
        $region45: #{tpu_custom_call.1} parent=11 // pred_check
          %p470 = pneg %p333
        $region46: #{tpu_custom_call.1} parent=11 // pred_check_branch
          %472 = sbr.rel (%p470) target = $region48
        $region47: #{tpu_custom_call.1} parent=11 // pred_region
          %s474 = ssub.s32 16, 16
          %475 = vsyncadd [#allocation21], %s474
          %s477 = sshll.u32 [#allocation20], 4
          %s478 = int_to_ptr.vmem [resolvable:$true] %s477
          %480 = dma.hbm_to_vmem [thread:$0]  %s11, 16, %s478, [#allocation21]
        $region48: #{tpu_custom_call.1} parent=11 // pred_fallthru
          _
      $region12: #{tpu_custom_call.1} parent=5 // pred_fallthru
        _
      %p481 = scmp.lt.s32.totalorder %s32, 2
      // Predicated region
      $region49: #{tpu_custom_call.1} parent=5 // pred_check
        %p482 = pneg %p481
      $region50: #{tpu_custom_call.1} parent=5 // pred_check_branch
        %484 = sbr.rel (%p482) target = $region52
      $region51: #{tpu_custom_call.1} parent=5 // pred_region
        // Predicated region
        $region53: #{tpu_custom_call.1} parent=51 // pred_check
          %p485 = pneg %p74
        $region54: #{tpu_custom_call.1} parent=51 // pred_check_branch
          %487 = sbr.rel (%p485) target = $region56
        $region55: #{tpu_custom_call.1} parent=51 // pred_region
          %s488 = sand.u32 %s64, 1
          %s489 = scalar_lea.sflag [#allocation3], %s488
          %s490 = sand.u32 %s64, 1
          %s491 = smul.addr %s490, 8
          %s492 = scalar_lea.vmem [#allocation2], %s491
          %s493 = smul.u32 %s40, 16
          %s494 = ssub.s32 %s493, 1
          %p495 = scmp.gt.s32.totalorder %s494, 0
          %s496 = scalar_select %p495, %s494, 0
          %s498 = ssub.s32 128, 128
          %499 = vsyncadd %s489, %s498
          %s500 = smul.addr %s496, 2
          %s501 = smul.addr %s39, 32
          %s502 = sadd.s32 %s500, %s501
          %s503 = smul.addr %s502, 64
          %s504 = scalar_lea.hbm %s0, %s503
          %s505 = sshll.u32 %s492, 4
          %s506 = int_to_ptr.vmem [resolvable:$true] %s505
          %511 = dma.hbm_to_vmem [thread:$0]  %s504, 128, %s506, %s489, 64, 64, 4
        $region56: #{tpu_custom_call.1} parent=51 // pred_fallthru
          _
        // Predicated region
        $region57: #{tpu_custom_call.1} parent=51 // pred_check
          %p512 = pneg %p102
        $region58: #{tpu_custom_call.1} parent=51 // pred_check_branch
          %514 = sbr.rel (%p512) target = $region60
        $region59: #{tpu_custom_call.1} parent=51 // pred_region
          %s515 = sand.u32 %s32, 1
          %s516 = scalar_lea.sflag [#allocation6], %s515
          %s517 = sand.u32 %s92, 1
          %s518 = smul.addr %s517, 128
          %s519 = scalar_lea.vmem [#allocation5], %s518
          %s520 = smul.u32 16, %s40
          %s522 = ssub.s32 2048, 2048
          %523 = vsyncadd %s516, %s522
          %s524 = smul.addr %s520, 2
          %s525 = smul.addr %s39, 32
          %s526 = sadd.s32 %s524, %s525
          %s527 = smul.addr %s526, 64
          %s528 = scalar_lea.hbm %s1, %s527
          %s529 = sshll.u32 %s519, 4
          %s530 = int_to_ptr.vmem [resolvable:$true] %s529
          %535 = dma.hbm_to_vmem [thread:$0]  %s528, 2048, %s530, %s516, 64, 64, 4
        $region60: #{tpu_custom_call.1} parent=51 // pred_fallthru
          _
        // Predicated region
        $region61: #{tpu_custom_call.1} parent=51 // pred_check
          %p536 = pneg %p138
        $region62: #{tpu_custom_call.1} parent=51 // pred_check_branch
          %538 = sbr.rel (%p536) target = $region64
        $region63: #{tpu_custom_call.1} parent=51 // pred_region
          %s539 = sand.u32 %s32, 1
          %s540 = scalar_lea.sflag [#allocation6], %s539
          %s541 = sand.u32 %s128, 1
          %s542 = smul.addr %s541, 8
          %s543 = scalar_lea.vmem [#allocation7], %s542
          %s544 = smul.u32 %s40, 16
          %s545 = sadd.s32 %s544, 16
          %p546 = scmp.lt.s32.totalorder %s545, 15
          %s547 = scalar_select %p546, %s545, 15
          %s549 = ssub.s32 128, 128
          %550 = vsyncadd %s540, %s549
          %s551 = smul.addr %s547, 2
          %s552 = smul.addr %s39, 32
          %s553 = sadd.s32 %s551, %s552
          %s554 = smul.addr %s553, 64
          %s555 = scalar_lea.hbm %s2, %s554
          %s556 = sshll.u32 %s543, 4
          %s557 = int_to_ptr.vmem [resolvable:$true] %s556
          %562 = dma.hbm_to_vmem [thread:$0]  %s555, 128, %s557, %s540, 64, 64, 4
        $region64: #{tpu_custom_call.1} parent=51 // pred_fallthru
          _
      $region52: #{tpu_custom_call.1} parent=5 // pred_fallthru
        _
      %p563 = scmp.le.s32.totalorder 1, %s32
      %p564 = scmp.lt.s32.totalorder %s32, 3
      %p565 = pnand %p563, %p564
      %p566 = pneg %p565
      // Predicated region
      $region65: #{tpu_custom_call.1} parent=5 // pred_check
        _
      $region66: #{tpu_custom_call.1} parent=5 // pred_check_branch
        %568 = sbr.rel (%p565) target = $region68
      $region67: #{tpu_custom_call.1} parent=5 // pred_region
        %s569 = ssub.s32 %s32, 1
        %s570 = sand.u32 %s67, 1
        %s571 = scalar_lea.sflag [#allocation3], %s570
        %s572 = sand.u32 %s67, 1
        %s573 = smul.addr %s572, 8
        %s574 = scalar_lea.vmem [#allocation2], %s573
        // Predicated region
        $region69: #{tpu_custom_call.1} parent=67 // pred_check
          %p575 = pneg %p80
        $region70: #{tpu_custom_call.1} parent=67 // pred_check_branch
          %577 = sbr.rel (%p575) target = $region72
        $region71: #{tpu_custom_call.1} parent=67 // pred_region
          %578 = dma.done %s571, 128
        $region72: #{tpu_custom_call.1} parent=67 // pred_fallthru
          _
        %s579 = sand.u32 %s37, 1
        %s580 = scalar_lea.sflag [#allocation6], %s579
        %s581 = sand.u32 %s95, 1
        %s582 = smul.addr %s581, 128
        %s583 = scalar_lea.vmem [#allocation5], %s582
        // Predicated region
        $region73: #{tpu_custom_call.1} parent=67 // pred_check
          %p584 = pneg %p108
        $region74: #{tpu_custom_call.1} parent=67 // pred_check_branch
          %586 = sbr.rel (%p584) target = $region76
        $region75: #{tpu_custom_call.1} parent=67 // pred_region
          %587 = dma.done %s580, 2048
        $region76: #{tpu_custom_call.1} parent=67 // pred_fallthru
          _
        %s588 = sand.u32 %s37, 1
        %s589 = scalar_lea.sflag [#allocation6], %s588
        %s590 = sand.u32 %s131, 1
        %s591 = smul.addr %s590, 8
        %s592 = scalar_lea.vmem [#allocation7], %s591
        // Predicated region
        $region77: #{tpu_custom_call.1} parent=67 // pred_check
          %p593 = pneg %p144
        $region78: #{tpu_custom_call.1} parent=67 // pred_check_branch
          %595 = sbr.rel (%p593) target = $region80
        $region79: #{tpu_custom_call.1} parent=67 // pred_region
          %596 = dma.done %s589, 128
        $region80: #{tpu_custom_call.1} parent=67 // pred_fallthru
          _
        // Predicated region
        $region81: #{tpu_custom_call.1} parent=67 // pred_check
          %p597 = pneg %p165
        $region82: #{tpu_custom_call.1} parent=67 // pred_check_branch
          %599 = sbr.rel (%p597) target = $region84
        $region83: #{tpu_custom_call.1} parent=67 // pred_region
          %600 = dma.done [#allocation9], 1024
        $region84: #{tpu_custom_call.1} parent=67 // pred_fallthru
          _
        // Predicated region
        $region85: #{tpu_custom_call.1} parent=67 // pred_check
          %p601 = pneg %p186
        $region86: #{tpu_custom_call.1} parent=67 // pred_check_branch
          %603 = sbr.rel (%p601) target = $region88
        $region87: #{tpu_custom_call.1} parent=67 // pred_region
          %604 = dma.done [#allocation9], 16
        $region88: #{tpu_custom_call.1} parent=67 // pred_fallthru
          _
        // Predicated region
        $region89: #{tpu_custom_call.1} parent=67 // pred_check
          %p605 = pneg %p207
        $region90: #{tpu_custom_call.1} parent=67 // pred_check_branch
          %607 = sbr.rel (%p605) target = $region92
        $region91: #{tpu_custom_call.1} parent=67 // pred_region
          %608 = dma.done [#allocation12], 16
        $region92: #{tpu_custom_call.1} parent=67 // pred_fallthru
          _
        // Predicated region
        $region93: #{tpu_custom_call.1} parent=67 // pred_check
          %p609 = pneg %p228
        $region94: #{tpu_custom_call.1} parent=67 // pred_check_branch
          %611 = sbr.rel (%p609) target = $region96
        $region95: #{tpu_custom_call.1} parent=67 // pred_region
          %612 = dma.done [#allocation12], 9216
        $region96: #{tpu_custom_call.1} parent=67 // pred_fallthru
          _
        // Predicated region
        $region97: #{tpu_custom_call.1} parent=67 // pred_check
          %p613 = pneg %p249
        $region98: #{tpu_custom_call.1} parent=67 // pred_check_branch
          %615 = sbr.rel (%p613) target = $region100
        $region99: #{tpu_custom_call.1} parent=67 // pred_region
          %616 = dma.done [#allocation15], 16
        $region100: #{tpu_custom_call.1} parent=67 // pred_fallthru
          _
        // Predicated region
        $region101: #{tpu_custom_call.1} parent=67 // pred_check
          %p617 = pneg %p270
        $region102: #{tpu_custom_call.1} parent=67 // pred_check_branch
          %619 = sbr.rel (%p617) target = $region104
        $region103: #{tpu_custom_call.1} parent=67 // pred_region
          %620 = dma.done [#allocation15], 16
        $region104: #{tpu_custom_call.1} parent=67 // pred_fallthru
          _
        // Predicated region
        $region105: #{tpu_custom_call.1} parent=67 // pred_check
          %p621 = pneg %p291
        $region106: #{tpu_custom_call.1} parent=67 // pred_check_branch
          %623 = sbr.rel (%p621) target = $region108
        $region107: #{tpu_custom_call.1} parent=67 // pred_region
          %624 = dma.done [#allocation18], 1024
        $region108: #{tpu_custom_call.1} parent=67 // pred_fallthru
          _
        // Predicated region
        $region109: #{tpu_custom_call.1} parent=67 // pred_check
          %p625 = pneg %p312
        $region110: #{tpu_custom_call.1} parent=67 // pred_check_branch
          %627 = sbr.rel (%p625) target = $region112
        $region111: #{tpu_custom_call.1} parent=67 // pred_region
          %628 = dma.done [#allocation18], 16
        $region112: #{tpu_custom_call.1} parent=67 // pred_fallthru
          _
        // Predicated region
        $region113: #{tpu_custom_call.1} parent=67 // pred_check
          %p629 = pneg %p333
        $region114: #{tpu_custom_call.1} parent=67 // pred_check_branch
          %631 = sbr.rel (%p629) target = $region116
        $region115: #{tpu_custom_call.1} parent=67 // pred_region
          %632 = dma.done [#allocation21], 16
        $region116: #{tpu_custom_call.1} parent=67 // pred_fallthru
          _
        %s633 = sand.u32 %s67, 1
        %s634 = scalar_lea.sflag [#allocation3], %s633
        %s635 = sand.u32 %s67, 1
        %s636 = smul.addr %s635, 8
        %s637 = scalar_lea.vmem [#allocation2], %s636
        %p638 = pneg %p80
        %p639 = pneg %p77
        %s640 = sand.u32 %s37, 1
        %s641 = scalar_lea.sflag [#allocation6], %s640
        %s642 = sand.u32 %s95, 1
        %s643 = smul.addr %s642, 128
        %s644 = scalar_lea.vmem [#allocation5], %s643
        %p645 = pneg %p108
        %p646 = pneg %p105
        %s647 = sand.u32 %s37, 1
        %s648 = scalar_lea.sflag [#allocation6], %s647
        %s649 = sand.u32 %s131, 1
        %s650 = smul.addr %s649, 8
        %s651 = scalar_lea.vmem [#allocation7], %s650
        %p652 = pneg %p144
        %p653 = pneg %p141
        %p654 = pneg %p165
        %p655 = pneg %p162
        %p656 = pneg %p186
        %p657 = pneg %p183
        %p658 = pneg %p207
        %p659 = pneg %p204
        %p660 = pneg %p228
        %p661 = pneg %p225
        %p662 = pneg %p249
        %p663 = pneg %p246
        %p664 = pneg %p270
        %p665 = pneg %p267
        %p666 = pneg %p291
        %p667 = pneg %p288
        %p668 = pneg %p312
        %p669 = pneg %p309
        %p670 = pneg %p333
        %p671 = pneg %p330
        %p672 = pneg %p361
        %p673 = pneg %p358
        %s674 = sand.u32 %s348, 1
        %s675 = scalar_lea.sflag [#allocation4], %s674
        %s676 = sand.u32 %s348, 1
        %s677 = smul.addr %s676, 128
        %s678 = scalar_lea.vmem [#allocation22], %s677
        %s679 = smul.u32 %s42, 16
        %s680 = ssub.s32 %s679, 1
        %p681 = scmp.gt.s32.totalorder %s680, 0
        %s682 = scalar_select %p681, %s680, 0
        %s683 = smul.u32 16, %s42
        %s684 = smul.u32 %s42, 16
        %s685 = sadd.s32 %s684, 16
        %p686 = scmp.lt.s32.totalorder %s685, 15
        %s687 = scalar_select %p686, %s685, 15
        %s688 = smul.u32 16, %s42
        %v690 = vld [vmem:[#allocation8] sm:$0xf]
        %v691 = vld [vmem:[#allocation8 + $0x4] sm:$0xf]
        %v692 = vld [vmem:[#allocation8 + $0x8] sm:$0xf]
        %v693 = vld [vmem:[#allocation8 + $0xc] sm:$0xf]
        %v694 = vld [vmem:[#allocation8 + $0x10] sm:$0xf]
        %v695 = vld [vmem:[#allocation8 + $0x14] sm:$0xf]
        %v696 = vld [vmem:[#allocation8 + $0x18] sm:$0xf]
        %v697 = vld [vmem:[#allocation8 + $0x1c] sm:$0xf]
        %v698 = vld [vmem:[#allocation8 + $0x20] sm:$0xf]
        %v699 = vld [vmem:[#allocation8 + $0x24] sm:$0xf]
        %v700 = vld [vmem:[#allocation8 + $0x28] sm:$0xf]
        %v701 = vld [vmem:[#allocation8 + $0x2c] sm:$0xf]
        %v702 = vld [vmem:[#allocation8 + $0x30] sm:$0xf]
        %v703 = vld [vmem:[#allocation8 + $0x34] sm:$0xf]
        %v704 = vld [vmem:[#allocation8 + $0x38] sm:$0xf]
        %v705 = vld [vmem:[#allocation8 + $0x3c] sm:$0xf]
        %v706 = vld [vmem:[%s574] sm:$0xf]
        %v707 = vld [vmem:[%s574 + $0x4] sm:$0xf]
        %v710 = vunpack.c.l.b16 %v706
        %v711 = vunpack.c.l.b16 %v707
        %v712 = vpack.c.b16 %v711, %v710
        %v730 = vunpack.c.l.b16 %v690
        %v731 = vunpack.c.l.b16 %v691
        %v732 = vunpack.c.l.b16 %v692
        %v733 = vunpack.c.l.b16 %v693
        %v734 = vunpack.c.l.b16 %v694
        %v735 = vunpack.c.l.b16 %v695
        %v736 = vunpack.c.l.b16 %v696
        %v737 = vunpack.c.l.b16 %v697
        %v738 = vunpack.c.l.b16 %v698
        %v739 = vunpack.c.l.b16 %v699
        %v740 = vunpack.c.l.b16 %v700
        %v741 = vunpack.c.l.b16 %v701
        %v742 = vunpack.c.l.b16 %v702
        %v743 = vunpack.c.l.b16 %v703
        %v744 = vunpack.c.l.b16 %v704
        %v745 = vunpack.c.l.b16 %v705
        %v746 = vpack.c.b16 %v731, %v730
        %v747 = vpack.c.b16 %v733, %v732
        %v748 = vpack.c.b16 %v735, %v734
        %v749 = vpack.c.b16 %v737, %v736
        %v750 = vpack.c.b16 %v739, %v738
        %v751 = vpack.c.b16 %v741, %v740
        %v752 = vpack.c.b16 %v743, %v742
        %v753 = vpack.c.b16 %v745, %v744
        %762 = vmatprep.subr.bf16.mxu0 0
        %763 = vmatpush1.bf16.msra.mxu0 %v746
        %764 = vmatprep.subr.bf16.mxu0 0
        %765 = vmatpush1.bf16.msra.mxu0 %v747
        %766 = vmatprep.subr.bf16.mxu0 0
        %767 = vmatpush1.bf16.msra.mxu0 %v748
        %768 = vmatprep.subr.bf16.mxu0 0
        %769 = vmatpush1.bf16.msra.mxu0 %v749
        %770 = vmatprep.subr.bf16.mxu0 0
        %771 = vmatpush1.bf16.msra.mxu0 %v750
        %772 = vmatprep.subr.bf16.mxu0 0
        %773 = vmatpush1.bf16.msra.mxu0 %v751
        %774 = vmatprep.subr.bf16.mxu0 0
        %775 = vmatpush1.bf16.msra.mxu0 %v752
        %776 = vmatprep.subr.bf16.mxu0 0
        %777 = vmatpush1.bf16.msra.mxu0 %v753
        %778 = vmatprep.subr.bf16.mxu0 0
        %779 = vmatpush1.bf16.msra.mxu0 0
        %780 = vmatprep.subr.bf16.mxu0 0
        %781 = vmatpush1.bf16.msra.mxu0 0
        %782 = vmatprep.subr.bf16.mxu0 0
        %783 = vmatpush1.bf16.msra.mxu0 0
        %784 = vmatprep.subr.bf16.mxu0 0
        %785 = vmatpush1.bf16.msra.mxu0 0
        %786 = vmatprep.subr.bf16.mxu0 0
        %787 = vmatpush1.bf16.msra.mxu0 0
        %788 = vmatprep.subr.bf16.mxu0 0
        %789 = vmatpush1.bf16.msra.mxu0 0
        %790 = vmatprep.subr.bf16.mxu0 0
        %791 = vmatpush1.bf16.msra.mxu0 0
        %792 = vmatprep.subr.bf16.mxu0 0
        %793 = vmatpush1.bf16.msra.mxu0 0
        %794 = vmatprep.mubr.bf16.mxu0 0
        %795 = vmatmul.mubr.bf16.gmra.mrb[0].mxu0 %v712
        %v796 = vpop.f32.mrb[0].mxu0
        %v797 = vadd.f32 0.0, %v796
        %v798 = vpop.f32.mrb[0].mxu0
        %v799 = vpop.f32.mrb[0].mxu0
        %v800 = vadd.f32 0.0, %v799
        %v801 = vpop.f32.mrb[0].mxu0
        %802 = vdwg.mxu0
        %v803 = vld [vmem:[%s583] sm:$0xf]
        %v804 = vld [vmem:[%s583 + $0x4] sm:$0xf]
        %v805 = vld [vmem:[%s583 + $0x8] sm:$0xf]
        %v806 = vld [vmem:[%s583 + $0xc] sm:$0xf]
        %v807 = vld [vmem:[%s583 + $0x10] sm:$0xf]
        %v808 = vld [vmem:[%s583 + $0x14] sm:$0xf]
        %v809 = vld [vmem:[%s583 + $0x18] sm:$0xf]
        %v810 = vld [vmem:[%s583 + $0x1c] sm:$0xf]
        %v811 = vld [vmem:[%s583 + $0x20] sm:$0xf]
        %v812 = vld [vmem:[%s583 + $0x24] sm:$0xf]
        %v813 = vld [vmem:[%s583 + $0x28] sm:$0xf]
        %v814 = vld [vmem:[%s583 + $0x2c] sm:$0xf]
        %v815 = vld [vmem:[%s583 + $0x30] sm:$0xf]
        %v816 = vld [vmem:[%s583 + $0x34] sm:$0xf]
        %v817 = vld [vmem:[%s583 + $0x38] sm:$0xf]
        %v818 = vld [vmem:[%s583 + $0x3c] sm:$0xf]
        %v819 = vld [vmem:[%s583 + $0x40] sm:$0xf]
        %v820 = vld [vmem:[%s583 + $0x44] sm:$0xf]
        %v821 = vld [vmem:[%s583 + $0x48] sm:$0xf]
        %v822 = vld [vmem:[%s583 + $0x4c] sm:$0xf]
        %v823 = vld [vmem:[%s583 + $0x50] sm:$0xf]
        %v824 = vld [vmem:[%s583 + $0x54] sm:$0xf]
        %v825 = vld [vmem:[%s583 + $0x58] sm:$0xf]
        %v826 = vld [vmem:[%s583 + $0x5c] sm:$0xf]
        %v827 = vld [vmem:[%s583 + $0x60] sm:$0xf]
        %v828 = vld [vmem:[%s583 + $0x64] sm:$0xf]
        %v829 = vld [vmem:[%s583 + $0x68] sm:$0xf]
        %v830 = vld [vmem:[%s583 + $0x6c] sm:$0xf]
        %v831 = vld [vmem:[%s583 + $0x70] sm:$0xf]
        %v832 = vld [vmem:[%s583 + $0x74] sm:$0xf]
        %v833 = vld [vmem:[%s583 + $0x78] sm:$0xf]
        %v834 = vld [vmem:[%s583 + $0x7c] sm:$0xf]
        %v867 = vunpack.c.l.b16 %v803
        %v868 = vunpack.c.l.b16 %v804
        %v869 = vunpack.c.l.b16 %v805
        %v870 = vunpack.c.l.b16 %v806
        %v871 = vunpack.c.l.b16 %v807
        %v872 = vunpack.c.l.b16 %v808
        %v873 = vunpack.c.l.b16 %v809
        %v874 = vunpack.c.l.b16 %v810
        %v875 = vunpack.c.l.b16 %v811
        %v876 = vunpack.c.l.b16 %v812
        %v877 = vunpack.c.l.b16 %v813
        %v878 = vunpack.c.l.b16 %v814
        %v879 = vunpack.c.l.b16 %v815
        %v880 = vunpack.c.l.b16 %v816
        %v881 = vunpack.c.l.b16 %v817
        %v882 = vunpack.c.l.b16 %v818
        %v883 = vunpack.c.l.b16 %v819
        %v884 = vunpack.c.l.b16 %v820
        %v885 = vunpack.c.l.b16 %v821
        %v886 = vunpack.c.l.b16 %v822
        %v887 = vunpack.c.l.b16 %v823
        %v888 = vunpack.c.l.b16 %v824
        %v889 = vunpack.c.l.b16 %v825
        %v890 = vunpack.c.l.b16 %v826
        %v891 = vunpack.c.l.b16 %v827
        %v892 = vunpack.c.l.b16 %v828
        %v893 = vunpack.c.l.b16 %v829
        %v894 = vunpack.c.l.b16 %v830
        %v895 = vunpack.c.l.b16 %v831
        %v896 = vunpack.c.l.b16 %v832
        %v897 = vunpack.c.l.b16 %v833
        %v898 = vunpack.c.l.b16 %v834
        %v899 = vpack.c.b16 %v868, %v867
        %v900 = vpack.c.b16 %v870, %v869
        %v901 = vpack.c.b16 %v872, %v871
        %v902 = vpack.c.b16 %v874, %v873
        %v903 = vpack.c.b16 %v876, %v875
        %v904 = vpack.c.b16 %v878, %v877
        %v905 = vpack.c.b16 %v880, %v879
        %v906 = vpack.c.b16 %v882, %v881
        %v907 = vpack.c.b16 %v884, %v883
        %v908 = vpack.c.b16 %v886, %v885
        %v909 = vpack.c.b16 %v888, %v887
        %v910 = vpack.c.b16 %v890, %v889
        %v911 = vpack.c.b16 %v892, %v891
        %v912 = vpack.c.b16 %v894, %v893
        %v913 = vpack.c.b16 %v896, %v895
        %v914 = vpack.c.b16 %v898, %v897
        %931 = vmatprep.subr.bf16.mxu0 0
        %932 = vmatpush1.bf16.msra.mxu0 %v746
        %933 = vmatprep.subr.bf16.mxu0 0
        %934 = vmatpush1.bf16.msra.mxu0 %v747
        %935 = vmatprep.subr.bf16.mxu0 0
        %936 = vmatpush1.bf16.msra.mxu0 %v748
        %937 = vmatprep.subr.bf16.mxu0 0
        %938 = vmatpush1.bf16.msra.mxu0 %v749
        %939 = vmatprep.subr.bf16.mxu0 0
        %940 = vmatpush1.bf16.msra.mxu0 %v750
        %941 = vmatprep.subr.bf16.mxu0 0
        %942 = vmatpush1.bf16.msra.mxu0 %v751
        %943 = vmatprep.subr.bf16.mxu0 0
        %944 = vmatpush1.bf16.msra.mxu0 %v752
        %945 = vmatprep.subr.bf16.mxu0 0
        %946 = vmatpush1.bf16.msra.mxu0 %v753
        %947 = vmatprep.subr.bf16.mxu0 0
        %948 = vmatpush1.bf16.msra.mxu0 0
        %949 = vmatprep.subr.bf16.mxu0 0
        %950 = vmatpush1.bf16.msra.mxu0 0
        %951 = vmatprep.subr.bf16.mxu0 0
        %952 = vmatpush1.bf16.msra.mxu0 0
        %953 = vmatprep.subr.bf16.mxu0 0
        %954 = vmatpush1.bf16.msra.mxu0 0
        %955 = vmatprep.subr.bf16.mxu0 0
        %956 = vmatpush1.bf16.msra.mxu0 0
        %957 = vmatprep.subr.bf16.mxu0 0
        %958 = vmatpush1.bf16.msra.mxu0 0
        %959 = vmatprep.subr.bf16.mxu0 0
        %960 = vmatpush1.bf16.msra.mxu0 0
        %961 = vmatprep.subr.bf16.mxu0 0
        %962 = vmatpush1.bf16.msra.mxu0 0
        %963 = vmatprep.mubr.bf16.mxu0 0
        %964 = vmatmul.mubr.bf16.gmra.mrb[0].mxu0 %v899
        %v965 = vpop.f32.mrb[0].mxu0
        %v966 = vadd.f32 0.0, %v965
        %v967 = vpop.f32.mrb[0].mxu0
        %v968 = vpop.f32.mrb[0].mxu0
        %v969 = vadd.f32 0.0, %v968
        %v970 = vpop.f32.mrb[0].mxu0
        %971 = vmatprep.mubr.bf16.mxu0 0
        %972 = vmatmul.mubr.bf16.gmra.mrb[0].mxu0 %v900
        %v973 = vpop.f32.mrb[0].mxu0
        %v974 = vadd.f32 0.0, %v973
        %v975 = vpop.f32.mrb[0].mxu0
        %v976 = vpop.f32.mrb[0].mxu0
        %v977 = vadd.f32 0.0, %v976
        %v978 = vpop.f32.mrb[0].mxu0
        %979 = vmatprep.mubr.bf16.mxu0 0
        %980 = vmatmul.mubr.bf16.gmra.mrb[0].mxu0 %v901
        %v981 = vpop.f32.mrb[0].mxu0
        %v982 = vadd.f32 0.0, %v981
        %v983 = vpop.f32.mrb[0].mxu0
        %v984 = vpop.f32.mrb[0].mxu0
        %v985 = vadd.f32 0.0, %v984
        %v986 = vpop.f32.mrb[0].mxu0
        %987 = vmatprep.mubr.bf16.mxu0 0
        %988 = vmatmul.mubr.bf16.gmra.mrb[0].mxu0 %v902
        %v989 = vpop.f32.mrb[0].mxu0
        %v990 = vadd.f32 0.0, %v989
        %v991 = vpop.f32.mrb[0].mxu0
        %v992 = vpop.f32.mrb[0].mxu0
        %v993 = vadd.f32 0.0, %v992
        %v994 = vpop.f32.mrb[0].mxu0
        %995 = vmatprep.mubr.bf16.mxu0 0
        %996 = vmatmul.mubr.bf16.gmra.mrb[0].mxu0 %v903
        %v997 = vpop.f32.mrb[0].mxu0
        %v998 = vadd.f32 0.0, %v997
        %v999 = vpop.f32.mrb[0].mxu0
        %v1000 = vpop.f32.mrb[0].mxu0
        %v1001 = vadd.f32 0.0, %v1000
        %v1002 = vpop.f32.mrb[0].mxu0
        %1003 = vmatprep.mubr.bf16.mxu0 0
        %1004 = vmatmul.mubr.bf16.gmra.mrb[0].mxu0 %v904
        %v1005 = vpop.f32.mrb[0].mxu0
        %v1006 = vadd.f32 0.0, %v1005
        %v1007 = vpop.f32.mrb[0].mxu0
        %v1008 = vpop.f32.mrb[0].mxu0
        %v1009 = vadd.f32 0.0, %v1008
        %v1010 = vpop.f32.mrb[0].mxu0
        %1011 = vmatprep.mubr.bf16.mxu0 0
        %1012 = vmatmul.mubr.bf16.gmra.mrb[0].mxu0 %v905
        %v1013 = vpop.f32.mrb[0].mxu0
        %v1014 = vadd.f32 0.0, %v1013
        %v1015 = vpop.f32.mrb[0].mxu0
        %v1016 = vpop.f32.mrb[0].mxu0
        %v1017 = vadd.f32 0.0, %v1016
        %v1018 = vpop.f32.mrb[0].mxu0
        %1019 = vmatprep.mubr.bf16.mxu0 0
        %1020 = vmatmul.mubr.bf16.gmra.mrb[0].mxu0 %v906
        %v1021 = vpop.f32.mrb[0].mxu0
        %v1022 = vadd.f32 0.0, %v1021
        %v1023 = vpop.f32.mrb[0].mxu0
        %v1024 = vpop.f32.mrb[0].mxu0
        %v1025 = vadd.f32 0.0, %v1024
        %v1026 = vpop.f32.mrb[0].mxu0
        %1027 = vmatprep.mubr.bf16.mxu0 0
        %1028 = vmatmul.mubr.bf16.gmra.mrb[0].mxu0 %v907
        %v1029 = vpop.f32.mrb[0].mxu0
        %v1030 = vadd.f32 0.0, %v1029
        %v1031 = vpop.f32.mrb[0].mxu0
        %v1032 = vpop.f32.mrb[0].mxu0
        %v1033 = vadd.f32 0.0, %v1032
        %v1034 = vpop.f32.mrb[0].mxu0
        %1035 = vmatprep.mubr.bf16.mxu0 0
        %1036 = vmatmul.mubr.bf16.gmra.mrb[0].mxu0 %v908
        %v1037 = vpop.f32.mrb[0].mxu0
        %v1038 = vadd.f32 0.0, %v1037
        %v1039 = vpop.f32.mrb[0].mxu0
        %v1040 = vpop.f32.mrb[0].mxu0
        %v1041 = vadd.f32 0.0, %v1040
        %v1042 = vpop.f32.mrb[0].mxu0
        %1043 = vmatprep.mubr.bf16.mxu0 0
        %1044 = vmatmul.mubr.bf16.gmra.mrb[0].mxu0 %v909
        %v1045 = vpop.f32.mrb[0].mxu0
        %v1046 = vadd.f32 0.0, %v1045
        %v1047 = vpop.f32.mrb[0].mxu0
        %v1048 = vpop.f32.mrb[0].mxu0
        %v1049 = vadd.f32 0.0, %v1048
        %v1050 = vpop.f32.mrb[0].mxu0
        %1051 = vmatprep.mubr.bf16.mxu0 0
        %1052 = vmatmul.mubr.bf16.gmra.mrb[0].mxu0 %v910
        %v1053 = vpop.f32.mrb[0].mxu0
        %v1054 = vadd.f32 0.0, %v1053
        %v1055 = vpop.f32.mrb[0].mxu0
        %v1056 = vpop.f32.mrb[0].mxu0
        %v1057 = vadd.f32 0.0, %v1056
        %v1058 = vpop.f32.mrb[0].mxu0
        %1059 = vmatprep.mubr.bf16.mxu0 0
        %1060 = vmatmul.mubr.bf16.gmra.mrb[0].mxu0 %v911
        %v1061 = vpop.f32.mrb[0].mxu0
        %v1062 = vadd.f32 0.0, %v1061
        %v1063 = vpop.f32.mrb[0].mxu0
        %v1064 = vpop.f32.mrb[0].mxu0
        %v1065 = vadd.f32 0.0, %v1064
        %v1066 = vpop.f32.mrb[0].mxu0
        %1067 = vmatprep.mubr.bf16.mxu0 0
        %1068 = vmatmul.mubr.bf16.gmra.mrb[0].mxu0 %v912
        %v1069 = vpop.f32.mrb[0].mxu0
        %v1070 = vadd.f32 0.0, %v1069
        %v1071 = vpop.f32.mrb[0].mxu0
        %v1072 = vpop.f32.mrb[0].mxu0
        %v1073 = vadd.f32 0.0, %v1072
        %v1074 = vpop.f32.mrb[0].mxu0
        %1075 = vmatprep.mubr.bf16.mxu0 0
        %1076 = vmatmul.mubr.bf16.gmra.mrb[0].mxu0 %v913
        %v1077 = vpop.f32.mrb[0].mxu0
        %v1078 = vadd.f32 0.0, %v1077
        %v1079 = vpop.f32.mrb[0].mxu0
        %v1080 = vpop.f32.mrb[0].mxu0
        %v1081 = vadd.f32 0.0, %v1080
        %v1082 = vpop.f32.mrb[0].mxu0
        %1083 = vmatprep.mubr.bf16.mxu0 0
        %1084 = vmatmul.mubr.bf16.gmra.mrb[0].mxu0 %v914
        %v1085 = vpop.f32.mrb[0].mxu0
        %v1086 = vadd.f32 0.0, %v1085
        %v1087 = vpop.f32.mrb[0].mxu0
        %v1088 = vpop.f32.mrb[0].mxu0
        %v1089 = vadd.f32 0.0, %v1088
        %v1090 = vpop.f32.mrb[0].mxu0
        %1091 = vdwg.mxu0
        %v1092 = vld [vmem:[%s592] sm:$0xf]
        %v1093 = vld [vmem:[%s592 + $0x4] sm:$0xf]
        %v1096 = vunpack.c.l.b16 %v1092
        %v1097 = vunpack.c.l.b16 %v1093
        %v1098 = vpack.c.b16 %v1097, %v1096
        %1100 = vmatprep.subr.bf16.mxu0 0
        %1101 = vmatpush1.bf16.msra.mxu0 %v746
        %1102 = vmatprep.subr.bf16.mxu0 0
        %1103 = vmatpush1.bf16.msra.mxu0 %v747
        %1104 = vmatprep.subr.bf16.mxu0 0
        %1105 = vmatpush1.bf16.msra.mxu0 %v748
        %1106 = vmatprep.subr.bf16.mxu0 0
        %1107 = vmatpush1.bf16.msra.mxu0 %v749
        %1108 = vmatprep.subr.bf16.mxu0 0
        %1109 = vmatpush1.bf16.msra.mxu0 %v750
        %1110 = vmatprep.subr.bf16.mxu0 0
        %1111 = vmatpush1.bf16.msra.mxu0 %v751
        %1112 = vmatprep.subr.bf16.mxu0 0
        %1113 = vmatpush1.bf16.msra.mxu0 %v752
        %1114 = vmatprep.subr.bf16.mxu0 0
        %1115 = vmatpush1.bf16.msra.mxu0 %v753
        %1116 = vmatprep.subr.bf16.mxu0 0
        %1117 = vmatpush1.bf16.msra.mxu0 0
        %1118 = vmatprep.subr.bf16.mxu0 0
        %1119 = vmatpush1.bf16.msra.mxu0 0
        %1120 = vmatprep.subr.bf16.mxu0 0
        %1121 = vmatpush1.bf16.msra.mxu0 0
        %1122 = vmatprep.subr.bf16.mxu0 0
        %1123 = vmatpush1.bf16.msra.mxu0 0
        %1124 = vmatprep.subr.bf16.mxu0 0
        %1125 = vmatpush1.bf16.msra.mxu0 0
        %1126 = vmatprep.subr.bf16.mxu0 0
        %1127 = vmatpush1.bf16.msra.mxu0 0
        %1128 = vmatprep.subr.bf16.mxu0 0
        %1129 = vmatpush1.bf16.msra.mxu0 0
        %1130 = vmatprep.subr.bf16.mxu0 0
        %1131 = vmatpush1.bf16.msra.mxu0 0
        %1132 = vmatprep.mubr.bf16.mxu0 0
        %1133 = vmatmul.mubr.bf16.gmra.mrb[0].mxu0 %v1098
        %v1134 = vpop.f32.mrb[0].mxu0
        %v1135 = vadd.f32 0.0, %v1134
        %v1136 = vpop.f32.mrb[0].mxu0
        %v1137 = vpop.f32.mrb[0].mxu0
        %v1138 = vadd.f32 0.0, %v1137
        %v1139 = vpop.f32.mrb[0].mxu0
        %1140 = vdwg.mxu0
        %v1141 = vld [vmem:[#allocation10] sm:$0x1]
        %v1143 = vlaneseq
        %v1144 = vshrl.u32 %v1143, 7
        %v1145 = vsub.s32 0, %v1144
        %v1146 = vrot.slane %v1141, %v1145
        %v1148 = vmul.f32 %v797, %v1146
        %v1149 = vmul.f32 %v800, %v1146
        %v1150 = vmul.f32 %v966, %v1146
        %v1151 = vmul.f32 %v969, %v1146
        %v1152 = vmul.f32 %v974, %v1146
        %v1153 = vmul.f32 %v977, %v1146
        %v1154 = vmul.f32 %v982, %v1146
        %v1155 = vmul.f32 %v985, %v1146
        %v1156 = vmul.f32 %v990, %v1146
        %v1157 = vmul.f32 %v993, %v1146
        %v1158 = vmul.f32 %v998, %v1146
        %v1159 = vmul.f32 %v1001, %v1146
        %v1160 = vmul.f32 %v1006, %v1146
        %v1161 = vmul.f32 %v1009, %v1146
        %v1162 = vmul.f32 %v1014, %v1146
        %v1163 = vmul.f32 %v1017, %v1146
        %v1164 = vmul.f32 %v1022, %v1146
        %v1165 = vmul.f32 %v1025, %v1146
        %v1166 = vmul.f32 %v1030, %v1146
        %v1167 = vmul.f32 %v1033, %v1146
        %v1168 = vmul.f32 %v1038, %v1146
        %v1169 = vmul.f32 %v1041, %v1146
        %v1170 = vmul.f32 %v1046, %v1146
        %v1171 = vmul.f32 %v1049, %v1146
        %v1172 = vmul.f32 %v1054, %v1146
        %v1173 = vmul.f32 %v1057, %v1146
        %v1174 = vmul.f32 %v1062, %v1146
        %v1175 = vmul.f32 %v1065, %v1146
        %v1176 = vmul.f32 %v1070, %v1146
        %v1177 = vmul.f32 %v1073, %v1146
        %v1178 = vmul.f32 %v1078, %v1146
        %v1179 = vmul.f32 %v1081, %v1146
        %v1180 = vmul.f32 %v1086, %v1146
        %v1181 = vmul.f32 %v1089, %v1146
        %v1182 = vmul.f32 %v1135, %v1146
        %v1183 = vmul.f32 %v1138, %v1146
        %v1184 = vld [vmem:[#allocation11] sm:$0x1]
        %v1186 = vlaneseq
        %v1187 = vshrl.u32 %v1186, 7
        %v1188 = vsub.s32 0, %v1187
        %v1189 = vrot.slane %v1184, %v1188
        %v1191 = vadd.f32 %v1148, %v1189
        %v1192 = vadd.f32 %v1149, %v1189
        %v1193 = vadd.f32 %v1150, %v1189
        %v1194 = vadd.f32 %v1151, %v1189
        %v1195 = vadd.f32 %v1152, %v1189
        %v1196 = vadd.f32 %v1153, %v1189
        %v1197 = vadd.f32 %v1154, %v1189
        %v1198 = vadd.f32 %v1155, %v1189
        %v1199 = vadd.f32 %v1156, %v1189
        %v1200 = vadd.f32 %v1157, %v1189
        %v1201 = vadd.f32 %v1158, %v1189
        %v1202 = vadd.f32 %v1159, %v1189
        %v1203 = vadd.f32 %v1160, %v1189
        %v1204 = vadd.f32 %v1161, %v1189
        %v1205 = vadd.f32 %v1162, %v1189
        %v1206 = vadd.f32 %v1163, %v1189
        %v1207 = vadd.f32 %v1164, %v1189
        %v1208 = vadd.f32 %v1165, %v1189
        %v1209 = vadd.f32 %v1166, %v1189
        %v1210 = vadd.f32 %v1167, %v1189
        %v1211 = vadd.f32 %v1168, %v1189
        %v1212 = vadd.f32 %v1169, %v1189
        %v1213 = vadd.f32 %v1170, %v1189
        %v1214 = vadd.f32 %v1171, %v1189
        %v1215 = vadd.f32 %v1172, %v1189
        %v1216 = vadd.f32 %v1173, %v1189
        %v1217 = vadd.f32 %v1174, %v1189
        %v1218 = vadd.f32 %v1175, %v1189
        %v1219 = vadd.f32 %v1176, %v1189
        %v1220 = vadd.f32 %v1177, %v1189
        %v1221 = vadd.f32 %v1178, %v1189
        %v1222 = vadd.f32 %v1179, %v1189
        %v1223 = vadd.f32 %v1180, %v1189
        %v1224 = vadd.f32 %v1181, %v1189
        %v1225 = vadd.f32 %v1182, %v1189
        %v1226 = vadd.f32 %v1183, %v1189
        %v1227 = vmax.f32 %v1191, 0.0
        %v1228 = vmax.f32 %v1192, 0.0
        %v1229 = vmax.f32 %v1193, 0.0
        %v1230 = vmax.f32 %v1194, 0.0
        %v1231 = vmax.f32 %v1195, 0.0
        %v1232 = vmax.f32 %v1196, 0.0
        %v1233 = vmax.f32 %v1197, 0.0
        %v1234 = vmax.f32 %v1198, 0.0
        %v1235 = vmax.f32 %v1199, 0.0
        %v1236 = vmax.f32 %v1200, 0.0
        %v1237 = vmax.f32 %v1201, 0.0
        %v1238 = vmax.f32 %v1202, 0.0
        %v1239 = vmax.f32 %v1203, 0.0
        %v1240 = vmax.f32 %v1204, 0.0
        %v1241 = vmax.f32 %v1205, 0.0
        %v1242 = vmax.f32 %v1206, 0.0
        %v1243 = vmax.f32 %v1207, 0.0
        %v1244 = vmax.f32 %v1208, 0.0
        %v1245 = vmax.f32 %v1209, 0.0
        %v1246 = vmax.f32 %v1210, 0.0
        %v1247 = vmax.f32 %v1211, 0.0
        %v1248 = vmax.f32 %v1212, 0.0
        %v1249 = vmax.f32 %v1213, 0.0
        %v1250 = vmax.f32 %v1214, 0.0
        %v1251 = vmax.f32 %v1215, 0.0
        %v1252 = vmax.f32 %v1216, 0.0
        %v1253 = vmax.f32 %v1217, 0.0
        %v1254 = vmax.f32 %v1218, 0.0
        %v1255 = vmax.f32 %v1219, 0.0
        %v1256 = vmax.f32 %v1220, 0.0
        %v1257 = vmax.f32 %v1221, 0.0
        %v1258 = vmax.f32 %v1222, 0.0
        %v1259 = vmax.f32 %v1223, 0.0
        %v1260 = vmax.f32 %v1224, 0.0
        %v1261 = vmax.f32 %v1225, 0.0
        %v1262 = vmax.f32 %v1226, 0.0
        %v1263 = vlaneseq
        %v1264 = vshrl.u32 %v1263, 7
        %v1265 = vadd.s32 %v1264, 8
        %v1266 = vadd.s32 %v1264, 16
        %v1267 = vadd.s32 %v1264, 24
        %v1268 = vadd.s32 %v1264, 32
        %v1269 = vadd.s32 %v1264, 40
        %v1270 = vadd.s32 %v1264, 48
        %v1271 = vadd.s32 %v1264, 56
        %v1272 = vadd.s32 %v1264, 64
        %v1273 = vadd.s32 %v1264, 72
        %v1274 = vadd.s32 %v1264, 80
        %v1275 = vadd.s32 %v1264, 88
        %v1276 = vadd.s32 %v1264, 96
        %v1277 = vadd.s32 %v1264, 104
        %v1278 = vadd.s32 %v1264, 112
        %v1279 = vadd.s32 %v1264, 120
        %v1280 = vadd.s32 %v1264, 128
        %v1281 = vadd.s32 %v1264, 136
        %v1282 = vadd.s32 %v1264, 144
        %v1283 = vadd.s32 %v1264, 152
        %v1284 = vadd.s32 %v1264, 160
        %v1285 = vadd.s32 %v1264, 168
        %v1286 = vadd.s32 %v1264, 176
        %v1287 = vadd.s32 %v1264, 184
        %v1288 = vadd.s32 %v1264, 192
        %v1289 = vadd.s32 %v1264, 200
        %v1290 = vadd.s32 %v1264, 208
        %v1291 = vadd.s32 %v1264, 216
        %v1292 = vadd.s32 %v1264, 224
        %v1293 = vadd.s32 %v1264, 232
        %v1294 = vadd.s32 %v1264, 240
        %v1295 = vadd.s32 %v1264, 248
        %v1296 = vadd.s32 %v1264, 256
        %v1297 = vadd.s32 %v1264, 264
        %v1298 = vadd.s32 %v1264, 272
        %v1299 = vadd.s32 %v1264, 280
        %p1300 = scmp.eq.s32.totalorder %s42, 0
        %vm1301 = vcmp.lt.s32.totalorder %v1264, 16
        %vm1302 = vcmp.lt.s32.totalorder %v1265, 16
        %vm1303 = vcmp.lt.s32.totalorder %v1266, 16
        %vm1304 = vcmp.lt.s32.totalorder %v1267, 16
        %vm1305 = vcmp.lt.s32.totalorder %v1268, 16
        %vm1306 = vcmp.lt.s32.totalorder %v1269, 16
        %vm1307 = vcmp.lt.s32.totalorder %v1270, 16
        %vm1308 = vcmp.lt.s32.totalorder %v1271, 16
        %vm1309 = vcmp.lt.s32.totalorder %v1272, 16
        %vm1310 = vcmp.lt.s32.totalorder %v1273, 16
        %vm1311 = vcmp.lt.s32.totalorder %v1274, 16
        %vm1312 = vcmp.lt.s32.totalorder %v1275, 16
        %vm1313 = vcmp.lt.s32.totalorder %v1276, 16
        %vm1314 = vcmp.lt.s32.totalorder %v1277, 16
        %vm1315 = vcmp.lt.s32.totalorder %v1278, 16
        %vm1316 = vcmp.lt.s32.totalorder %v1279, 16
        %vm1317 = vcmp.lt.s32.totalorder %v1280, 16
        %vm1318 = vcmp.lt.s32.totalorder %v1281, 16
        %vm1319 = vcmp.lt.s32.totalorder %v1282, 16
        %vm1320 = vcmp.lt.s32.totalorder %v1283, 16
        %vm1321 = vcmp.lt.s32.totalorder %v1284, 16
        %vm1322 = vcmp.lt.s32.totalorder %v1285, 16
        %vm1323 = vcmp.lt.s32.totalorder %v1286, 16
        %vm1324 = vcmp.lt.s32.totalorder %v1287, 16
        %vm1325 = vcmp.lt.s32.totalorder %v1288, 16
        %vm1326 = vcmp.lt.s32.totalorder %v1289, 16
        %vm1327 = vcmp.lt.s32.totalorder %v1290, 16
        %vm1328 = vcmp.lt.s32.totalorder %v1291, 16
        %vm1329 = vcmp.lt.s32.totalorder %v1292, 16
        %vm1330 = vcmp.lt.s32.totalorder %v1293, 16
        %vm1331 = vcmp.lt.s32.totalorder %v1294, 16
        %vm1332 = vcmp.lt.s32.totalorder %v1295, 16
        %vm1333 = vcmp.lt.s32.totalorder %v1296, 16
        %vm1334 = vcmp.lt.s32.totalorder %v1297, 16
        %vm1335 = vcmp.lt.s32.totalorder %v1298, 16
        %vm1336 = vcmp.lt.s32.totalorder %v1299, 16
        %s1337 = scalar_select %p1300, 1, 0
        %v1338 = vstv %s1337
        %vm1339 = vcmp.eq.s32.totalorder %v1338, 1
        %vm1340 = vmand %vm1339, %vm1301
        %vm1341 = vmand %vm1339, %vm1302
        %vm1342 = vmand %vm1339, %vm1303
        %vm1343 = vmand %vm1339, %vm1304
        %vm1344 = vmand %vm1339, %vm1305
        %vm1345 = vmand %vm1339, %vm1306
        %vm1346 = vmand %vm1339, %vm1307
        %vm1347 = vmand %vm1339, %vm1308
        %vm1348 = vmand %vm1339, %vm1309
        %vm1349 = vmand %vm1339, %vm1310
        %vm1350 = vmand %vm1339, %vm1311
        %vm1351 = vmand %vm1339, %vm1312
        %vm1352 = vmand %vm1339, %vm1313
        %vm1353 = vmand %vm1339, %vm1314
        %vm1354 = vmand %vm1339, %vm1315
        %vm1355 = vmand %vm1339, %vm1316
        %vm1356 = vmand %vm1339, %vm1317
        %vm1357 = vmand %vm1339, %vm1318
        %vm1358 = vmand %vm1339, %vm1319
        %vm1359 = vmand %vm1339, %vm1320
        %vm1360 = vmand %vm1339, %vm1321
        %vm1361 = vmand %vm1339, %vm1322
        %vm1362 = vmand %vm1339, %vm1323
        %vm1363 = vmand %vm1339, %vm1324
        %vm1364 = vmand %vm1339, %vm1325
        %vm1365 = vmand %vm1339, %vm1326
        %vm1366 = vmand %vm1339, %vm1327
        %vm1367 = vmand %vm1339, %vm1328
        %vm1368 = vmand %vm1339, %vm1329
        %vm1369 = vmand %vm1339, %vm1330
        %vm1370 = vmand %vm1339, %vm1331
        %vm1371 = vmand %vm1339, %vm1332
        %vm1372 = vmand %vm1339, %vm1333
        %vm1373 = vmand %vm1339, %vm1334
        %vm1374 = vmand %vm1339, %vm1335
        %vm1375 = vmand %vm1339, %vm1336
        %vm1376 = vcmp.ge.s32.totalorder %v1264, 272
        %vm1377 = vcmp.ge.s32.totalorder %v1265, 272
        %vm1378 = vcmp.ge.s32.totalorder %v1266, 272
        %vm1379 = vcmp.ge.s32.totalorder %v1267, 272
        %vm1380 = vcmp.ge.s32.totalorder %v1268, 272
        %vm1381 = vcmp.ge.s32.totalorder %v1269, 272
        %vm1382 = vcmp.ge.s32.totalorder %v1270, 272
        %vm1383 = vcmp.ge.s32.totalorder %v1271, 272
        %vm1384 = vcmp.ge.s32.totalorder %v1272, 272
        %vm1385 = vcmp.ge.s32.totalorder %v1273, 272
        %vm1386 = vcmp.ge.s32.totalorder %v1274, 272
        %vm1387 = vcmp.ge.s32.totalorder %v1275, 272
        %vm1388 = vcmp.ge.s32.totalorder %v1276, 272
        %vm1389 = vcmp.ge.s32.totalorder %v1277, 272
        %vm1390 = vcmp.ge.s32.totalorder %v1278, 272
        %vm1391 = vcmp.ge.s32.totalorder %v1279, 272
        %vm1392 = vcmp.ge.s32.totalorder %v1280, 272
        %vm1393 = vcmp.ge.s32.totalorder %v1281, 272
        %vm1394 = vcmp.ge.s32.totalorder %v1282, 272
        %vm1395 = vcmp.ge.s32.totalorder %v1283, 272
        %vm1396 = vcmp.ge.s32.totalorder %v1284, 272
        %vm1397 = vcmp.ge.s32.totalorder %v1285, 272
        %vm1398 = vcmp.ge.s32.totalorder %v1286, 272
        %vm1399 = vcmp.ge.s32.totalorder %v1287, 272
        %vm1400 = vcmp.ge.s32.totalorder %v1288, 272
        %vm1401 = vcmp.ge.s32.totalorder %v1289, 272
        %vm1402 = vcmp.ge.s32.totalorder %v1290, 272
        %vm1403 = vcmp.ge.s32.totalorder %v1291, 272
        %vm1404 = vcmp.ge.s32.totalorder %v1292, 272
        %vm1405 = vcmp.ge.s32.totalorder %v1293, 272
        %vm1406 = vcmp.ge.s32.totalorder %v1294, 272
        %vm1407 = vcmp.ge.s32.totalorder %v1295, 272
        %vm1408 = vcmp.ge.s32.totalorder %v1296, 272
        %vm1409 = vcmp.ge.s32.totalorder %v1297, 272
        %vm1410 = vcmp.ge.s32.totalorder %v1298, 272
        %vm1411 = vcmp.ge.s32.totalorder %v1299, 272
        %vm1412 = vmand %vm1339, %vm1376
        %vm1413 = vmand %vm1339, %vm1377
        %vm1414 = vmand %vm1339, %vm1378
        %vm1415 = vmand %vm1339, %vm1379
        %vm1416 = vmand %vm1339, %vm1380
        %vm1417 = vmand %vm1339, %vm1381
        %vm1418 = vmand %vm1339, %vm1382
        %vm1419 = vmand %vm1339, %vm1383
        %vm1420 = vmand %vm1339, %vm1384
        %vm1421 = vmand %vm1339, %vm1385
        %vm1422 = vmand %vm1339, %vm1386
        %vm1423 = vmand %vm1339, %vm1387
        %vm1424 = vmand %vm1339, %vm1388
        %vm1425 = vmand %vm1339, %vm1389
        %vm1426 = vmand %vm1339, %vm1390
        %vm1427 = vmand %vm1339, %vm1391
        %vm1428 = vmand %vm1339, %vm1392
        %vm1429 = vmand %vm1339, %vm1393
        %vm1430 = vmand %vm1339, %vm1394
        %vm1431 = vmand %vm1339, %vm1395
        %vm1432 = vmand %vm1339, %vm1396
        %vm1433 = vmand %vm1339, %vm1397
        %vm1434 = vmand %vm1339, %vm1398
        %vm1435 = vmand %vm1339, %vm1399
        %vm1436 = vmand %vm1339, %vm1400
        %vm1437 = vmand %vm1339, %vm1401
        %vm1438 = vmand %vm1339, %vm1402
        %vm1439 = vmand %vm1339, %vm1403
        %vm1440 = vmand %vm1339, %vm1404
        %vm1441 = vmand %vm1339, %vm1405
        %vm1442 = vmand %vm1339, %vm1406
        %vm1443 = vmand %vm1339, %vm1407
        %vm1444 = vmand %vm1339, %vm1408
        %vm1445 = vmand %vm1339, %vm1409
        %vm1446 = vmand %vm1339, %vm1410
        %vm1447 = vmand %vm1339, %vm1411
        %vm1448 = vmor %vm1340, %vm1412
        %vm1449 = vmor %vm1341, %vm1413
        %vm1450 = vmor %vm1342, %vm1414
        %vm1451 = vmor %vm1343, %vm1415
        %vm1452 = vmor %vm1344, %vm1416
        %vm1453 = vmor %vm1345, %vm1417
        %vm1454 = vmor %vm1346, %vm1418
        %vm1455 = vmor %vm1347, %vm1419
        %vm1456 = vmor %vm1348, %vm1420
        %vm1457 = vmor %vm1349, %vm1421
        %vm1458 = vmor %vm1350, %vm1422
        %vm1459 = vmor %vm1351, %vm1423
        %vm1460 = vmor %vm1352, %vm1424
        %vm1461 = vmor %vm1353, %vm1425
        %vm1462 = vmor %vm1354, %vm1426
        %vm1463 = vmor %vm1355, %vm1427
        %vm1464 = vmor %vm1356, %vm1428
        %vm1465 = vmor %vm1357, %vm1429
        %vm1466 = vmor %vm1358, %vm1430
        %vm1467 = vmor %vm1359, %vm1431
        %vm1468 = vmor %vm1360, %vm1432
        %vm1469 = vmor %vm1361, %vm1433
        %vm1470 = vmor %vm1362, %vm1434
        %vm1471 = vmor %vm1363, %vm1435
        %vm1472 = vmor %vm1364, %vm1436
        %vm1473 = vmor %vm1365, %vm1437
        %vm1474 = vmor %vm1366, %vm1438
        %vm1475 = vmor %vm1367, %vm1439
        %vm1476 = vmor %vm1368, %vm1440
        %vm1477 = vmor %vm1369, %vm1441
        %vm1478 = vmor %vm1370, %vm1442
        %vm1479 = vmor %vm1371, %vm1443
        %vm1480 = vmor %vm1372, %vm1444
        %vm1481 = vmor %vm1373, %vm1445
        %vm1482 = vmor %vm1374, %vm1446
        %vm1483 = vmor %vm1375, %vm1447
        %v1484 = vsel %vm1448, 1, 0
        %v1485 = vsel %vm1449, 1, 0
        %v1486 = vsel %vm1450, 1, 0
        %v1487 = vsel %vm1451, 1, 0
        %v1488 = vsel %vm1452, 1, 0
        %v1489 = vsel %vm1453, 1, 0
        %v1490 = vsel %vm1454, 1, 0
        %v1491 = vsel %vm1455, 1, 0
        %v1492 = vsel %vm1456, 1, 0
        %v1493 = vsel %vm1457, 1, 0
        %v1494 = vsel %vm1458, 1, 0
        %v1495 = vsel %vm1459, 1, 0
        %v1496 = vsel %vm1460, 1, 0
        %v1497 = vsel %vm1461, 1, 0
        %v1498 = vsel %vm1462, 1, 0
        %v1499 = vsel %vm1463, 1, 0
        %v1500 = vsel %vm1464, 1, 0
        %v1501 = vsel %vm1465, 1, 0
        %v1502 = vsel %vm1466, 1, 0
        %v1503 = vsel %vm1467, 1, 0
        %v1504 = vsel %vm1468, 1, 0
        %v1505 = vsel %vm1469, 1, 0
        %v1506 = vsel %vm1470, 1, 0
        %v1507 = vsel %vm1471, 1, 0
        %v1508 = vsel %vm1472, 1, 0
        %v1509 = vsel %vm1473, 1, 0
        %v1510 = vsel %vm1474, 1, 0
        %v1511 = vsel %vm1475, 1, 0
        %v1512 = vsel %vm1476, 1, 0
        %v1513 = vsel %vm1477, 1, 0
        %v1514 = vsel %vm1478, 1, 0
        %v1515 = vsel %vm1479, 1, 0
        %v1516 = vsel %vm1480, 1, 0
        %v1517 = vsel %vm1481, 1, 0
        %v1518 = vsel %vm1482, 1, 0
        %v1519 = vsel %vm1483, 1, 0
        %vm1520 = vcmp.eq.s32.totalorder %v1484, 1
        %vm1521 = vcmp.eq.s32.totalorder %v1485, 1
        %vm1522 = vcmp.eq.s32.totalorder %v1486, 1
        %vm1523 = vcmp.eq.s32.totalorder %v1487, 1
        %vm1524 = vcmp.eq.s32.totalorder %v1488, 1
        %vm1525 = vcmp.eq.s32.totalorder %v1489, 1
        %vm1526 = vcmp.eq.s32.totalorder %v1490, 1
        %vm1527 = vcmp.eq.s32.totalorder %v1491, 1
        %vm1528 = vcmp.eq.s32.totalorder %v1492, 1
        %vm1529 = vcmp.eq.s32.totalorder %v1493, 1
        %vm1530 = vcmp.eq.s32.totalorder %v1494, 1
        %vm1531 = vcmp.eq.s32.totalorder %v1495, 1
        %vm1532 = vcmp.eq.s32.totalorder %v1496, 1
        %vm1533 = vcmp.eq.s32.totalorder %v1497, 1
        %vm1534 = vcmp.eq.s32.totalorder %v1498, 1
        %vm1535 = vcmp.eq.s32.totalorder %v1499, 1
        %vm1536 = vcmp.eq.s32.totalorder %v1500, 1
        %vm1537 = vcmp.eq.s32.totalorder %v1501, 1
        %vm1538 = vcmp.eq.s32.totalorder %v1502, 1
        %vm1539 = vcmp.eq.s32.totalorder %v1503, 1
        %vm1540 = vcmp.eq.s32.totalorder %v1504, 1
        %vm1541 = vcmp.eq.s32.totalorder %v1505, 1
        %vm1542 = vcmp.eq.s32.totalorder %v1506, 1
        %vm1543 = vcmp.eq.s32.totalorder %v1507, 1
        %vm1544 = vcmp.eq.s32.totalorder %v1508, 1
        %vm1545 = vcmp.eq.s32.totalorder %v1509, 1
        %vm1546 = vcmp.eq.s32.totalorder %v1510, 1
        %vm1547 = vcmp.eq.s32.totalorder %v1511, 1
        %vm1548 = vcmp.eq.s32.totalorder %v1512, 1
        %vm1549 = vcmp.eq.s32.totalorder %v1513, 1
        %vm1550 = vcmp.eq.s32.totalorder %v1514, 1
        %vm1551 = vcmp.eq.s32.totalorder %v1515, 1
        %vm1552 = vcmp.eq.s32.totalorder %v1516, 1
        %vm1553 = vcmp.eq.s32.totalorder %v1517, 1
        %vm1554 = vcmp.eq.s32.totalorder %v1518, 1
        %vm1555 = vcmp.eq.s32.totalorder %v1519, 1
        %v1556 = vsel %vm1520, 0.0, %v1227
        %v1557 = vsel %vm1521, 0.0, %v1228
        %v1558 = vsel %vm1522, 0.0, %v1229
        %v1559 = vsel %vm1523, 0.0, %v1230
        %v1560 = vsel %vm1524, 0.0, %v1231
        %v1561 = vsel %vm1525, 0.0, %v1232
        %v1562 = vsel %vm1526, 0.0, %v1233
        %v1563 = vsel %vm1527, 0.0, %v1234
        %v1564 = vsel %vm1528, 0.0, %v1235
        %v1565 = vsel %vm1529, 0.0, %v1236
        %v1566 = vsel %vm1530, 0.0, %v1237
        %v1567 = vsel %vm1531, 0.0, %v1238
        %v1568 = vsel %vm1532, 0.0, %v1239
        %v1569 = vsel %vm1533, 0.0, %v1240
        %v1570 = vsel %vm1534, 0.0, %v1241
        %v1571 = vsel %vm1535, 0.0, %v1242
        %v1572 = vsel %vm1536, 0.0, %v1243
        %v1573 = vsel %vm1537, 0.0, %v1244
        %v1574 = vsel %vm1538, 0.0, %v1245
        %v1575 = vsel %vm1539, 0.0, %v1246
        %v1576 = vsel %vm1540, 0.0, %v1247
        %v1577 = vsel %vm1541, 0.0, %v1248
        %v1578 = vsel %vm1542, 0.0, %v1249
        %v1579 = vsel %vm1543, 0.0, %v1250
        %v1580 = vsel %vm1544, 0.0, %v1251
        %v1581 = vsel %vm1545, 0.0, %v1252
        %v1582 = vsel %vm1546, 0.0, %v1253
        %v1583 = vsel %vm1547, 0.0, %v1254
        %v1584 = vsel %vm1548, 0.0, %v1255
        %v1585 = vsel %vm1549, 0.0, %v1256
        %v1586 = vsel %vm1550, 0.0, %v1257
        %v1587 = vsel %vm1551, 0.0, %v1258
        %v1588 = vsel %vm1552, 0.0, %v1259
        %v1589 = vsel %vm1553, 0.0, %v1260
        %v1590 = vsel %vm1554, 0.0, %v1261
        %v1591 = vsel %vm1555, 0.0, %v1262
        %vm1592 = vcmp.lt.s32.totalorder %v1264, 0
        %v1593 = vsub.s32 0, %v1264
        %v1594 = vsel %vm1592, %v1593, %v1264
        %v1595 = vshrl.u32 %v1594, 4
        %v1596 = vand.u32 %v1594, 15
        %v1597 = vsub.s32 0, %v1596
        %v1598 = vsel %vm1592, %v1597, %v1596
        %vm1599 = vcmp.lt.s32.totalorder %v1265, 0
        %v1600 = vsub.s32 0, %v1265
        %v1601 = vsel %vm1599, %v1600, %v1265
        %v1602 = vshrl.u32 %v1601, 4
        %v1603 = vand.u32 %v1601, 15
        %v1604 = vsub.s32 0, %v1603
        %v1605 = vsel %vm1599, %v1604, %v1603
        %vm1606 = vcmp.lt.s32.totalorder %v1266, 0
        %v1607 = vsub.s32 0, %v1266
        %v1608 = vsel %vm1606, %v1607, %v1266
        %v1609 = vshrl.u32 %v1608, 4
        %v1610 = vand.u32 %v1608, 15
        %v1611 = vsub.s32 0, %v1610
        %v1612 = vsel %vm1606, %v1611, %v1610
        %vm1613 = vcmp.lt.s32.totalorder %v1267, 0
        %v1614 = vsub.s32 0, %v1267
        %v1615 = vsel %vm1613, %v1614, %v1267
        %v1616 = vshrl.u32 %v1615, 4
        %v1617 = vand.u32 %v1615, 15
        %v1618 = vsub.s32 0, %v1617
        %v1619 = vsel %vm1613, %v1618, %v1617
        %vm1620 = vcmp.lt.s32.totalorder %v1268, 0
        %v1621 = vsub.s32 0, %v1268
        %v1622 = vsel %vm1620, %v1621, %v1268
        %v1623 = vshrl.u32 %v1622, 4
        %v1624 = vand.u32 %v1622, 15
        %v1625 = vsub.s32 0, %v1624
        %v1626 = vsel %vm1620, %v1625, %v1624
        %vm1627 = vcmp.lt.s32.totalorder %v1269, 0
        %v1628 = vsub.s32 0, %v1269
        %v1629 = vsel %vm1627, %v1628, %v1269
        %v1630 = vshrl.u32 %v1629, 4
        %v1631 = vand.u32 %v1629, 15
        %v1632 = vsub.s32 0, %v1631
        %v1633 = vsel %vm1627, %v1632, %v1631
        %vm1634 = vcmp.lt.s32.totalorder %v1270, 0
        %v1635 = vsub.s32 0, %v1270
        %v1636 = vsel %vm1634, %v1635, %v1270
        %v1637 = vshrl.u32 %v1636, 4
        %v1638 = vand.u32 %v1636, 15
        %v1639 = vsub.s32 0, %v1638
        %v1640 = vsel %vm1634, %v1639, %v1638
        %vm1641 = vcmp.lt.s32.totalorder %v1271, 0
        %v1642 = vsub.s32 0, %v1271
        %v1643 = vsel %vm1641, %v1642, %v1271
        %v1644 = vshrl.u32 %v1643, 4
        %v1645 = vand.u32 %v1643, 15
        %v1646 = vsub.s32 0, %v1645
        %v1647 = vsel %vm1641, %v1646, %v1645
        %vm1648 = vcmp.lt.s32.totalorder %v1272, 0
        %v1649 = vsub.s32 0, %v1272
        %v1650 = vsel %vm1648, %v1649, %v1272
        %v1651 = vshrl.u32 %v1650, 4
        %v1652 = vand.u32 %v1650, 15
        %v1653 = vsub.s32 0, %v1652
        %v1654 = vsel %vm1648, %v1653, %v1652
        %vm1655 = vcmp.lt.s32.totalorder %v1273, 0
        %v1656 = vsub.s32 0, %v1273
        %v1657 = vsel %vm1655, %v1656, %v1273
        %v1658 = vshrl.u32 %v1657, 4
        %v1659 = vand.u32 %v1657, 15
        %v1660 = vsub.s32 0, %v1659
        %v1661 = vsel %vm1655, %v1660, %v1659
        %vm1662 = vcmp.lt.s32.totalorder %v1274, 0
        %v1663 = vsub.s32 0, %v1274
        %v1664 = vsel %vm1662, %v1663, %v1274
        %v1665 = vshrl.u32 %v1664, 4
        %v1666 = vand.u32 %v1664, 15
        %v1667 = vsub.s32 0, %v1666
        %v1668 = vsel %vm1662, %v1667, %v1666
        %vm1669 = vcmp.lt.s32.totalorder %v1275, 0
        %v1670 = vsub.s32 0, %v1275
        %v1671 = vsel %vm1669, %v1670, %v1275
        %v1672 = vshrl.u32 %v1671, 4
        %v1673 = vand.u32 %v1671, 15
        %v1674 = vsub.s32 0, %v1673
        %v1675 = vsel %vm1669, %v1674, %v1673
        %vm1676 = vcmp.lt.s32.totalorder %v1276, 0
        %v1677 = vsub.s32 0, %v1276
        %v1678 = vsel %vm1676, %v1677, %v1276
        %v1679 = vshrl.u32 %v1678, 4
        %v1680 = vand.u32 %v1678, 15
        %v1681 = vsub.s32 0, %v1680
        %v1682 = vsel %vm1676, %v1681, %v1680
        %vm1683 = vcmp.lt.s32.totalorder %v1277, 0
        %v1684 = vsub.s32 0, %v1277
        %v1685 = vsel %vm1683, %v1684, %v1277
        %v1686 = vshrl.u32 %v1685, 4
        %v1687 = vand.u32 %v1685, 15
        %v1688 = vsub.s32 0, %v1687
        %v1689 = vsel %vm1683, %v1688, %v1687
        %vm1690 = vcmp.lt.s32.totalorder %v1278, 0
        %v1691 = vsub.s32 0, %v1278
        %v1692 = vsel %vm1690, %v1691, %v1278
        %v1693 = vshrl.u32 %v1692, 4
        %v1694 = vand.u32 %v1692, 15
        %v1695 = vsub.s32 0, %v1694
        %v1696 = vsel %vm1690, %v1695, %v1694
        %vm1697 = vcmp.lt.s32.totalorder %v1279, 0
        %v1698 = vsub.s32 0, %v1279
        %v1699 = vsel %vm1697, %v1698, %v1279
        %v1700 = vshrl.u32 %v1699, 4
        %v1701 = vand.u32 %v1699, 15
        %v1702 = vsub.s32 0, %v1701
        %v1703 = vsel %vm1697, %v1702, %v1701
        %vm1704 = vcmp.lt.s32.totalorder %v1280, 0
        %v1705 = vsub.s32 0, %v1280
        %v1706 = vsel %vm1704, %v1705, %v1280
        %v1707 = vshrl.u32 %v1706, 4
        %v1708 = vand.u32 %v1706, 15
        %v1709 = vsub.s32 0, %v1708
        %v1710 = vsel %vm1704, %v1709, %v1708
        %vm1711 = vcmp.lt.s32.totalorder %v1281, 0
        %v1712 = vsub.s32 0, %v1281
        %v1713 = vsel %vm1711, %v1712, %v1281
        %v1714 = vshrl.u32 %v1713, 4
        %v1715 = vand.u32 %v1713, 15
        %v1716 = vsub.s32 0, %v1715
        %v1717 = vsel %vm1711, %v1716, %v1715
        %vm1718 = vcmp.lt.s32.totalorder %v1282, 0
        %v1719 = vsub.s32 0, %v1282
        %v1720 = vsel %vm1718, %v1719, %v1282
        %v1721 = vshrl.u32 %v1720, 4
        %v1722 = vand.u32 %v1720, 15
        %v1723 = vsub.s32 0, %v1722
        %v1724 = vsel %vm1718, %v1723, %v1722
        %vm1725 = vcmp.lt.s32.totalorder %v1283, 0
        %v1726 = vsub.s32 0, %v1283
        %v1727 = vsel %vm1725, %v1726, %v1283
        %v1728 = vshrl.u32 %v1727, 4
        %v1729 = vand.u32 %v1727, 15
        %v1730 = vsub.s32 0, %v1729
        %v1731 = vsel %vm1725, %v1730, %v1729
        %vm1732 = vcmp.lt.s32.totalorder %v1284, 0
        %v1733 = vsub.s32 0, %v1284
        %v1734 = vsel %vm1732, %v1733, %v1284
        %v1735 = vshrl.u32 %v1734, 4
        %v1736 = vand.u32 %v1734, 15
        %v1737 = vsub.s32 0, %v1736
        %v1738 = vsel %vm1732, %v1737, %v1736
        %vm1739 = vcmp.lt.s32.totalorder %v1285, 0
        %v1740 = vsub.s32 0, %v1285
        %v1741 = vsel %vm1739, %v1740, %v1285
        %v1742 = vshrl.u32 %v1741, 4
        %v1743 = vand.u32 %v1741, 15
        %v1744 = vsub.s32 0, %v1743
        %v1745 = vsel %vm1739, %v1744, %v1743
        %vm1746 = vcmp.lt.s32.totalorder %v1286, 0
        %v1747 = vsub.s32 0, %v1286
        %v1748 = vsel %vm1746, %v1747, %v1286
        %v1749 = vshrl.u32 %v1748, 4
        %v1750 = vand.u32 %v1748, 15
        %v1751 = vsub.s32 0, %v1750
        %v1752 = vsel %vm1746, %v1751, %v1750
        %vm1753 = vcmp.lt.s32.totalorder %v1287, 0
        %v1754 = vsub.s32 0, %v1287
        %v1755 = vsel %vm1753, %v1754, %v1287
        %v1756 = vshrl.u32 %v1755, 4
        %v1757 = vand.u32 %v1755, 15
        %v1758 = vsub.s32 0, %v1757
        %v1759 = vsel %vm1753, %v1758, %v1757
        %vm1760 = vcmp.lt.s32.totalorder %v1288, 0
        %v1761 = vsub.s32 0, %v1288
        %v1762 = vsel %vm1760, %v1761, %v1288
        %v1763 = vshrl.u32 %v1762, 4
        %v1764 = vand.u32 %v1762, 15
        %v1765 = vsub.s32 0, %v1764
        %v1766 = vsel %vm1760, %v1765, %v1764
        %vm1767 = vcmp.lt.s32.totalorder %v1289, 0
        %v1768 = vsub.s32 0, %v1289
        %v1769 = vsel %vm1767, %v1768, %v1289
        %v1770 = vshrl.u32 %v1769, 4
        %v1771 = vand.u32 %v1769, 15
        %v1772 = vsub.s32 0, %v1771
        %v1773 = vsel %vm1767, %v1772, %v1771
        %vm1774 = vcmp.lt.s32.totalorder %v1290, 0
        %v1775 = vsub.s32 0, %v1290
        %v1776 = vsel %vm1774, %v1775, %v1290
        %v1777 = vshrl.u32 %v1776, 4
        %v1778 = vand.u32 %v1776, 15
        %v1779 = vsub.s32 0, %v1778
        %v1780 = vsel %vm1774, %v1779, %v1778
        %vm1781 = vcmp.lt.s32.totalorder %v1291, 0
        %v1782 = vsub.s32 0, %v1291
        %v1783 = vsel %vm1781, %v1782, %v1291
        %v1784 = vshrl.u32 %v1783, 4
        %v1785 = vand.u32 %v1783, 15
        %v1786 = vsub.s32 0, %v1785
        %v1787 = vsel %vm1781, %v1786, %v1785
        %vm1788 = vcmp.lt.s32.totalorder %v1292, 0
        %v1789 = vsub.s32 0, %v1292
        %v1790 = vsel %vm1788, %v1789, %v1292
        %v1791 = vshrl.u32 %v1790, 4
        %v1792 = vand.u32 %v1790, 15
        %v1793 = vsub.s32 0, %v1792
        %v1794 = vsel %vm1788, %v1793, %v1792
        %vm1795 = vcmp.lt.s32.totalorder %v1293, 0
        %v1796 = vsub.s32 0, %v1293
        %v1797 = vsel %vm1795, %v1796, %v1293
        %v1798 = vshrl.u32 %v1797, 4
        %v1799 = vand.u32 %v1797, 15
        %v1800 = vsub.s32 0, %v1799
        %v1801 = vsel %vm1795, %v1800, %v1799
        %vm1802 = vcmp.lt.s32.totalorder %v1294, 0
        %v1803 = vsub.s32 0, %v1294
        %v1804 = vsel %vm1802, %v1803, %v1294
        %v1805 = vshrl.u32 %v1804, 4
        %v1806 = vand.u32 %v1804, 15
        %v1807 = vsub.s32 0, %v1806
        %v1808 = vsel %vm1802, %v1807, %v1806
        %vm1809 = vcmp.lt.s32.totalorder %v1295, 0
        %v1810 = vsub.s32 0, %v1295
        %v1811 = vsel %vm1809, %v1810, %v1295
        %v1812 = vshrl.u32 %v1811, 4
        %v1813 = vand.u32 %v1811, 15
        %v1814 = vsub.s32 0, %v1813
        %v1815 = vsel %vm1809, %v1814, %v1813
        %vm1816 = vcmp.lt.s32.totalorder %v1296, 0
        %v1817 = vsub.s32 0, %v1296
        %v1818 = vsel %vm1816, %v1817, %v1296
        %v1819 = vshrl.u32 %v1818, 4
        %v1820 = vand.u32 %v1818, 15
        %v1821 = vsub.s32 0, %v1820
        %v1822 = vsel %vm1816, %v1821, %v1820
        %vm1823 = vcmp.lt.s32.totalorder %v1297, 0
        %v1824 = vsub.s32 0, %v1297
        %v1825 = vsel %vm1823, %v1824, %v1297
        %v1826 = vshrl.u32 %v1825, 4
        %v1827 = vand.u32 %v1825, 15
        %v1828 = vsub.s32 0, %v1827
        %v1829 = vsel %vm1823, %v1828, %v1827
        %vm1830 = vcmp.lt.s32.totalorder %v1298, 0
        %v1831 = vsub.s32 0, %v1298
        %v1832 = vsel %vm1830, %v1831, %v1298
        %v1833 = vshrl.u32 %v1832, 4
        %v1834 = vand.u32 %v1832, 15
        %v1835 = vsub.s32 0, %v1834
        %v1836 = vsel %vm1830, %v1835, %v1834
        %vm1837 = vcmp.lt.s32.totalorder %v1299, 0
        %v1838 = vsub.s32 0, %v1299
        %v1839 = vsel %vm1837, %v1838, %v1299
        %v1840 = vshrl.u32 %v1839, 4
        %v1841 = vand.u32 %v1839, 15
        %v1842 = vsub.s32 0, %v1841
        %v1843 = vsel %vm1837, %v1842, %v1841
        %vm1844 = vcmp.ne.s32.totalorder %v1598, 0
        %vm1845 = vcmp.ne.s32.totalorder %v1605, 0
        %vm1846 = vcmp.ne.s32.totalorder %v1612, 0
        %vm1847 = vcmp.ne.s32.totalorder %v1619, 0
        %vm1848 = vcmp.ne.s32.totalorder %v1626, 0
        %vm1849 = vcmp.ne.s32.totalorder %v1633, 0
        %vm1850 = vcmp.ne.s32.totalorder %v1640, 0
        %vm1851 = vcmp.ne.s32.totalorder %v1647, 0
        %vm1852 = vcmp.ne.s32.totalorder %v1654, 0
        %vm1853 = vcmp.ne.s32.totalorder %v1661, 0
        %vm1854 = vcmp.ne.s32.totalorder %v1668, 0
        %vm1855 = vcmp.ne.s32.totalorder %v1675, 0
        %vm1856 = vcmp.ne.s32.totalorder %v1682, 0
        %vm1857 = vcmp.ne.s32.totalorder %v1689, 0
        %vm1858 = vcmp.ne.s32.totalorder %v1696, 0
        %vm1859 = vcmp.ne.s32.totalorder %v1703, 0
        %vm1860 = vcmp.ne.s32.totalorder %v1710, 0
        %vm1861 = vcmp.ne.s32.totalorder %v1717, 0
        %vm1862 = vcmp.ne.s32.totalorder %v1724, 0
        %vm1863 = vcmp.ne.s32.totalorder %v1731, 0
        %vm1864 = vcmp.ne.s32.totalorder %v1738, 0
        %vm1865 = vcmp.ne.s32.totalorder %v1745, 0
        %vm1866 = vcmp.ne.s32.totalorder %v1752, 0
        %vm1867 = vcmp.ne.s32.totalorder %v1759, 0
        %vm1868 = vcmp.ne.s32.totalorder %v1766, 0
        %vm1869 = vcmp.ne.s32.totalorder %v1773, 0
        %vm1870 = vcmp.ne.s32.totalorder %v1780, 0
        %vm1871 = vcmp.ne.s32.totalorder %v1787, 0
        %vm1872 = vcmp.ne.s32.totalorder %v1794, 0
        %vm1873 = vcmp.ne.s32.totalorder %v1801, 0
        %vm1874 = vcmp.ne.s32.totalorder %v1808, 0
        %vm1875 = vcmp.ne.s32.totalorder %v1815, 0
        %vm1876 = vcmp.ne.s32.totalorder %v1822, 0
        %vm1877 = vcmp.ne.s32.totalorder %v1829, 0
        %vm1878 = vcmp.ne.s32.totalorder %v1836, 0
        %vm1879 = vcmp.ne.s32.totalorder %v1843, 0
        %vm1880 = vcmp.lt.s32.totalorder %v1598, 0
        %vm1881 = vcmp.lt.s32.totalorder %v1605, 0
        %vm1882 = vcmp.lt.s32.totalorder %v1612, 0
        %vm1883 = vcmp.lt.s32.totalorder %v1619, 0
        %vm1884 = vcmp.lt.s32.totalorder %v1626, 0
        %vm1885 = vcmp.lt.s32.totalorder %v1633, 0
        %vm1886 = vcmp.lt.s32.totalorder %v1640, 0
        %vm1887 = vcmp.lt.s32.totalorder %v1647, 0
        %vm1888 = vcmp.lt.s32.totalorder %v1654, 0
        %vm1889 = vcmp.lt.s32.totalorder %v1661, 0
        %vm1890 = vcmp.lt.s32.totalorder %v1668, 0
        %vm1891 = vcmp.lt.s32.totalorder %v1675, 0
        %vm1892 = vcmp.lt.s32.totalorder %v1682, 0
        %vm1893 = vcmp.lt.s32.totalorder %v1689, 0
        %vm1894 = vcmp.lt.s32.totalorder %v1696, 0
        %vm1895 = vcmp.lt.s32.totalorder %v1703, 0
        %vm1896 = vcmp.lt.s32.totalorder %v1710, 0
        %vm1897 = vcmp.lt.s32.totalorder %v1717, 0
        %vm1898 = vcmp.lt.s32.totalorder %v1724, 0
        %vm1899 = vcmp.lt.s32.totalorder %v1731, 0
        %vm1900 = vcmp.lt.s32.totalorder %v1738, 0
        %vm1901 = vcmp.lt.s32.totalorder %v1745, 0
        %vm1902 = vcmp.lt.s32.totalorder %v1752, 0
        %vm1903 = vcmp.lt.s32.totalorder %v1759, 0
        %vm1904 = vcmp.lt.s32.totalorder %v1766, 0
        %vm1905 = vcmp.lt.s32.totalorder %v1773, 0
        %vm1906 = vcmp.lt.s32.totalorder %v1780, 0
        %vm1907 = vcmp.lt.s32.totalorder %v1787, 0
        %vm1908 = vcmp.lt.s32.totalorder %v1794, 0
        %vm1909 = vcmp.lt.s32.totalorder %v1801, 0
        %vm1910 = vcmp.lt.s32.totalorder %v1808, 0
        %vm1911 = vcmp.lt.s32.totalorder %v1815, 0
        %vm1912 = vcmp.lt.s32.totalorder %v1822, 0
        %vm1913 = vcmp.lt.s32.totalorder %v1829, 0
        %vm1914 = vcmp.lt.s32.totalorder %v1836, 0
        %vm1915 = vcmp.lt.s32.totalorder %v1843, 0
        %vm1916 = vmand %vm1880, %vm1844
        %vm1917 = vmand %vm1881, %vm1845
        %vm1918 = vmand %vm1882, %vm1846
        %vm1919 = vmand %vm1883, %vm1847
        %vm1920 = vmand %vm1884, %vm1848
        %vm1921 = vmand %vm1885, %vm1849
        %vm1922 = vmand %vm1886, %vm1850
        %vm1923 = vmand %vm1887, %vm1851
        %vm1924 = vmand %vm1888, %vm1852
        %vm1925 = vmand %vm1889, %vm1853
        %vm1926 = vmand %vm1890, %vm1854
        %vm1927 = vmand %vm1891, %vm1855
        %vm1928 = vmand %vm1892, %vm1856
        %vm1929 = vmand %vm1893, %vm1857
        %vm1930 = vmand %vm1894, %vm1858
        %vm1931 = vmand %vm1895, %vm1859
        %vm1932 = vmand %vm1896, %vm1860
        %vm1933 = vmand %vm1897, %vm1861
        %vm1934 = vmand %vm1898, %vm1862
        %vm1935 = vmand %vm1899, %vm1863
        %vm1936 = vmand %vm1900, %vm1864
        %vm1937 = vmand %vm1901, %vm1865
        %vm1938 = vmand %vm1902, %vm1866
        %vm1939 = vmand %vm1903, %vm1867
        %vm1940 = vmand %vm1904, %vm1868
        %vm1941 = vmand %vm1905, %vm1869
        %vm1942 = vmand %vm1906, %vm1870
        %vm1943 = vmand %vm1907, %vm1871
        %vm1944 = vmand %vm1908, %vm1872
        %vm1945 = vmand %vm1909, %vm1873
        %vm1946 = vmand %vm1910, %vm1874
        %vm1947 = vmand %vm1911, %vm1875
        %vm1948 = vmand %vm1912, %vm1876
        %vm1949 = vmand %vm1913, %vm1877
        %vm1950 = vmand %vm1914, %vm1878
        %vm1951 = vmand %vm1915, %vm1879
        %v1952 = vadd.s32 %v1598, 16
        %v1953 = vadd.s32 %v1605, 16
        %v1954 = vadd.s32 %v1612, 16
        %v1955 = vadd.s32 %v1619, 16
        %v1956 = vadd.s32 %v1626, 16
        %v1957 = vadd.s32 %v1633, 16
        %v1958 = vadd.s32 %v1640, 16
        %v1959 = vadd.s32 %v1647, 16
        %v1960 = vadd.s32 %v1654, 16
        %v1961 = vadd.s32 %v1661, 16
        %v1962 = vadd.s32 %v1668, 16
        %v1963 = vadd.s32 %v1675, 16
        %v1964 = vadd.s32 %v1682, 16
        %v1965 = vadd.s32 %v1689, 16
        %v1966 = vadd.s32 %v1696, 16
        %v1967 = vadd.s32 %v1703, 16
        %v1968 = vadd.s32 %v1710, 16
        %v1969 = vadd.s32 %v1717, 16
        %v1970 = vadd.s32 %v1724, 16
        %v1971 = vadd.s32 %v1731, 16
        %v1972 = vadd.s32 %v1738, 16
        %v1973 = vadd.s32 %v1745, 16
        %v1974 = vadd.s32 %v1752, 16
        %v1975 = vadd.s32 %v1759, 16
        %v1976 = vadd.s32 %v1766, 16
        %v1977 = vadd.s32 %v1773, 16
        %v1978 = vadd.s32 %v1780, 16
        %v1979 = vadd.s32 %v1787, 16
        %v1980 = vadd.s32 %v1794, 16
        %v1981 = vadd.s32 %v1801, 16
        %v1982 = vadd.s32 %v1808, 16
        %v1983 = vadd.s32 %v1815, 16
        %v1984 = vadd.s32 %v1822, 16
        %v1985 = vadd.s32 %v1829, 16
        %v1986 = vadd.s32 %v1836, 16
        %v1987 = vadd.s32 %v1843, 16
        %v1988 = vsel %vm1916, %v1952, %v1598
        %v1989 = vsel %vm1917, %v1953, %v1605
        %v1990 = vsel %vm1918, %v1954, %v1612
        %v1991 = vsel %vm1919, %v1955, %v1619
        %v1992 = vsel %vm1920, %v1956, %v1626
        %v1993 = vsel %vm1921, %v1957, %v1633
        %v1994 = vsel %vm1922, %v1958, %v1640
        %v1995 = vsel %vm1923, %v1959, %v1647
        %v1996 = vsel %vm1924, %v1960, %v1654
        %v1997 = vsel %vm1925, %v1961, %v1661
        %v1998 = vsel %vm1926, %v1962, %v1668
        %v1999 = vsel %vm1927, %v1963, %v1675
        %v2000 = vsel %vm1928, %v1964, %v1682
        %v2001 = vsel %vm1929, %v1965, %v1689
        %v2002 = vsel %vm1930, %v1966, %v1696
        %v2003 = vsel %vm1931, %v1967, %v1703
        %v2004 = vsel %vm1932, %v1968, %v1710
        %v2005 = vsel %vm1933, %v1969, %v1717
        %v2006 = vsel %vm1934, %v1970, %v1724
        %v2007 = vsel %vm1935, %v1971, %v1731
        %v2008 = vsel %vm1936, %v1972, %v1738
        %v2009 = vsel %vm1937, %v1973, %v1745
        %v2010 = vsel %vm1938, %v1974, %v1752
        %v2011 = vsel %vm1939, %v1975, %v1759
        %v2012 = vsel %vm1940, %v1976, %v1766
        %v2013 = vsel %vm1941, %v1977, %v1773
        %v2014 = vsel %vm1942, %v1978, %v1780
        %v2015 = vsel %vm1943, %v1979, %v1787
        %v2016 = vsel %vm1944, %v1980, %v1794
        %v2017 = vsel %vm1945, %v1981, %v1801
        %v2018 = vsel %vm1946, %v1982, %v1808
        %v2019 = vsel %vm1947, %v1983, %v1815
        %v2020 = vsel %vm1948, %v1984, %v1822
        %v2021 = vsel %vm1949, %v1985, %v1829
        %v2022 = vsel %vm1950, %v1986, %v1836
        %v2023 = vsel %vm1951, %v1987, %v1843
        %vm2024 = vcmp.eq.s32.totalorder %v1988, 0
        %vm2025 = vcmp.eq.s32.totalorder %v1989, 0
        %vm2026 = vcmp.eq.s32.totalorder %v1990, 0
        %vm2027 = vcmp.eq.s32.totalorder %v1991, 0
        %vm2028 = vcmp.eq.s32.totalorder %v1992, 0
        %vm2029 = vcmp.eq.s32.totalorder %v1993, 0
        %vm2030 = vcmp.eq.s32.totalorder %v1994, 0
        %vm2031 = vcmp.eq.s32.totalorder %v1995, 0
        %vm2032 = vcmp.eq.s32.totalorder %v1996, 0
        %vm2033 = vcmp.eq.s32.totalorder %v1997, 0
        %vm2034 = vcmp.eq.s32.totalorder %v1998, 0
        %vm2035 = vcmp.eq.s32.totalorder %v1999, 0
        %vm2036 = vcmp.eq.s32.totalorder %v2000, 0
        %vm2037 = vcmp.eq.s32.totalorder %v2001, 0
        %vm2038 = vcmp.eq.s32.totalorder %v2002, 0
        %vm2039 = vcmp.eq.s32.totalorder %v2003, 0
        %vm2040 = vcmp.eq.s32.totalorder %v2004, 0
        %vm2041 = vcmp.eq.s32.totalorder %v2005, 0
        %vm2042 = vcmp.eq.s32.totalorder %v2006, 0
        %vm2043 = vcmp.eq.s32.totalorder %v2007, 0
        %vm2044 = vcmp.eq.s32.totalorder %v2008, 0
        %vm2045 = vcmp.eq.s32.totalorder %v2009, 0
        %vm2046 = vcmp.eq.s32.totalorder %v2010, 0
        %vm2047 = vcmp.eq.s32.totalorder %v2011, 0
        %vm2048 = vcmp.eq.s32.totalorder %v2012, 0
        %vm2049 = vcmp.eq.s32.totalorder %v2013, 0
        %vm2050 = vcmp.eq.s32.totalorder %v2014, 0
        %vm2051 = vcmp.eq.s32.totalorder %v2015, 0
        %vm2052 = vcmp.eq.s32.totalorder %v2016, 0
        %vm2053 = vcmp.eq.s32.totalorder %v2017, 0
        %vm2054 = vcmp.eq.s32.totalorder %v2018, 0
        %vm2055 = vcmp.eq.s32.totalorder %v2019, 0
        %vm2056 = vcmp.eq.s32.totalorder %v2020, 0
        %vm2057 = vcmp.eq.s32.totalorder %v2021, 0
        %vm2058 = vcmp.eq.s32.totalorder %v2022, 0
        %vm2059 = vcmp.eq.s32.totalorder %v2023, 0
        %vm2096 = vcmask 1040384
        %v2097 = vrot.slane %v1556, 7
        %v2098 = vrot.slane %v1557, 7
        %v2099 = vsel %vm2096, %v2097, %v2098
        %v2100 = vrot.slane %v1558, 7
        %v2101 = vsel %vm2096, %v2098, %v2100
        %v2102 = vrot.slane %v1559, 7
        %v2103 = vsel %vm2096, %v2100, %v2102
        %v2104 = vrot.slane %v1560, 7
        %v2105 = vsel %vm2096, %v2102, %v2104
        %v2106 = vrot.slane %v1561, 7
        %v2107 = vsel %vm2096, %v2104, %v2106
        %v2108 = vrot.slane %v1562, 7
        %v2109 = vsel %vm2096, %v2106, %v2108
        %v2110 = vrot.slane %v1563, 7
        %v2111 = vsel %vm2096, %v2108, %v2110
        %v2112 = vrot.slane %v1564, 7
        %v2113 = vsel %vm2096, %v2110, %v2112
        %v2114 = vrot.slane %v1565, 7
        %v2115 = vsel %vm2096, %v2112, %v2114
        %v2116 = vrot.slane %v1566, 7
        %v2117 = vsel %vm2096, %v2114, %v2116
        %v2118 = vrot.slane %v1567, 7
        %v2119 = vsel %vm2096, %v2116, %v2118
        %v2120 = vrot.slane %v1568, 7
        %v2121 = vsel %vm2096, %v2118, %v2120
        %v2122 = vrot.slane %v1569, 7
        %v2123 = vsel %vm2096, %v2120, %v2122
        %v2124 = vrot.slane %v1570, 7
        %v2125 = vsel %vm2096, %v2122, %v2124
        %v2126 = vrot.slane %v1571, 7
        %v2127 = vsel %vm2096, %v2124, %v2126
        %v2128 = vrot.slane %v1572, 7
        %v2129 = vsel %vm2096, %v2126, %v2128
        %v2130 = vrot.slane %v1573, 7
        %v2131 = vsel %vm2096, %v2128, %v2130
        %v2132 = vrot.slane %v1574, 7
        %v2133 = vsel %vm2096, %v2130, %v2132
        %v2134 = vrot.slane %v1575, 7
        %v2135 = vsel %vm2096, %v2132, %v2134
        %v2136 = vrot.slane %v1576, 7
        %v2137 = vsel %vm2096, %v2134, %v2136
        %v2138 = vrot.slane %v1577, 7
        %v2139 = vsel %vm2096, %v2136, %v2138
        %v2140 = vrot.slane %v1578, 7
        %v2141 = vsel %vm2096, %v2138, %v2140
        %v2142 = vrot.slane %v1579, 7
        %v2143 = vsel %vm2096, %v2140, %v2142
        %v2144 = vrot.slane %v1580, 7
        %v2145 = vsel %vm2096, %v2142, %v2144
        %v2146 = vrot.slane %v1581, 7
        %v2147 = vsel %vm2096, %v2144, %v2146
        %v2148 = vrot.slane %v1582, 7
        %v2149 = vsel %vm2096, %v2146, %v2148
        %v2150 = vrot.slane %v1583, 7
        %v2151 = vsel %vm2096, %v2148, %v2150
        %v2152 = vrot.slane %v1584, 7
        %v2153 = vsel %vm2096, %v2150, %v2152
        %v2154 = vrot.slane %v1585, 7
        %v2155 = vsel %vm2096, %v2152, %v2154
        %v2156 = vrot.slane %v1586, 7
        %v2157 = vsel %vm2096, %v2154, %v2156
        %v2158 = vrot.slane %v1587, 7
        %v2159 = vsel %vm2096, %v2156, %v2158
        %v2160 = vrot.slane %v1588, 7
        %v2161 = vsel %vm2096, %v2158, %v2160
        %v2162 = vrot.slane %v1589, 7
        %v2163 = vsel %vm2096, %v2160, %v2162
        %v2164 = vrot.slane %v1590, 7
        %v2165 = vsel %vm2096, %v2162, %v2164
        %v2166 = vrot.slane %v1591, 7
        %v2167 = vsel %vm2096, %v2164, %v2166
        %v2204 = vsel %vm2096, 0.0, %v2097
        %v2205 = vsel %vm2024, 1, 0
        %v2206 = vsel %vm2025, 1, 0
        %v2207 = vsel %vm2026, 1, 0
        %v2208 = vsel %vm2027, 1, 0
        %v2209 = vsel %vm2028, 1, 0
        %v2210 = vsel %vm2029, 1, 0
        %v2211 = vsel %vm2030, 1, 0
        %v2212 = vsel %vm2031, 1, 0
        %v2213 = vsel %vm2032, 1, 0
        %v2214 = vsel %vm2033, 1, 0
        %v2215 = vsel %vm2034, 1, 0
        %v2216 = vsel %vm2035, 1, 0
        %v2217 = vsel %vm2036, 1, 0
        %v2218 = vsel %vm2037, 1, 0
        %v2219 = vsel %vm2038, 1, 0
        %v2220 = vsel %vm2039, 1, 0
        %v2221 = vsel %vm2040, 1, 0
        %v2222 = vsel %vm2041, 1, 0
        %v2223 = vsel %vm2042, 1, 0
        %v2224 = vsel %vm2043, 1, 0
        %v2225 = vsel %vm2044, 1, 0
        %v2226 = vsel %vm2045, 1, 0
        %v2227 = vsel %vm2046, 1, 0
        %v2228 = vsel %vm2047, 1, 0
        %v2229 = vsel %vm2048, 1, 0
        %v2230 = vsel %vm2049, 1, 0
        %v2231 = vsel %vm2050, 1, 0
        %v2232 = vsel %vm2051, 1, 0
        %v2233 = vsel %vm2052, 1, 0
        %v2234 = vsel %vm2053, 1, 0
        %v2235 = vsel %vm2054, 1, 0
        %v2236 = vsel %vm2055, 1, 0
        %v2237 = vsel %vm2056, 1, 0
        %v2238 = vsel %vm2057, 1, 0
        %v2239 = vsel %vm2058, 1, 0
        %v2240 = vsel %vm2059, 1, 0
        %vm2241 = vcmp.eq.s32.totalorder %v2205, 1
        %vm2242 = vcmp.eq.s32.totalorder %v2206, 1
        %vm2243 = vcmp.eq.s32.totalorder %v2207, 1
        %vm2244 = vcmp.eq.s32.totalorder %v2208, 1
        %vm2245 = vcmp.eq.s32.totalorder %v2209, 1
        %vm2246 = vcmp.eq.s32.totalorder %v2210, 1
        %vm2247 = vcmp.eq.s32.totalorder %v2211, 1
        %vm2248 = vcmp.eq.s32.totalorder %v2212, 1
        %vm2249 = vcmp.eq.s32.totalorder %v2213, 1
        %vm2250 = vcmp.eq.s32.totalorder %v2214, 1
        %vm2251 = vcmp.eq.s32.totalorder %v2215, 1
        %vm2252 = vcmp.eq.s32.totalorder %v2216, 1
        %vm2253 = vcmp.eq.s32.totalorder %v2217, 1
        %vm2254 = vcmp.eq.s32.totalorder %v2218, 1
        %vm2255 = vcmp.eq.s32.totalorder %v2219, 1
        %vm2256 = vcmp.eq.s32.totalorder %v2220, 1
        %vm2257 = vcmp.eq.s32.totalorder %v2221, 1
        %vm2258 = vcmp.eq.s32.totalorder %v2222, 1
        %vm2259 = vcmp.eq.s32.totalorder %v2223, 1
        %vm2260 = vcmp.eq.s32.totalorder %v2224, 1
        %vm2261 = vcmp.eq.s32.totalorder %v2225, 1
        %vm2262 = vcmp.eq.s32.totalorder %v2226, 1
        %vm2263 = vcmp.eq.s32.totalorder %v2227, 1
        %vm2264 = vcmp.eq.s32.totalorder %v2228, 1
        %vm2265 = vcmp.eq.s32.totalorder %v2229, 1
        %vm2266 = vcmp.eq.s32.totalorder %v2230, 1
        %vm2267 = vcmp.eq.s32.totalorder %v2231, 1
        %vm2268 = vcmp.eq.s32.totalorder %v2232, 1
        %vm2269 = vcmp.eq.s32.totalorder %v2233, 1
        %vm2270 = vcmp.eq.s32.totalorder %v2234, 1
        %vm2271 = vcmp.eq.s32.totalorder %v2235, 1
        %vm2272 = vcmp.eq.s32.totalorder %v2236, 1
        %vm2273 = vcmp.eq.s32.totalorder %v2237, 1
        %vm2274 = vcmp.eq.s32.totalorder %v2238, 1
        %vm2275 = vcmp.eq.s32.totalorder %v2239, 1
        %vm2276 = vcmp.eq.s32.totalorder %v2240, 1
        %v2277 = vsel %vm2241, 0.0, %v2204
        %v2278 = vsel %vm2242, 0.0, %v2099
        %v2279 = vsel %vm2243, 0.0, %v2101
        %v2280 = vsel %vm2244, 0.0, %v2103
        %v2281 = vsel %vm2245, 0.0, %v2105
        %v2282 = vsel %vm2246, 0.0, %v2107
        %v2283 = vsel %vm2247, 0.0, %v2109
        %v2284 = vsel %vm2248, 0.0, %v2111
        %v2285 = vsel %vm2249, 0.0, %v2113
        %v2286 = vsel %vm2250, 0.0, %v2115
        %v2287 = vsel %vm2251, 0.0, %v2117
        %v2288 = vsel %vm2252, 0.0, %v2119
        %v2289 = vsel %vm2253, 0.0, %v2121
        %v2290 = vsel %vm2254, 0.0, %v2123
        %v2291 = vsel %vm2255, 0.0, %v2125
        %v2292 = vsel %vm2256, 0.0, %v2127
        %v2293 = vsel %vm2257, 0.0, %v2129
        %v2294 = vsel %vm2258, 0.0, %v2131
        %v2295 = vsel %vm2259, 0.0, %v2133
        %v2296 = vsel %vm2260, 0.0, %v2135
        %v2297 = vsel %vm2261, 0.0, %v2137
        %v2298 = vsel %vm2262, 0.0, %v2139
        %v2299 = vsel %vm2263, 0.0, %v2141
        %v2300 = vsel %vm2264, 0.0, %v2143
        %v2301 = vsel %vm2265, 0.0, %v2145
        %v2302 = vsel %vm2266, 0.0, %v2147
        %v2303 = vsel %vm2267, 0.0, %v2149
        %v2304 = vsel %vm2268, 0.0, %v2151
        %v2305 = vsel %vm2269, 0.0, %v2153
        %v2306 = vsel %vm2270, 0.0, %v2155
        %v2307 = vsel %vm2271, 0.0, %v2157
        %v2308 = vsel %vm2272, 0.0, %v2159
        %v2309 = vsel %vm2273, 0.0, %v2161
        %v2310 = vsel %vm2274, 0.0, %v2163
        %v2311 = vsel %vm2275, 0.0, %v2165
        %v2312 = vsel %vm2276, 0.0, %v2167
        %vm2313 = vcmp.eq.s32.totalorder %v1988, 15
        %vm2314 = vcmp.eq.s32.totalorder %v1989, 15
        %vm2315 = vcmp.eq.s32.totalorder %v1990, 15
        %vm2316 = vcmp.eq.s32.totalorder %v1991, 15
        %vm2317 = vcmp.eq.s32.totalorder %v1992, 15
        %vm2318 = vcmp.eq.s32.totalorder %v1993, 15
        %vm2319 = vcmp.eq.s32.totalorder %v1994, 15
        %vm2320 = vcmp.eq.s32.totalorder %v1995, 15
        %vm2321 = vcmp.eq.s32.totalorder %v1996, 15
        %vm2322 = vcmp.eq.s32.totalorder %v1997, 15
        %vm2323 = vcmp.eq.s32.totalorder %v1998, 15
        %vm2324 = vcmp.eq.s32.totalorder %v1999, 15
        %vm2325 = vcmp.eq.s32.totalorder %v2000, 15
        %vm2326 = vcmp.eq.s32.totalorder %v2001, 15
        %vm2327 = vcmp.eq.s32.totalorder %v2002, 15
        %vm2328 = vcmp.eq.s32.totalorder %v2003, 15
        %vm2329 = vcmp.eq.s32.totalorder %v2004, 15
        %vm2330 = vcmp.eq.s32.totalorder %v2005, 15
        %vm2331 = vcmp.eq.s32.totalorder %v2006, 15
        %vm2332 = vcmp.eq.s32.totalorder %v2007, 15
        %vm2333 = vcmp.eq.s32.totalorder %v2008, 15
        %vm2334 = vcmp.eq.s32.totalorder %v2009, 15
        %vm2335 = vcmp.eq.s32.totalorder %v2010, 15
        %vm2336 = vcmp.eq.s32.totalorder %v2011, 15
        %vm2337 = vcmp.eq.s32.totalorder %v2012, 15
        %vm2338 = vcmp.eq.s32.totalorder %v2013, 15
        %vm2339 = vcmp.eq.s32.totalorder %v2014, 15
        %vm2340 = vcmp.eq.s32.totalorder %v2015, 15
        %vm2341 = vcmp.eq.s32.totalorder %v2016, 15
        %vm2342 = vcmp.eq.s32.totalorder %v2017, 15
        %vm2343 = vcmp.eq.s32.totalorder %v2018, 15
        %vm2344 = vcmp.eq.s32.totalorder %v2019, 15
        %vm2345 = vcmp.eq.s32.totalorder %v2020, 15
        %vm2346 = vcmp.eq.s32.totalorder %v2021, 15
        %vm2347 = vcmp.eq.s32.totalorder %v2022, 15
        %vm2348 = vcmp.eq.s32.totalorder %v2023, 15
        %vm2349 = vcmask 1046528
        %v2350 = vrot.slane %v1556, 1
        %v2351 = vrot.slane %v1557, 1
        %v2352 = vsel %vm2349, %v2350, %v2351
        %v2353 = vrot.slane %v1558, 1
        %v2354 = vsel %vm2349, %v2351, %v2353
        %v2355 = vrot.slane %v1559, 1
        %v2356 = vsel %vm2349, %v2353, %v2355
        %v2357 = vrot.slane %v1560, 1
        %v2358 = vsel %vm2349, %v2355, %v2357
        %v2359 = vrot.slane %v1561, 1
        %v2360 = vsel %vm2349, %v2357, %v2359
        %v2361 = vrot.slane %v1562, 1
        %v2362 = vsel %vm2349, %v2359, %v2361
        %v2363 = vrot.slane %v1563, 1
        %v2364 = vsel %vm2349, %v2361, %v2363
        %v2365 = vrot.slane %v1564, 1
        %v2366 = vsel %vm2349, %v2363, %v2365
        %v2367 = vrot.slane %v1565, 1
        %v2368 = vsel %vm2349, %v2365, %v2367
        %v2369 = vrot.slane %v1566, 1
        %v2370 = vsel %vm2349, %v2367, %v2369
        %v2371 = vrot.slane %v1567, 1
        %v2372 = vsel %vm2349, %v2369, %v2371
        %v2373 = vrot.slane %v1568, 1
        %v2374 = vsel %vm2349, %v2371, %v2373
        %v2375 = vrot.slane %v1569, 1
        %v2376 = vsel %vm2349, %v2373, %v2375
        %v2377 = vrot.slane %v1570, 1
        %v2378 = vsel %vm2349, %v2375, %v2377
        %v2379 = vrot.slane %v1571, 1
        %v2380 = vsel %vm2349, %v2377, %v2379
        %v2381 = vrot.slane %v1572, 1
        %v2382 = vsel %vm2349, %v2379, %v2381
        %v2383 = vrot.slane %v1573, 1
        %v2384 = vsel %vm2349, %v2381, %v2383
        %v2385 = vrot.slane %v1574, 1
        %v2386 = vsel %vm2349, %v2383, %v2385
        %v2387 = vrot.slane %v1575, 1
        %v2388 = vsel %vm2349, %v2385, %v2387
        %v2389 = vrot.slane %v1576, 1
        %v2390 = vsel %vm2349, %v2387, %v2389
        %v2391 = vrot.slane %v1577, 1
        %v2392 = vsel %vm2349, %v2389, %v2391
        %v2393 = vrot.slane %v1578, 1
        %v2394 = vsel %vm2349, %v2391, %v2393
        %v2395 = vrot.slane %v1579, 1
        %v2396 = vsel %vm2349, %v2393, %v2395
        %v2397 = vrot.slane %v1580, 1
        %v2398 = vsel %vm2349, %v2395, %v2397
        %v2399 = vrot.slane %v1581, 1
        %v2400 = vsel %vm2349, %v2397, %v2399
        %v2401 = vrot.slane %v1582, 1
        %v2402 = vsel %vm2349, %v2399, %v2401
        %v2403 = vrot.slane %v1583, 1
        %v2404 = vsel %vm2349, %v2401, %v2403
        %v2405 = vrot.slane %v1584, 1
        %v2406 = vsel %vm2349, %v2403, %v2405
        %v2407 = vrot.slane %v1585, 1
        %v2408 = vsel %vm2349, %v2405, %v2407
        %v2409 = vrot.slane %v1586, 1
        %v2410 = vsel %vm2349, %v2407, %v2409
        %v2411 = vrot.slane %v1587, 1
        %v2412 = vsel %vm2349, %v2409, %v2411
        %v2413 = vrot.slane %v1588, 1
        %v2414 = vsel %vm2349, %v2411, %v2413
        %v2415 = vrot.slane %v1589, 1
        %v2416 = vsel %vm2349, %v2413, %v2415
        %v2417 = vrot.slane %v1590, 1
        %v2418 = vsel %vm2349, %v2415, %v2417
        %v2419 = vrot.slane %v1591, 1
        %v2420 = vsel %vm2349, %v2417, %v2419
        %v2457 = vsel %vm2349, %v2419, 0.0
        %v2458 = vsel %vm2313, 1, 0
        %v2459 = vsel %vm2314, 1, 0
        %v2460 = vsel %vm2315, 1, 0
        %v2461 = vsel %vm2316, 1, 0
        %v2462 = vsel %vm2317, 1, 0
        %v2463 = vsel %vm2318, 1, 0
        %v2464 = vsel %vm2319, 1, 0
        %v2465 = vsel %vm2320, 1, 0
        %v2466 = vsel %vm2321, 1, 0
        %v2467 = vsel %vm2322, 1, 0
        %v2468 = vsel %vm2323, 1, 0
        %v2469 = vsel %vm2324, 1, 0
        %v2470 = vsel %vm2325, 1, 0
        %v2471 = vsel %vm2326, 1, 0
        %v2472 = vsel %vm2327, 1, 0
        %v2473 = vsel %vm2328, 1, 0
        %v2474 = vsel %vm2329, 1, 0
        %v2475 = vsel %vm2330, 1, 0
        %v2476 = vsel %vm2331, 1, 0
        %v2477 = vsel %vm2332, 1, 0
        %v2478 = vsel %vm2333, 1, 0
        %v2479 = vsel %vm2334, 1, 0
        %v2480 = vsel %vm2335, 1, 0
        %v2481 = vsel %vm2336, 1, 0
        %v2482 = vsel %vm2337, 1, 0
        %v2483 = vsel %vm2338, 1, 0
        %v2484 = vsel %vm2339, 1, 0
        %v2485 = vsel %vm2340, 1, 0
        %v2486 = vsel %vm2341, 1, 0
        %v2487 = vsel %vm2342, 1, 0
        %v2488 = vsel %vm2343, 1, 0
        %v2489 = vsel %vm2344, 1, 0
        %v2490 = vsel %vm2345, 1, 0
        %v2491 = vsel %vm2346, 1, 0
        %v2492 = vsel %vm2347, 1, 0
        %v2493 = vsel %vm2348, 1, 0
        %vm2494 = vcmp.eq.s32.totalorder %v2458, 1
        %vm2495 = vcmp.eq.s32.totalorder %v2459, 1
        %vm2496 = vcmp.eq.s32.totalorder %v2460, 1
        %vm2497 = vcmp.eq.s32.totalorder %v2461, 1
        %vm2498 = vcmp.eq.s32.totalorder %v2462, 1
        %vm2499 = vcmp.eq.s32.totalorder %v2463, 1
        %vm2500 = vcmp.eq.s32.totalorder %v2464, 1
        %vm2501 = vcmp.eq.s32.totalorder %v2465, 1
        %vm2502 = vcmp.eq.s32.totalorder %v2466, 1
        %vm2503 = vcmp.eq.s32.totalorder %v2467, 1
        %vm2504 = vcmp.eq.s32.totalorder %v2468, 1
        %vm2505 = vcmp.eq.s32.totalorder %v2469, 1
        %vm2506 = vcmp.eq.s32.totalorder %v2470, 1
        %vm2507 = vcmp.eq.s32.totalorder %v2471, 1
        %vm2508 = vcmp.eq.s32.totalorder %v2472, 1
        %vm2509 = vcmp.eq.s32.totalorder %v2473, 1
        %vm2510 = vcmp.eq.s32.totalorder %v2474, 1
        %vm2511 = vcmp.eq.s32.totalorder %v2475, 1
        %vm2512 = vcmp.eq.s32.totalorder %v2476, 1
        %vm2513 = vcmp.eq.s32.totalorder %v2477, 1
        %vm2514 = vcmp.eq.s32.totalorder %v2478, 1
        %vm2515 = vcmp.eq.s32.totalorder %v2479, 1
        %vm2516 = vcmp.eq.s32.totalorder %v2480, 1
        %vm2517 = vcmp.eq.s32.totalorder %v2481, 1
        %vm2518 = vcmp.eq.s32.totalorder %v2482, 1
        %vm2519 = vcmp.eq.s32.totalorder %v2483, 1
        %vm2520 = vcmp.eq.s32.totalorder %v2484, 1
        %vm2521 = vcmp.eq.s32.totalorder %v2485, 1
        %vm2522 = vcmp.eq.s32.totalorder %v2486, 1
        %vm2523 = vcmp.eq.s32.totalorder %v2487, 1
        %vm2524 = vcmp.eq.s32.totalorder %v2488, 1
        %vm2525 = vcmp.eq.s32.totalorder %v2489, 1
        %vm2526 = vcmp.eq.s32.totalorder %v2490, 1
        %vm2527 = vcmp.eq.s32.totalorder %v2491, 1
        %vm2528 = vcmp.eq.s32.totalorder %v2492, 1
        %vm2529 = vcmp.eq.s32.totalorder %v2493, 1
        %v2530 = vsel %vm2494, 0.0, %v2352
        %v2531 = vsel %vm2495, 0.0, %v2354
        %v2532 = vsel %vm2496, 0.0, %v2356
        %v2533 = vsel %vm2497, 0.0, %v2358
        %v2534 = vsel %vm2498, 0.0, %v2360
        %v2535 = vsel %vm2499, 0.0, %v2362
        %v2536 = vsel %vm2500, 0.0, %v2364
        %v2537 = vsel %vm2501, 0.0, %v2366
        %v2538 = vsel %vm2502, 0.0, %v2368
        %v2539 = vsel %vm2503, 0.0, %v2370
        %v2540 = vsel %vm2504, 0.0, %v2372
        %v2541 = vsel %vm2505, 0.0, %v2374
        %v2542 = vsel %vm2506, 0.0, %v2376
        %v2543 = vsel %vm2507, 0.0, %v2378
        %v2544 = vsel %vm2508, 0.0, %v2380
        %v2545 = vsel %vm2509, 0.0, %v2382
        %v2546 = vsel %vm2510, 0.0, %v2384
        %v2547 = vsel %vm2511, 0.0, %v2386
        %v2548 = vsel %vm2512, 0.0, %v2388
        %v2549 = vsel %vm2513, 0.0, %v2390
        %v2550 = vsel %vm2514, 0.0, %v2392
        %v2551 = vsel %vm2515, 0.0, %v2394
        %v2552 = vsel %vm2516, 0.0, %v2396
        %v2553 = vsel %vm2517, 0.0, %v2398
        %v2554 = vsel %vm2518, 0.0, %v2400
        %v2555 = vsel %vm2519, 0.0, %v2402
        %v2556 = vsel %vm2520, 0.0, %v2404
        %v2557 = vsel %vm2521, 0.0, %v2406
        %v2558 = vsel %vm2522, 0.0, %v2408
        %v2559 = vsel %vm2523, 0.0, %v2410
        %v2560 = vsel %vm2524, 0.0, %v2412
        %v2561 = vsel %vm2525, 0.0, %v2414
        %v2562 = vsel %vm2526, 0.0, %v2416
        %v2563 = vsel %vm2527, 0.0, %v2418
        %v2564 = vsel %vm2528, 0.0, %v2420
        %v2565 = vsel %vm2529, 0.0, %v2457
        %v2566 = vpack.c.bf16 %v2278, %v2277
        %v2567 = vpack.c.bf16 %v2280, %v2279
        %v2568 = vpack.c.bf16 %v2282, %v2281
        %v2569 = vpack.c.bf16 %v2284, %v2283
        %v2570 = vpack.c.bf16 %v2286, %v2285
        %v2571 = vpack.c.bf16 %v2288, %v2287
        %v2572 = vpack.c.bf16 %v2290, %v2289
        %v2573 = vpack.c.bf16 %v2292, %v2291
        %v2574 = vpack.c.bf16 %v2294, %v2293
        %v2575 = vpack.c.bf16 %v2296, %v2295
        %v2576 = vpack.c.bf16 %v2298, %v2297
        %v2577 = vpack.c.bf16 %v2300, %v2299
        %v2578 = vpack.c.bf16 %v2302, %v2301
        %v2579 = vpack.c.bf16 %v2304, %v2303
        %v2580 = vpack.c.bf16 %v2306, %v2305
        %v2581 = vpack.c.bf16 %v2308, %v2307
        %v2582 = vpack.c.bf16 %v2310, %v2309
        %v2583 = vpack.c.bf16 %v2312, %v2311
        %v2584 = vpack.c.bf16 %v1557, %v1556
        %v2585 = vpack.c.bf16 %v1559, %v1558
        %v2586 = vpack.c.bf16 %v1561, %v1560
        %v2587 = vpack.c.bf16 %v1563, %v1562
        %v2588 = vpack.c.bf16 %v1565, %v1564
        %v2589 = vpack.c.bf16 %v1567, %v1566
        %v2590 = vpack.c.bf16 %v1569, %v1568
        %v2591 = vpack.c.bf16 %v1571, %v1570
        %v2592 = vpack.c.bf16 %v1573, %v1572
        %v2593 = vpack.c.bf16 %v1575, %v1574
        %v2594 = vpack.c.bf16 %v1577, %v1576
        %v2595 = vpack.c.bf16 %v1579, %v1578
        %v2596 = vpack.c.bf16 %v1581, %v1580
        %v2597 = vpack.c.bf16 %v1583, %v1582
        %v2598 = vpack.c.bf16 %v1585, %v1584
        %v2599 = vpack.c.bf16 %v1587, %v1586
        %v2600 = vpack.c.bf16 %v1589, %v1588
        %v2601 = vpack.c.bf16 %v1591, %v1590
        %v2602 = vpack.c.bf16 %v2531, %v2530
        %v2603 = vpack.c.bf16 %v2533, %v2532
        %v2604 = vpack.c.bf16 %v2535, %v2534
        %v2605 = vpack.c.bf16 %v2537, %v2536
        %v2606 = vpack.c.bf16 %v2539, %v2538
        %v2607 = vpack.c.bf16 %v2541, %v2540
        %v2608 = vpack.c.bf16 %v2543, %v2542
        %v2609 = vpack.c.bf16 %v2545, %v2544
        %v2610 = vpack.c.bf16 %v2547, %v2546
        %v2611 = vpack.c.bf16 %v2549, %v2548
        %v2612 = vpack.c.bf16 %v2551, %v2550
        %v2613 = vpack.c.bf16 %v2553, %v2552
        %v2614 = vpack.c.bf16 %v2555, %v2554
        %v2615 = vpack.c.bf16 %v2557, %v2556
        %v2616 = vpack.c.bf16 %v2559, %v2558
        %v2617 = vpack.c.bf16 %v2561, %v2560
        %v2618 = vpack.c.bf16 %v2563, %v2562
        %v2619 = vpack.c.bf16 %v2565, %v2564
        %v2620 = vld [vmem:[#allocation13] sm:$0xf]
        %v2621 = vld [vmem:[#allocation13 + $0x4] sm:$0xf]
        %v2622 = vld [vmem:[#allocation13 + $0x8] sm:$0xf]
        %v2623 = vld [vmem:[#allocation13 + $0xc] sm:$0xf]
        %v2624 = vld [vmem:[#allocation13 + $0x10] sm:$0xf]
        %v2625 = vld [vmem:[#allocation13 + $0x14] sm:$0xf]
        %v2626 = vld [vmem:[#allocation13 + $0x18] sm:$0xf]
        %v2627 = vld [vmem:[#allocation13 + $0x1c] sm:$0xf]
        %v2628 = vld [vmem:[#allocation13 + $0x20] sm:$0xf]
        %v2629 = vld [vmem:[#allocation13 + $0x24] sm:$0xf]
        %v2630 = vld [vmem:[#allocation13 + $0x28] sm:$0xf]
        %v2631 = vld [vmem:[#allocation13 + $0x2c] sm:$0xf]
        %v2632 = vld [vmem:[#allocation13 + $0x30] sm:$0xf]
        %v2633 = vld [vmem:[#allocation13 + $0x34] sm:$0xf]
        %v2634 = vld [vmem:[#allocation13 + $0x38] sm:$0xf]
        %v2635 = vld [vmem:[#allocation13 + $0x3c] sm:$0xf]
        %v2636 = vld [vmem:[#allocation13 + $0x40] sm:$0xf]
        %v2637 = vld [vmem:[#allocation13 + $0x44] sm:$0xf]
        %v2638 = vld [vmem:[#allocation13 + $0x48] sm:$0xf]
        %v2639 = vld [vmem:[#allocation13 + $0x4c] sm:$0xf]
        %v2640 = vld [vmem:[#allocation13 + $0x50] sm:$0xf]
        %v2641 = vld [vmem:[#allocation13 + $0x54] sm:$0xf]
        %v2642 = vld [vmem:[#allocation13 + $0x58] sm:$0xf]
        %v2643 = vld [vmem:[#allocation13 + $0x5c] sm:$0xf]
        %v2644 = vld [vmem:[#allocation13 + $0x60] sm:$0xf]
        %v2645 = vld [vmem:[#allocation13 + $0x64] sm:$0xf]
        %v2646 = vld [vmem:[#allocation13 + $0x68] sm:$0xf]
        %v2647 = vld [vmem:[#allocation13 + $0x6c] sm:$0xf]
        %v2648 = vld [vmem:[#allocation13 + $0x70] sm:$0xf]
        %v2649 = vld [vmem:[#allocation13 + $0x74] sm:$0xf]
        %v2650 = vld [vmem:[#allocation13 + $0x78] sm:$0xf]
        %v2651 = vld [vmem:[#allocation13 + $0x7c] sm:$0xf]
        %v2652 = vld [vmem:[#allocation13 + $0x80] sm:$0xf]
        %v2653 = vld [vmem:[#allocation13 + $0x84] sm:$0xf]
        %v2654 = vld [vmem:[#allocation13 + $0x88] sm:$0xf]
        %v2655 = vld [vmem:[#allocation13 + $0x8c] sm:$0xf]
        %v2656 = vld [vmem:[#allocation13 + $0x90] sm:$0xf]
        %v2657 = vld [vmem:[#allocation13 + $0x94] sm:$0xf]
        %v2658 = vld [vmem:[#allocation13 + $0x98] sm:$0xf]
        %v2659 = vld [vmem:[#allocation13 + $0x9c] sm:$0xf]
        %v2660 = vld [vmem:[#allocation13 + $0xa0] sm:$0xf]
        %v2661 = vld [vmem:[#allocation13 + $0xa4] sm:$0xf]
        %v2662 = vld [vmem:[#allocation13 + $0xa8] sm:$0xf]
        %v2663 = vld [vmem:[#allocation13 + $0xac] sm:$0xf]
        %v2664 = vld [vmem:[#allocation13 + $0xb0] sm:$0xf]
        %v2665 = vld [vmem:[#allocation13 + $0xb4] sm:$0xf]
        %v2666 = vld [vmem:[#allocation13 + $0xb8] sm:$0xf]
        %v2667 = vld [vmem:[#allocation13 + $0xbc] sm:$0xf]
        %s2668 = scalar_lea.vmem [#allocation13], 192
        %v2669 = vld [vmem:[%s2668] sm:$0xf]
        %v2670 = vld [vmem:[%s2668 + $0x4] sm:$0xf]
        %v2671 = vld [vmem:[%s2668 + $0x8] sm:$0xf]
        %v2672 = vld [vmem:[%s2668 + $0xc] sm:$0xf]
        %v2673 = vld [vmem:[%s2668 + $0x10] sm:$0xf]
        %v2674 = vld [vmem:[%s2668 + $0x14] sm:$0xf]
        %v2675 = vld [vmem:[%s2668 + $0x18] sm:$0xf]
        %v2676 = vld [vmem:[%s2668 + $0x1c] sm:$0xf]
        %v2677 = vld [vmem:[%s2668 + $0x20] sm:$0xf]
        %v2678 = vld [vmem:[%s2668 + $0x24] sm:$0xf]
        %v2679 = vld [vmem:[%s2668 + $0x28] sm:$0xf]
        %v2680 = vld [vmem:[%s2668 + $0x2c] sm:$0xf]
        %v2681 = vld [vmem:[%s2668 + $0x30] sm:$0xf]
        %v2682 = vld [vmem:[%s2668 + $0x34] sm:$0xf]
        %v2683 = vld [vmem:[%s2668 + $0x38] sm:$0xf]
        %v2684 = vld [vmem:[%s2668 + $0x3c] sm:$0xf]
        %v2685 = vld [vmem:[%s2668 + $0x40] sm:$0xf]
        %v2686 = vld [vmem:[%s2668 + $0x44] sm:$0xf]
        %v2687 = vld [vmem:[%s2668 + $0x48] sm:$0xf]
        %v2688 = vld [vmem:[%s2668 + $0x4c] sm:$0xf]
        %v2689 = vld [vmem:[%s2668 + $0x50] sm:$0xf]
        %v2690 = vld [vmem:[%s2668 + $0x54] sm:$0xf]
        %v2691 = vld [vmem:[%s2668 + $0x58] sm:$0xf]
        %v2692 = vld [vmem:[%s2668 + $0x5c] sm:$0xf]
        %v2693 = vld [vmem:[%s2668 + $0x60] sm:$0xf]
        %v2694 = vld [vmem:[%s2668 + $0x64] sm:$0xf]
        %v2695 = vld [vmem:[%s2668 + $0x68] sm:$0xf]
        %v2696 = vld [vmem:[%s2668 + $0x6c] sm:$0xf]
        %v2697 = vld [vmem:[%s2668 + $0x70] sm:$0xf]
        %v2698 = vld [vmem:[%s2668 + $0x74] sm:$0xf]
        %v2699 = vld [vmem:[%s2668 + $0x78] sm:$0xf]
        %v2700 = vld [vmem:[%s2668 + $0x7c] sm:$0xf]
        %v2701 = vld [vmem:[%s2668 + $0x80] sm:$0xf]
        %v2702 = vld [vmem:[%s2668 + $0x84] sm:$0xf]
        %v2703 = vld [vmem:[%s2668 + $0x88] sm:$0xf]
        %v2704 = vld [vmem:[%s2668 + $0x8c] sm:$0xf]
        %v2705 = vld [vmem:[%s2668 + $0x90] sm:$0xf]
        %v2706 = vld [vmem:[%s2668 + $0x94] sm:$0xf]
        %v2707 = vld [vmem:[%s2668 + $0x98] sm:$0xf]
        %v2708 = vld [vmem:[%s2668 + $0x9c] sm:$0xf]
        %v2709 = vld [vmem:[%s2668 + $0xa0] sm:$0xf]
        %v2710 = vld [vmem:[%s2668 + $0xa4] sm:$0xf]
        %v2711 = vld [vmem:[%s2668 + $0xa8] sm:$0xf]
        %v2712 = vld [vmem:[%s2668 + $0xac] sm:$0xf]
        %v2713 = vld [vmem:[%s2668 + $0xb0] sm:$0xf]
        %v2714 = vld [vmem:[%s2668 + $0xb4] sm:$0xf]
        %v2715 = vld [vmem:[%s2668 + $0xb8] sm:$0xf]
        %v2716 = vld [vmem:[%s2668 + $0xbc] sm:$0xf]
        %v2765 = vunpack.c.l.b16 %v2669
        %v2766 = vunpack.c.l.b16 %v2670
        %v2767 = vunpack.c.l.b16 %v2671
        %v2768 = vunpack.c.l.b16 %v2672
        %v2769 = vunpack.c.l.b16 %v2673
        %v2770 = vunpack.c.l.b16 %v2674
        %v2771 = vunpack.c.l.b16 %v2675
        %v2772 = vunpack.c.l.b16 %v2676
        %v2773 = vunpack.c.l.b16 %v2677
        %v2774 = vunpack.c.l.b16 %v2678
        %v2775 = vunpack.c.l.b16 %v2679
        %v2776 = vunpack.c.l.b16 %v2680
        %v2777 = vunpack.c.l.b16 %v2681
        %v2778 = vunpack.c.l.b16 %v2682
        %v2779 = vunpack.c.l.b16 %v2683
        %v2780 = vunpack.c.l.b16 %v2684
        %v2781 = vunpack.c.l.b16 %v2685
        %v2782 = vunpack.c.l.b16 %v2686
        %v2783 = vunpack.c.l.b16 %v2687
        %v2784 = vunpack.c.l.b16 %v2688
        %v2785 = vunpack.c.l.b16 %v2689
        %v2786 = vunpack.c.l.b16 %v2690
        %v2787 = vunpack.c.l.b16 %v2691
        %v2788 = vunpack.c.l.b16 %v2692
        %v2789 = vunpack.c.l.b16 %v2693
        %v2790 = vunpack.c.l.b16 %v2694
        %v2791 = vunpack.c.l.b16 %v2695
        %v2792 = vunpack.c.l.b16 %v2696
        %v2793 = vunpack.c.l.b16 %v2697
        %v2794 = vunpack.c.l.b16 %v2698
        %v2795 = vunpack.c.l.b16 %v2699
        %v2796 = vunpack.c.l.b16 %v2700
        %v2797 = vunpack.c.l.b16 %v2701
        %v2798 = vunpack.c.l.b16 %v2702
        %v2799 = vunpack.c.l.b16 %v2703
        %v2800 = vunpack.c.l.b16 %v2704
        %v2801 = vunpack.c.l.b16 %v2705
        %v2802 = vunpack.c.l.b16 %v2706
        %v2803 = vunpack.c.l.b16 %v2707
        %v2804 = vunpack.c.l.b16 %v2708
        %v2805 = vunpack.c.l.b16 %v2709
        %v2806 = vunpack.c.l.b16 %v2710
        %v2807 = vunpack.c.l.b16 %v2711
        %v2808 = vunpack.c.l.b16 %v2712
        %v2809 = vunpack.c.l.b16 %v2713
        %v2810 = vunpack.c.l.b16 %v2714
        %v2811 = vunpack.c.l.b16 %v2715
        %v2812 = vunpack.c.l.b16 %v2716
        %v2813 = vpack.c.b16 %v2766, %v2765
        %v2814 = vpack.c.b16 %v2768, %v2767
        %v2815 = vpack.c.b16 %v2770, %v2769
        %v2816 = vpack.c.b16 %v2772, %v2771
        %v2817 = vpack.c.b16 %v2774, %v2773
        %v2818 = vpack.c.b16 %v2776, %v2775
        %v2819 = vpack.c.b16 %v2778, %v2777
        %v2820 = vpack.c.b16 %v2780, %v2779
        %v2821 = vpack.c.b16 %v2782, %v2781
        %v2822 = vpack.c.b16 %v2784, %v2783
        %v2823 = vpack.c.b16 %v2786, %v2785
        %v2824 = vpack.c.b16 %v2788, %v2787
        %v2825 = vpack.c.b16 %v2790, %v2789
        %v2826 = vpack.c.b16 %v2792, %v2791
        %v2827 = vpack.c.b16 %v2794, %v2793
        %v2828 = vpack.c.b16 %v2796, %v2795
        %v2829 = vpack.c.b16 %v2798, %v2797
        %v2830 = vpack.c.b16 %v2800, %v2799
        %v2831 = vpack.c.b16 %v2802, %v2801
        %v2832 = vpack.c.b16 %v2804, %v2803
        %v2833 = vpack.c.b16 %v2806, %v2805
        %v2834 = vpack.c.b16 %v2808, %v2807
        %v2835 = vpack.c.b16 %v2810, %v2809
        %v2836 = vpack.c.b16 %v2812, %v2811
        %2861 = vmatprep.subr.bf16.mxu0 0
        %2862 = vmatpush1.bf16.msra.mxu0 %v2813
        %2863 = vmatprep.subr.bf16.mxu0 0
        %2864 = vmatpush1.bf16.msra.mxu0 %v2814
        %2865 = vmatprep.subr.bf16.mxu0 0
        %2866 = vmatpush1.bf16.msra.mxu0 %v2815
        %2867 = vmatprep.subr.bf16.mxu0 0
        %2868 = vmatpush1.bf16.msra.mxu0 %v2816
        %2869 = vmatprep.subr.bf16.mxu0 0
        %2870 = vmatpush1.bf16.msra.mxu0 %v2817
        %2871 = vmatprep.subr.bf16.mxu0 0
        %2872 = vmatpush1.bf16.msra.mxu0 %v2818
        %2873 = vmatprep.subr.bf16.mxu0 0
        %2874 = vmatpush1.bf16.msra.mxu0 %v2819
        %2875 = vmatprep.subr.bf16.mxu0 0
        %2876 = vmatpush1.bf16.msra.mxu0 %v2820
        %2877 = vmatprep.subr.bf16.mxu0 0
        %2878 = vmatpush1.bf16.msra.mxu0 %v2821
        %2879 = vmatprep.subr.bf16.mxu0 0
        %2880 = vmatpush1.bf16.msra.mxu0 %v2822
        %2881 = vmatprep.subr.bf16.mxu0 0
        %2882 = vmatpush1.bf16.msra.mxu0 %v2823
        %2883 = vmatprep.subr.bf16.mxu0 0
        %2884 = vmatpush1.bf16.msra.mxu0 %v2824
        %2885 = vmatprep.subr.bf16.mxu0 0
        %2886 = vmatpush1.bf16.msra.mxu0 %v2825
        %2887 = vmatprep.subr.bf16.mxu0 0
        %2888 = vmatpush1.bf16.msra.mxu0 %v2826
        %2889 = vmatprep.subr.bf16.mxu0 0
        %2890 = vmatpush1.bf16.msra.mxu0 %v2827
        %2891 = vmatprep.subr.bf16.mxu0 0
        %2892 = vmatpush1.bf16.msra.mxu0 %v2828
        %2893 = vmatprep.mubr.bf16.mxu0 %v2585
        %2894 = vmatmul.mubr.bf16.gmra.mrb[0].mxu0 %v2567
        %v2895 = vpop.f32.mrb[0].mxu0
        %v2896 = vadd.f32 0.0, %v2895
        %v2897 = vpop.f32.mrb[0].mxu0
        %v2898 = vpop.f32.mrb[0].mxu0
        %v2899 = vadd.f32 0.0, %v2898
        %v2900 = vpop.f32.mrb[0].mxu0
        %2901 = vmatprep.mubr.bf16.mxu0 %v2586
        %2902 = vmatmul.mubr.bf16.gmra.mrb[0].mxu0 %v2568
        %v2903 = vpop.f32.mrb[0].mxu0
        %v2904 = vadd.f32 0.0, %v2903
        %v2905 = vpop.f32.mrb[0].mxu0
        %v2906 = vpop.f32.mrb[0].mxu0
        %v2907 = vadd.f32 0.0, %v2906
        %v2908 = vpop.f32.mrb[0].mxu0
        %2909 = vmatprep.mubr.bf16.mxu0 %v2587
        %2910 = vmatmul.mubr.bf16.gmra.mrb[0].mxu0 %v2569
        %v2911 = vpop.f32.mrb[0].mxu0
        %v2912 = vadd.f32 0.0, %v2911
        %v2913 = vpop.f32.mrb[0].mxu0
        %v2914 = vpop.f32.mrb[0].mxu0
        %v2915 = vadd.f32 0.0, %v2914
        %v2916 = vpop.f32.mrb[0].mxu0
        %2917 = vmatprep.mubr.bf16.mxu0 %v2588
        %2918 = vmatmul.mubr.bf16.gmra.mrb[0].mxu0 %v2570
        %v2919 = vpop.f32.mrb[0].mxu0
        %v2920 = vadd.f32 0.0, %v2919
        %v2921 = vpop.f32.mrb[0].mxu0
        %v2922 = vpop.f32.mrb[0].mxu0
        %v2923 = vadd.f32 0.0, %v2922
        %v2924 = vpop.f32.mrb[0].mxu0
        %2925 = vmatprep.mubr.bf16.mxu0 %v2589
        %2926 = vmatmul.mubr.bf16.gmra.mrb[0].mxu0 %v2571
        %v2927 = vpop.f32.mrb[0].mxu0
        %v2928 = vadd.f32 0.0, %v2927
        %v2929 = vpop.f32.mrb[0].mxu0
        %v2930 = vpop.f32.mrb[0].mxu0
        %v2931 = vadd.f32 0.0, %v2930
        %v2932 = vpop.f32.mrb[0].mxu0
        %2933 = vmatprep.mubr.bf16.mxu0 %v2590
        %2934 = vmatmul.mubr.bf16.gmra.mrb[0].mxu0 %v2572
        %v2935 = vpop.f32.mrb[0].mxu0
        %v2936 = vadd.f32 0.0, %v2935
        %v2937 = vpop.f32.mrb[0].mxu0
        %v2938 = vpop.f32.mrb[0].mxu0
        %v2939 = vadd.f32 0.0, %v2938
        %v2940 = vpop.f32.mrb[0].mxu0
        %2941 = vmatprep.mubr.bf16.mxu0 %v2591
        %2942 = vmatmul.mubr.bf16.gmra.mrb[0].mxu0 %v2573
        %v2943 = vpop.f32.mrb[0].mxu0
        %v2944 = vadd.f32 0.0, %v2943
        %v2945 = vpop.f32.mrb[0].mxu0
        %v2946 = vpop.f32.mrb[0].mxu0
        %v2947 = vadd.f32 0.0, %v2946
        %v2948 = vpop.f32.mrb[0].mxu0
        %2949 = vmatprep.mubr.bf16.mxu0 %v2592
        %2950 = vmatmul.mubr.bf16.gmra.mrb[0].mxu0 %v2574
        %v2951 = vpop.f32.mrb[0].mxu0
        %v2952 = vadd.f32 0.0, %v2951
        %v2953 = vpop.f32.mrb[0].mxu0
        %v2954 = vpop.f32.mrb[0].mxu0
        %v2955 = vadd.f32 0.0, %v2954
        %v2956 = vpop.f32.mrb[0].mxu0
        %2957 = vmatprep.mubr.bf16.mxu0 %v2593
        %2958 = vmatmul.mubr.bf16.gmra.mrb[0].mxu0 %v2575
        %v2959 = vpop.f32.mrb[0].mxu0
        %v2960 = vadd.f32 0.0, %v2959
        %v2961 = vpop.f32.mrb[0].mxu0
        %v2962 = vpop.f32.mrb[0].mxu0
        %v2963 = vadd.f32 0.0, %v2962
        %v2964 = vpop.f32.mrb[0].mxu0
        %2965 = vmatprep.mubr.bf16.mxu0 %v2594
        %2966 = vmatmul.mubr.bf16.gmra.mrb[0].mxu0 %v2576
        %v2967 = vpop.f32.mrb[0].mxu0
        %v2968 = vadd.f32 0.0, %v2967
        %v2969 = vpop.f32.mrb[0].mxu0
        %v2970 = vpop.f32.mrb[0].mxu0
        %v2971 = vadd.f32 0.0, %v2970
        %v2972 = vpop.f32.mrb[0].mxu0
        %2973 = vmatprep.mubr.bf16.mxu0 %v2595
        %2974 = vmatmul.mubr.bf16.gmra.mrb[0].mxu0 %v2577
        %v2975 = vpop.f32.mrb[0].mxu0
        %v2976 = vadd.f32 0.0, %v2975
        %v2977 = vpop.f32.mrb[0].mxu0
        %v2978 = vpop.f32.mrb[0].mxu0
        %v2979 = vadd.f32 0.0, %v2978
        %v2980 = vpop.f32.mrb[0].mxu0
        %2981 = vmatprep.mubr.bf16.mxu0 %v2596
        %2982 = vmatmul.mubr.bf16.gmra.mrb[0].mxu0 %v2578
        %v2983 = vpop.f32.mrb[0].mxu0
        %v2984 = vadd.f32 0.0, %v2983
        %v2985 = vpop.f32.mrb[0].mxu0
        %v2986 = vpop.f32.mrb[0].mxu0
        %v2987 = vadd.f32 0.0, %v2986
        %v2988 = vpop.f32.mrb[0].mxu0
        %2989 = vmatprep.mubr.bf16.mxu0 %v2597
        %2990 = vmatmul.mubr.bf16.gmra.mrb[0].mxu0 %v2579
        %v2991 = vpop.f32.mrb[0].mxu0
        %v2992 = vadd.f32 0.0, %v2991
        %v2993 = vpop.f32.mrb[0].mxu0
        %v2994 = vpop.f32.mrb[0].mxu0
        %v2995 = vadd.f32 0.0, %v2994
        %v2996 = vpop.f32.mrb[0].mxu0
        %2997 = vmatprep.mubr.bf16.mxu0 %v2598
        %2998 = vmatmul.mubr.bf16.gmra.mrb[0].mxu0 %v2580
        %v2999 = vpop.f32.mrb[0].mxu0
        %v3000 = vadd.f32 0.0, %v2999
        %v3001 = vpop.f32.mrb[0].mxu0
        %v3002 = vpop.f32.mrb[0].mxu0
        %v3003 = vadd.f32 0.0, %v3002
        %v3004 = vpop.f32.mrb[0].mxu0
        %3005 = vmatprep.mubr.bf16.mxu0 %v2599
        %3006 = vmatmul.mubr.bf16.gmra.mrb[0].mxu0 %v2581
        %v3007 = vpop.f32.mrb[0].mxu0
        %v3008 = vadd.f32 0.0, %v3007
        %v3009 = vpop.f32.mrb[0].mxu0
        %v3010 = vpop.f32.mrb[0].mxu0
        %v3011 = vadd.f32 0.0, %v3010
        %v3012 = vpop.f32.mrb[0].mxu0
        %3013 = vmatprep.mubr.bf16.mxu0 %v2600
        %3014 = vmatmul.mubr.bf16.gmra.mrb[0].mxu0 %v2582
        %v3015 = vpop.f32.mrb[0].mxu0
        %v3016 = vadd.f32 0.0, %v3015
        %v3017 = vpop.f32.mrb[0].mxu0
        %v3018 = vpop.f32.mrb[0].mxu0
        %v3019 = vadd.f32 0.0, %v3018
        %v3020 = vpop.f32.mrb[0].mxu0
        %3021 = vdwg.mxu0
        %3022 = vmatprep.subr.bf16.mxu0 0
        %3023 = vmatpush1.bf16.msra.mxu0 %v2829
        %3024 = vmatprep.subr.bf16.mxu0 0
        %3025 = vmatpush1.bf16.msra.mxu0 %v2830
        %3026 = vmatprep.subr.bf16.mxu0 0
        %3027 = vmatpush1.bf16.msra.mxu0 %v2831
        %3028 = vmatprep.subr.bf16.mxu0 0
        %3029 = vmatpush1.bf16.msra.mxu0 %v2832
        %3030 = vmatprep.subr.bf16.mxu0 0
        %3031 = vmatpush1.bf16.msra.mxu0 %v2833
        %3032 = vmatprep.subr.bf16.mxu0 0
        %3033 = vmatpush1.bf16.msra.mxu0 %v2834
        %3034 = vmatprep.subr.bf16.mxu0 0
        %3035 = vmatpush1.bf16.msra.mxu0 %v2835
        %3036 = vmatprep.subr.bf16.mxu0 0
        %3037 = vmatpush1.bf16.msra.mxu0 %v2836
        %3038 = vmatprep.subr.bf16.mxu0 0
        %3039 = vmatpush1.bf16.msra.mxu0 0
        %3040 = vmatprep.subr.bf16.mxu0 0
        %3041 = vmatpush1.bf16.msra.mxu0 0
        %3042 = vmatprep.subr.bf16.mxu0 0
        %3043 = vmatpush1.bf16.msra.mxu0 0
        %3044 = vmatprep.subr.bf16.mxu0 0
        %3045 = vmatpush1.bf16.msra.mxu0 0
        %3046 = vmatprep.subr.bf16.mxu0 0
        %3047 = vmatpush1.bf16.msra.mxu0 0
        %3048 = vmatprep.subr.bf16.mxu0 0
        %3049 = vmatpush1.bf16.msra.mxu0 0
        %3050 = vmatprep.subr.bf16.mxu0 0
        %3051 = vmatpush1.bf16.msra.mxu0 0
        %3052 = vmatprep.subr.bf16.mxu0 0
        %3053 = vmatpush1.bf16.msra.mxu0 0
        %3054 = vmatprep.mubr.bf16.mxu0 0
        %3055 = vmatmul.mubr.bf16.gmra.mrb[0].mxu0 %v2603
        %v3056 = vpop.f32.mrb[0].mxu0
        %v3057 = vadd.f32 %v2896, %v3056
        %v3058 = vpop.f32.mrb[0].mxu0
        %v3059 = vpop.f32.mrb[0].mxu0
        %v3060 = vadd.f32 %v2899, %v3059
        %v3061 = vpop.f32.mrb[0].mxu0
        %3062 = vmatprep.mubr.bf16.mxu0 0
        %3063 = vmatmul.mubr.bf16.gmra.mrb[0].mxu0 %v2604
        %v3064 = vpop.f32.mrb[0].mxu0
        %v3065 = vadd.f32 %v2904, %v3064
        %v3066 = vpop.f32.mrb[0].mxu0
        %v3067 = vpop.f32.mrb[0].mxu0
        %v3068 = vadd.f32 %v2907, %v3067
        %v3069 = vpop.f32.mrb[0].mxu0
        %3070 = vmatprep.mubr.bf16.mxu0 0
        %3071 = vmatmul.mubr.bf16.gmra.mrb[0].mxu0 %v2605
        %v3072 = vpop.f32.mrb[0].mxu0
        %v3073 = vadd.f32 %v2912, %v3072
        %v3074 = vpop.f32.mrb[0].mxu0
        %v3075 = vpop.f32.mrb[0].mxu0
        %v3076 = vadd.f32 %v2915, %v3075
        %v3077 = vpop.f32.mrb[0].mxu0
        %3078 = vmatprep.mubr.bf16.mxu0 0
        %3079 = vmatmul.mubr.bf16.gmra.mrb[0].mxu0 %v2606
        %v3080 = vpop.f32.mrb[0].mxu0
        %v3081 = vadd.f32 %v2920, %v3080
        %v3082 = vpop.f32.mrb[0].mxu0
        %v3083 = vpop.f32.mrb[0].mxu0
        %v3084 = vadd.f32 %v2923, %v3083
        %v3085 = vpop.f32.mrb[0].mxu0
        %3086 = vmatprep.mubr.bf16.mxu0 0
        %3087 = vmatmul.mubr.bf16.gmra.mrb[0].mxu0 %v2607
        %v3088 = vpop.f32.mrb[0].mxu0
        %v3089 = vadd.f32 %v2928, %v3088
        %v3090 = vpop.f32.mrb[0].mxu0
        %v3091 = vpop.f32.mrb[0].mxu0
        %v3092 = vadd.f32 %v2931, %v3091
        %v3093 = vpop.f32.mrb[0].mxu0
        %3094 = vmatprep.mubr.bf16.mxu0 0
        %3095 = vmatmul.mubr.bf16.gmra.mrb[0].mxu0 %v2608
        %v3096 = vpop.f32.mrb[0].mxu0
        %v3097 = vadd.f32 %v2936, %v3096
        %v3098 = vpop.f32.mrb[0].mxu0
        %v3099 = vpop.f32.mrb[0].mxu0
        %v3100 = vadd.f32 %v2939, %v3099
        %v3101 = vpop.f32.mrb[0].mxu0
        %3102 = vmatprep.mubr.bf16.mxu0 0
        %3103 = vmatmul.mubr.bf16.gmra.mrb[0].mxu0 %v2609
        %v3104 = vpop.f32.mrb[0].mxu0
        %v3105 = vadd.f32 %v2944, %v3104
        %v3106 = vpop.f32.mrb[0].mxu0
        %v3107 = vpop.f32.mrb[0].mxu0
        %v3108 = vadd.f32 %v2947, %v3107
        %v3109 = vpop.f32.mrb[0].mxu0
        %3110 = vmatprep.mubr.bf16.mxu0 0
        %3111 = vmatmul.mubr.bf16.gmra.mrb[0].mxu0 %v2610
        %v3112 = vpop.f32.mrb[0].mxu0
        %v3113 = vadd.f32 %v2952, %v3112
        %v3114 = vpop.f32.mrb[0].mxu0
        %v3115 = vpop.f32.mrb[0].mxu0
        %v3116 = vadd.f32 %v2955, %v3115
        %v3117 = vpop.f32.mrb[0].mxu0
        %3118 = vmatprep.mubr.bf16.mxu0 0
        %3119 = vmatmul.mubr.bf16.gmra.mrb[0].mxu0 %v2611
        %v3120 = vpop.f32.mrb[0].mxu0
        %v3121 = vadd.f32 %v2960, %v3120
        %v3122 = vpop.f32.mrb[0].mxu0
        %v3123 = vpop.f32.mrb[0].mxu0
        %v3124 = vadd.f32 %v2963, %v3123
        %v3125 = vpop.f32.mrb[0].mxu0
        %3126 = vmatprep.mubr.bf16.mxu0 0
        %3127 = vmatmul.mubr.bf16.gmra.mrb[0].mxu0 %v2612
        %v3128 = vpop.f32.mrb[0].mxu0
        %v3129 = vadd.f32 %v2968, %v3128
        %v3130 = vpop.f32.mrb[0].mxu0
        %v3131 = vpop.f32.mrb[0].mxu0
        %v3132 = vadd.f32 %v2971, %v3131
        %v3133 = vpop.f32.mrb[0].mxu0
        %3134 = vmatprep.mubr.bf16.mxu0 0
        %3135 = vmatmul.mubr.bf16.gmra.mrb[0].mxu0 %v2613
        %v3136 = vpop.f32.mrb[0].mxu0
        %v3137 = vadd.f32 %v2976, %v3136
        %v3138 = vpop.f32.mrb[0].mxu0
        %v3139 = vpop.f32.mrb[0].mxu0
        %v3140 = vadd.f32 %v2979, %v3139
        %v3141 = vpop.f32.mrb[0].mxu0
        %3142 = vmatprep.mubr.bf16.mxu0 0
        %3143 = vmatmul.mubr.bf16.gmra.mrb[0].mxu0 %v2614
        %v3144 = vpop.f32.mrb[0].mxu0
        %v3145 = vadd.f32 %v2984, %v3144
        %v3146 = vpop.f32.mrb[0].mxu0
        %v3147 = vpop.f32.mrb[0].mxu0
        %v3148 = vadd.f32 %v2987, %v3147
        %v3149 = vpop.f32.mrb[0].mxu0
        %3150 = vmatprep.mubr.bf16.mxu0 0
        %3151 = vmatmul.mubr.bf16.gmra.mrb[0].mxu0 %v2615
        %v3152 = vpop.f32.mrb[0].mxu0
        %v3153 = vadd.f32 %v2992, %v3152
        %v3154 = vpop.f32.mrb[0].mxu0
        %v3155 = vpop.f32.mrb[0].mxu0
        %v3156 = vadd.f32 %v2995, %v3155
        %v3157 = vpop.f32.mrb[0].mxu0
        %3158 = vmatprep.mubr.bf16.mxu0 0
        %3159 = vmatmul.mubr.bf16.gmra.mrb[0].mxu0 %v2616
        %v3160 = vpop.f32.mrb[0].mxu0
        %v3161 = vadd.f32 %v3000, %v3160
        %v3162 = vpop.f32.mrb[0].mxu0
        %v3163 = vpop.f32.mrb[0].mxu0
        %v3164 = vadd.f32 %v3003, %v3163
        %v3165 = vpop.f32.mrb[0].mxu0
        %3166 = vmatprep.mubr.bf16.mxu0 0
        %3167 = vmatmul.mubr.bf16.gmra.mrb[0].mxu0 %v2617
        %v3168 = vpop.f32.mrb[0].mxu0
        %v3169 = vadd.f32 %v3008, %v3168
        %v3170 = vpop.f32.mrb[0].mxu0
        %v3171 = vpop.f32.mrb[0].mxu0
        %v3172 = vadd.f32 %v3011, %v3171
        %v3173 = vpop.f32.mrb[0].mxu0
        %3174 = vmatprep.mubr.bf16.mxu0 0
        %3175 = vmatmul.mubr.bf16.gmra.mrb[0].mxu0 %v2618
        %v3176 = vpop.f32.mrb[0].mxu0
        %v3177 = vadd.f32 %v3016, %v3176
        %v3178 = vpop.f32.mrb[0].mxu0
        %v3179 = vpop.f32.mrb[0].mxu0
        %v3180 = vadd.f32 %v3019, %v3179
        %v3181 = vpop.f32.mrb[0].mxu0
        %3182 = vdwg.mxu0
        %v3231 = vunpack.c.l.b16 %v2620
        %v3232 = vunpack.c.l.b16 %v2621
        %v3233 = vunpack.c.l.b16 %v2622
        %v3234 = vunpack.c.l.b16 %v2623
        %v3235 = vunpack.c.l.b16 %v2624
        %v3236 = vunpack.c.l.b16 %v2625
        %v3237 = vunpack.c.l.b16 %v2626
        %v3238 = vunpack.c.l.b16 %v2627
        %v3239 = vunpack.c.l.b16 %v2628
        %v3240 = vunpack.c.l.b16 %v2629
        %v3241 = vunpack.c.l.b16 %v2630
        %v3242 = vunpack.c.l.b16 %v2631
        %v3243 = vunpack.c.l.b16 %v2632
        %v3244 = vunpack.c.l.b16 %v2633
        %v3245 = vunpack.c.l.b16 %v2634
        %v3246 = vunpack.c.l.b16 %v2635
        %v3247 = vunpack.c.l.b16 %v2636
        %v3248 = vunpack.c.l.b16 %v2637
        %v3249 = vunpack.c.l.b16 %v2638
        %v3250 = vunpack.c.l.b16 %v2639
        %v3251 = vunpack.c.l.b16 %v2640
        %v3252 = vunpack.c.l.b16 %v2641
        %v3253 = vunpack.c.l.b16 %v2642
        %v3254 = vunpack.c.l.b16 %v2643
        %v3255 = vunpack.c.l.b16 %v2644
        %v3256 = vunpack.c.l.b16 %v2645
        %v3257 = vunpack.c.l.b16 %v2646
        %v3258 = vunpack.c.l.b16 %v2647
        %v3259 = vunpack.c.l.b16 %v2648
        %v3260 = vunpack.c.l.b16 %v2649
        %v3261 = vunpack.c.l.b16 %v2650
        %v3262 = vunpack.c.l.b16 %v2651
        %v3263 = vunpack.c.l.b16 %v2652
        %v3264 = vunpack.c.l.b16 %v2653
        %v3265 = vunpack.c.l.b16 %v2654
        %v3266 = vunpack.c.l.b16 %v2655
        %v3267 = vunpack.c.l.b16 %v2656
        %v3268 = vunpack.c.l.b16 %v2657
        %v3269 = vunpack.c.l.b16 %v2658
        %v3270 = vunpack.c.l.b16 %v2659
        %v3271 = vunpack.c.l.b16 %v2660
        %v3272 = vunpack.c.l.b16 %v2661
        %v3273 = vunpack.c.l.b16 %v2662
        %v3274 = vunpack.c.l.b16 %v2663
        %v3275 = vunpack.c.l.b16 %v2664
        %v3276 = vunpack.c.l.b16 %v2665
        %v3277 = vunpack.c.l.b16 %v2666
        %v3278 = vunpack.c.l.b16 %v2667
        %v3279 = vpack.c.b16 %v3232, %v3231
        %v3280 = vpack.c.b16 %v3234, %v3233
        %v3281 = vpack.c.b16 %v3236, %v3235
        %v3282 = vpack.c.b16 %v3238, %v3237
        %v3283 = vpack.c.b16 %v3240, %v3239
        %v3284 = vpack.c.b16 %v3242, %v3241
        %v3285 = vpack.c.b16 %v3244, %v3243
        %v3286 = vpack.c.b16 %v3246, %v3245
        %v3287 = vpack.c.b16 %v3248, %v3247
        %v3288 = vpack.c.b16 %v3250, %v3249
        %v3289 = vpack.c.b16 %v3252, %v3251
        %v3290 = vpack.c.b16 %v3254, %v3253
        %v3291 = vpack.c.b16 %v3256, %v3255
        %v3292 = vpack.c.b16 %v3258, %v3257
        %v3293 = vpack.c.b16 %v3260, %v3259
        %v3294 = vpack.c.b16 %v3262, %v3261
        %v3295 = vpack.c.b16 %v3264, %v3263
        %v3296 = vpack.c.b16 %v3266, %v3265
        %v3297 = vpack.c.b16 %v3268, %v3267
        %v3298 = vpack.c.b16 %v3270, %v3269
        %v3299 = vpack.c.b16 %v3272, %v3271
        %v3300 = vpack.c.b16 %v3274, %v3273
        %v3301 = vpack.c.b16 %v3276, %v3275
        %v3302 = vpack.c.b16 %v3278, %v3277
        %3327 = vmatprep.subr.bf16.mxu0 0
        %3328 = vmatpush1.bf16.msra.mxu0 %v3279
        %3329 = vmatprep.subr.bf16.mxu0 0
        %3330 = vmatpush1.bf16.msra.mxu0 %v3280
        %3331 = vmatprep.subr.bf16.mxu0 0
        %3332 = vmatpush1.bf16.msra.mxu0 %v3281
        %3333 = vmatprep.subr.bf16.mxu0 0
        %3334 = vmatpush1.bf16.msra.mxu0 %v3282
        %3335 = vmatprep.subr.bf16.mxu0 0
        %3336 = vmatpush1.bf16.msra.mxu0 %v3283
        %3337 = vmatprep.subr.bf16.mxu0 0
        %3338 = vmatpush1.bf16.msra.mxu0 %v3284
        %3339 = vmatprep.subr.bf16.mxu0 0
        %3340 = vmatpush1.bf16.msra.mxu0 %v3285
        %3341 = vmatprep.subr.bf16.mxu0 0
        %3342 = vmatpush1.bf16.msra.mxu0 %v3286
        %3343 = vmatprep.subr.bf16.mxu0 0
        %3344 = vmatpush1.bf16.msra.mxu0 %v3287
        %3345 = vmatprep.subr.bf16.mxu0 0
        %3346 = vmatpush1.bf16.msra.mxu0 %v3288
        %3347 = vmatprep.subr.bf16.mxu0 0
        %3348 = vmatpush1.bf16.msra.mxu0 %v3289
        %3349 = vmatprep.subr.bf16.mxu0 0
        %3350 = vmatpush1.bf16.msra.mxu0 %v3290
        %3351 = vmatprep.subr.bf16.mxu0 0
        %3352 = vmatpush1.bf16.msra.mxu0 %v3291
        %3353 = vmatprep.subr.bf16.mxu0 0
        %3354 = vmatpush1.bf16.msra.mxu0 %v3292
        %3355 = vmatprep.subr.bf16.mxu0 0
        %3356 = vmatpush1.bf16.msra.mxu0 %v3293
        %3357 = vmatprep.subr.bf16.mxu0 0
        %3358 = vmatpush1.bf16.msra.mxu0 %v3294
        %3359 = vmatprep.mubr.bf16.mxu0 %v2584
        %3360 = vmatmul.mubr.bf16.gmra.mrb[0].mxu0 %v2566
        %v3361 = vpop.f32.mrb[0].mxu0
        %v3362 = vadd.f32 %v3057, %v3361
        %v3363 = vpop.f32.mrb[0].mxu0
        %v3364 = vpop.f32.mrb[0].mxu0
        %v3365 = vadd.f32 %v3060, %v3364
        %v3366 = vpop.f32.mrb[0].mxu0
        %3367 = vmatprep.mubr.bf16.mxu0 %v2585
        %3368 = vmatmul.mubr.bf16.gmra.mrb[0].mxu0 %v2567
        %v3369 = vpop.f32.mrb[0].mxu0
        %v3370 = vadd.f32 %v3065, %v3369
        %v3371 = vpop.f32.mrb[0].mxu0
        %v3372 = vpop.f32.mrb[0].mxu0
        %v3373 = vadd.f32 %v3068, %v3372
        %v3374 = vpop.f32.mrb[0].mxu0
        %3375 = vmatprep.mubr.bf16.mxu0 %v2586
        %3376 = vmatmul.mubr.bf16.gmra.mrb[0].mxu0 %v2568
        %v3377 = vpop.f32.mrb[0].mxu0
        %v3378 = vadd.f32 %v3073, %v3377
        %v3379 = vpop.f32.mrb[0].mxu0
        %v3380 = vpop.f32.mrb[0].mxu0
        %v3381 = vadd.f32 %v3076, %v3380
        %v3382 = vpop.f32.mrb[0].mxu0
        %3383 = vmatprep.mubr.bf16.mxu0 %v2587
        %3384 = vmatmul.mubr.bf16.gmra.mrb[0].mxu0 %v2569
        %v3385 = vpop.f32.mrb[0].mxu0
        %v3386 = vadd.f32 %v3081, %v3385
        %v3387 = vpop.f32.mrb[0].mxu0
        %v3388 = vpop.f32.mrb[0].mxu0
        %v3389 = vadd.f32 %v3084, %v3388
        %v3390 = vpop.f32.mrb[0].mxu0
        %3391 = vmatprep.mubr.bf16.mxu0 %v2588
        %3392 = vmatmul.mubr.bf16.gmra.mrb[0].mxu0 %v2570
        %v3393 = vpop.f32.mrb[0].mxu0
        %v3394 = vadd.f32 %v3089, %v3393
        %v3395 = vpop.f32.mrb[0].mxu0
        %v3396 = vpop.f32.mrb[0].mxu0
        %v3397 = vadd.f32 %v3092, %v3396
        %v3398 = vpop.f32.mrb[0].mxu0
        %3399 = vmatprep.mubr.bf16.mxu0 %v2589
        %3400 = vmatmul.mubr.bf16.gmra.mrb[0].mxu0 %v2571
        %v3401 = vpop.f32.mrb[0].mxu0
        %v3402 = vadd.f32 %v3097, %v3401
        %v3403 = vpop.f32.mrb[0].mxu0
        %v3404 = vpop.f32.mrb[0].mxu0
        %v3405 = vadd.f32 %v3100, %v3404
        %v3406 = vpop.f32.mrb[0].mxu0
        %3407 = vmatprep.mubr.bf16.mxu0 %v2590
        %3408 = vmatmul.mubr.bf16.gmra.mrb[0].mxu0 %v2572
        %v3409 = vpop.f32.mrb[0].mxu0
        %v3410 = vadd.f32 %v3105, %v3409
        %v3411 = vpop.f32.mrb[0].mxu0
        %v3412 = vpop.f32.mrb[0].mxu0
        %v3413 = vadd.f32 %v3108, %v3412
        %v3414 = vpop.f32.mrb[0].mxu0
        %3415 = vmatprep.mubr.bf16.mxu0 %v2591
        %3416 = vmatmul.mubr.bf16.gmra.mrb[0].mxu0 %v2573
        %v3417 = vpop.f32.mrb[0].mxu0
        %v3418 = vadd.f32 %v3113, %v3417
        %v3419 = vpop.f32.mrb[0].mxu0
        %v3420 = vpop.f32.mrb[0].mxu0
        %v3421 = vadd.f32 %v3116, %v3420
        %v3422 = vpop.f32.mrb[0].mxu0
        %3423 = vmatprep.mubr.bf16.mxu0 %v2592
        %3424 = vmatmul.mubr.bf16.gmra.mrb[0].mxu0 %v2574
        %v3425 = vpop.f32.mrb[0].mxu0
        %v3426 = vadd.f32 %v3121, %v3425
        %v3427 = vpop.f32.mrb[0].mxu0
        %v3428 = vpop.f32.mrb[0].mxu0
        %v3429 = vadd.f32 %v3124, %v3428
        %v3430 = vpop.f32.mrb[0].mxu0
        %3431 = vmatprep.mubr.bf16.mxu0 %v2593
        %3432 = vmatmul.mubr.bf16.gmra.mrb[0].mxu0 %v2575
        %v3433 = vpop.f32.mrb[0].mxu0
        %v3434 = vadd.f32 %v3129, %v3433
        %v3435 = vpop.f32.mrb[0].mxu0
        %v3436 = vpop.f32.mrb[0].mxu0
        %v3437 = vadd.f32 %v3132, %v3436
        %v3438 = vpop.f32.mrb[0].mxu0
        %3439 = vmatprep.mubr.bf16.mxu0 %v2594
        %3440 = vmatmul.mubr.bf16.gmra.mrb[0].mxu0 %v2576
        %v3441 = vpop.f32.mrb[0].mxu0
        %v3442 = vadd.f32 %v3137, %v3441
        %v3443 = vpop.f32.mrb[0].mxu0
        %v3444 = vpop.f32.mrb[0].mxu0
        %v3445 = vadd.f32 %v3140, %v3444
        %v3446 = vpop.f32.mrb[0].mxu0
        %3447 = vmatprep.mubr.bf16.mxu0 %v2595
        %3448 = vmatmul.mubr.bf16.gmra.mrb[0].mxu0 %v2577
        %v3449 = vpop.f32.mrb[0].mxu0
        %v3450 = vadd.f32 %v3145, %v3449
        %v3451 = vpop.f32.mrb[0].mxu0
        %v3452 = vpop.f32.mrb[0].mxu0
        %v3453 = vadd.f32 %v3148, %v3452
        %v3454 = vpop.f32.mrb[0].mxu0
        %3455 = vmatprep.mubr.bf16.mxu0 %v2596
        %3456 = vmatmul.mubr.bf16.gmra.mrb[0].mxu0 %v2578
        %v3457 = vpop.f32.mrb[0].mxu0
        %v3458 = vadd.f32 %v3153, %v3457
        %v3459 = vpop.f32.mrb[0].mxu0
        %v3460 = vpop.f32.mrb[0].mxu0
        %v3461 = vadd.f32 %v3156, %v3460
        %v3462 = vpop.f32.mrb[0].mxu0
        %3463 = vmatprep.mubr.bf16.mxu0 %v2597
        %3464 = vmatmul.mubr.bf16.gmra.mrb[0].mxu0 %v2579
        %v3465 = vpop.f32.mrb[0].mxu0
        %v3466 = vadd.f32 %v3161, %v3465
        %v3467 = vpop.f32.mrb[0].mxu0
        %v3468 = vpop.f32.mrb[0].mxu0
        %v3469 = vadd.f32 %v3164, %v3468
        %v3470 = vpop.f32.mrb[0].mxu0
        %3471 = vmatprep.mubr.bf16.mxu0 %v2598
        %3472 = vmatmul.mubr.bf16.gmra.mrb[0].mxu0 %v2580
        %v3473 = vpop.f32.mrb[0].mxu0
        %v3474 = vadd.f32 %v3169, %v3473
        %v3475 = vpop.f32.mrb[0].mxu0
        %v3476 = vpop.f32.mrb[0].mxu0
        %v3477 = vadd.f32 %v3172, %v3476
        %v3478 = vpop.f32.mrb[0].mxu0
        %3479 = vmatprep.mubr.bf16.mxu0 %v2599
        %3480 = vmatmul.mubr.bf16.gmra.mrb[0].mxu0 %v2581
        %v3481 = vpop.f32.mrb[0].mxu0
        %v3482 = vadd.f32 %v3177, %v3481
        %v3483 = vpop.f32.mrb[0].mxu0
        %v3484 = vpop.f32.mrb[0].mxu0
        %v3485 = vadd.f32 %v3180, %v3484
        %v3486 = vpop.f32.mrb[0].mxu0
        %3487 = vdwg.mxu0
        %3488 = vmatprep.subr.bf16.mxu0 0
        %3489 = vmatpush1.bf16.msra.mxu0 %v3295
        %3490 = vmatprep.subr.bf16.mxu0 0
        %3491 = vmatpush1.bf16.msra.mxu0 %v3296
        %3492 = vmatprep.subr.bf16.mxu0 0
        %3493 = vmatpush1.bf16.msra.mxu0 %v3297
        %3494 = vmatprep.subr.bf16.mxu0 0
        %3495 = vmatpush1.bf16.msra.mxu0 %v3298
        %3496 = vmatprep.subr.bf16.mxu0 0
        %3497 = vmatpush1.bf16.msra.mxu0 %v3299
        %3498 = vmatprep.subr.bf16.mxu0 0
        %3499 = vmatpush1.bf16.msra.mxu0 %v3300
        %3500 = vmatprep.subr.bf16.mxu0 0
        %3501 = vmatpush1.bf16.msra.mxu0 %v3301
        %3502 = vmatprep.subr.bf16.mxu0 0
        %3503 = vmatpush1.bf16.msra.mxu0 %v3302
        %3504 = vmatprep.subr.bf16.mxu0 0
        %3505 = vmatpush1.bf16.msra.mxu0 0
        %3506 = vmatprep.subr.bf16.mxu0 0
        %3507 = vmatpush1.bf16.msra.mxu0 0
        %3508 = vmatprep.subr.bf16.mxu0 0
        %3509 = vmatpush1.bf16.msra.mxu0 0
        %3510 = vmatprep.subr.bf16.mxu0 0
        %3511 = vmatpush1.bf16.msra.mxu0 0
        %3512 = vmatprep.subr.bf16.mxu0 0
        %3513 = vmatpush1.bf16.msra.mxu0 0
        %3514 = vmatprep.subr.bf16.mxu0 0
        %3515 = vmatpush1.bf16.msra.mxu0 0
        %3516 = vmatprep.subr.bf16.mxu0 0
        %3517 = vmatpush1.bf16.msra.mxu0 0
        %3518 = vmatprep.subr.bf16.mxu0 0
        %3519 = vmatpush1.bf16.msra.mxu0 0
        %3520 = vmatprep.mubr.bf16.mxu0 0
        %3521 = vmatmul.mubr.bf16.gmra.mrb[0].mxu0 %v2602
        %v3522 = vpop.f32.mrb[0].mxu0
        %v3523 = vadd.f32 %v3362, %v3522
        %v3524 = vpop.f32.mrb[0].mxu0
        %v3525 = vpop.f32.mrb[0].mxu0
        %v3526 = vadd.f32 %v3365, %v3525
        %v3527 = vpop.f32.mrb[0].mxu0
        %3528 = vmatprep.mubr.bf16.mxu0 0
        %3529 = vmatmul.mubr.bf16.gmra.mrb[0].mxu0 %v2603
        %v3530 = vpop.f32.mrb[0].mxu0
        %v3531 = vadd.f32 %v3370, %v3530
        %v3532 = vpop.f32.mrb[0].mxu0
        %v3533 = vpop.f32.mrb[0].mxu0
        %v3534 = vadd.f32 %v3373, %v3533
        %v3535 = vpop.f32.mrb[0].mxu0
        %3536 = vmatprep.mubr.bf16.mxu0 0
        %3537 = vmatmul.mubr.bf16.gmra.mrb[0].mxu0 %v2604
        %v3538 = vpop.f32.mrb[0].mxu0
        %v3539 = vadd.f32 %v3378, %v3538
        %v3540 = vpop.f32.mrb[0].mxu0
        %v3541 = vpop.f32.mrb[0].mxu0
        %v3542 = vadd.f32 %v3381, %v3541
        %v3543 = vpop.f32.mrb[0].mxu0
        %3544 = vmatprep.mubr.bf16.mxu0 0
        %3545 = vmatmul.mubr.bf16.gmra.mrb[0].mxu0 %v2605
        %v3546 = vpop.f32.mrb[0].mxu0
        %v3547 = vadd.f32 %v3386, %v3546
        %v3548 = vpop.f32.mrb[0].mxu0
        %v3549 = vpop.f32.mrb[0].mxu0
        %v3550 = vadd.f32 %v3389, %v3549
        %v3551 = vpop.f32.mrb[0].mxu0
        %3552 = vmatprep.mubr.bf16.mxu0 0
        %3553 = vmatmul.mubr.bf16.gmra.mrb[0].mxu0 %v2606
        %v3554 = vpop.f32.mrb[0].mxu0
        %v3555 = vadd.f32 %v3394, %v3554
        %v3556 = vpop.f32.mrb[0].mxu0
        %v3557 = vpop.f32.mrb[0].mxu0
        %v3558 = vadd.f32 %v3397, %v3557
        %v3559 = vpop.f32.mrb[0].mxu0
        %3560 = vmatprep.mubr.bf16.mxu0 0
        %3561 = vmatmul.mubr.bf16.gmra.mrb[0].mxu0 %v2607
        %v3562 = vpop.f32.mrb[0].mxu0
        %v3563 = vadd.f32 %v3402, %v3562
        %v3564 = vpop.f32.mrb[0].mxu0
        %v3565 = vpop.f32.mrb[0].mxu0
        %v3566 = vadd.f32 %v3405, %v3565
        %v3567 = vpop.f32.mrb[0].mxu0
        %3568 = vmatprep.mubr.bf16.mxu0 0
        %3569 = vmatmul.mubr.bf16.gmra.mrb[0].mxu0 %v2608
        %v3570 = vpop.f32.mrb[0].mxu0
        %v3571 = vadd.f32 %v3410, %v3570
        %v3572 = vpop.f32.mrb[0].mxu0
        %v3573 = vpop.f32.mrb[0].mxu0
        %v3574 = vadd.f32 %v3413, %v3573
        %v3575 = vpop.f32.mrb[0].mxu0
        %3576 = vmatprep.mubr.bf16.mxu0 0
        %3577 = vmatmul.mubr.bf16.gmra.mrb[0].mxu0 %v2609
        %v3578 = vpop.f32.mrb[0].mxu0
        %v3579 = vadd.f32 %v3418, %v3578
        %v3580 = vpop.f32.mrb[0].mxu0
        %v3581 = vpop.f32.mrb[0].mxu0
        %v3582 = vadd.f32 %v3421, %v3581
        %v3583 = vpop.f32.mrb[0].mxu0
        %3584 = vmatprep.mubr.bf16.mxu0 0
        %3585 = vmatmul.mubr.bf16.gmra.mrb[0].mxu0 %v2610
        %v3586 = vpop.f32.mrb[0].mxu0
        %v3587 = vadd.f32 %v3426, %v3586
        %v3588 = vpop.f32.mrb[0].mxu0
        %v3589 = vpop.f32.mrb[0].mxu0
        %v3590 = vadd.f32 %v3429, %v3589
        %v3591 = vpop.f32.mrb[0].mxu0
        %3592 = vmatprep.mubr.bf16.mxu0 0
        %3593 = vmatmul.mubr.bf16.gmra.mrb[0].mxu0 %v2611
        %v3594 = vpop.f32.mrb[0].mxu0
        %v3595 = vadd.f32 %v3434, %v3594
        %v3596 = vpop.f32.mrb[0].mxu0
        %v3597 = vpop.f32.mrb[0].mxu0
        %v3598 = vadd.f32 %v3437, %v3597
        %v3599 = vpop.f32.mrb[0].mxu0
        %3600 = vmatprep.mubr.bf16.mxu0 0
        %3601 = vmatmul.mubr.bf16.gmra.mrb[0].mxu0 %v2612
        %v3602 = vpop.f32.mrb[0].mxu0
        %v3603 = vadd.f32 %v3442, %v3602
        %v3604 = vpop.f32.mrb[0].mxu0
        %v3605 = vpop.f32.mrb[0].mxu0
        %v3606 = vadd.f32 %v3445, %v3605
        %v3607 = vpop.f32.mrb[0].mxu0
        %3608 = vmatprep.mubr.bf16.mxu0 0
        %3609 = vmatmul.mubr.bf16.gmra.mrb[0].mxu0 %v2613
        %v3610 = vpop.f32.mrb[0].mxu0
        %v3611 = vadd.f32 %v3450, %v3610
        %v3612 = vpop.f32.mrb[0].mxu0
        %v3613 = vpop.f32.mrb[0].mxu0
        %v3614 = vadd.f32 %v3453, %v3613
        %v3615 = vpop.f32.mrb[0].mxu0
        %3616 = vmatprep.mubr.bf16.mxu0 0
        %3617 = vmatmul.mubr.bf16.gmra.mrb[0].mxu0 %v2614
        %v3618 = vpop.f32.mrb[0].mxu0
        %v3619 = vadd.f32 %v3458, %v3618
        %v3620 = vpop.f32.mrb[0].mxu0
        %v3621 = vpop.f32.mrb[0].mxu0
        %v3622 = vadd.f32 %v3461, %v3621
        %v3623 = vpop.f32.mrb[0].mxu0
        %3624 = vmatprep.mubr.bf16.mxu0 0
        %3625 = vmatmul.mubr.bf16.gmra.mrb[0].mxu0 %v2615
        %v3626 = vpop.f32.mrb[0].mxu0
        %v3627 = vadd.f32 %v3466, %v3626
        %v3628 = vpop.f32.mrb[0].mxu0
        %v3629 = vpop.f32.mrb[0].mxu0
        %v3630 = vadd.f32 %v3469, %v3629
        %v3631 = vpop.f32.mrb[0].mxu0
        %3632 = vmatprep.mubr.bf16.mxu0 0
        %3633 = vmatmul.mubr.bf16.gmra.mrb[0].mxu0 %v2616
        %v3634 = vpop.f32.mrb[0].mxu0
        %v3635 = vadd.f32 %v3474, %v3634
        %v3636 = vpop.f32.mrb[0].mxu0
        %v3637 = vpop.f32.mrb[0].mxu0
        %v3638 = vadd.f32 %v3477, %v3637
        %v3639 = vpop.f32.mrb[0].mxu0
        %3640 = vmatprep.mubr.bf16.mxu0 0
        %3641 = vmatmul.mubr.bf16.gmra.mrb[0].mxu0 %v2617
        %v3642 = vpop.f32.mrb[0].mxu0
        %v3643 = vadd.f32 %v3482, %v3642
        %v3644 = vpop.f32.mrb[0].mxu0
        %v3645 = vpop.f32.mrb[0].mxu0
        %v3646 = vadd.f32 %v3485, %v3645
        %v3647 = vpop.f32.mrb[0].mxu0
        %3648 = vdwg.mxu0
        %s3649 = scalar_lea.vmem [#allocation13], 384
        %v3650 = vld [vmem:[%s3649] sm:$0xf]
        %v3651 = vld [vmem:[%s3649 + $0x4] sm:$0xf]
        %v3652 = vld [vmem:[%s3649 + $0x8] sm:$0xf]
        %v3653 = vld [vmem:[%s3649 + $0xc] sm:$0xf]
        %v3654 = vld [vmem:[%s3649 + $0x10] sm:$0xf]
        %v3655 = vld [vmem:[%s3649 + $0x14] sm:$0xf]
        %v3656 = vld [vmem:[%s3649 + $0x18] sm:$0xf]
        %v3657 = vld [vmem:[%s3649 + $0x1c] sm:$0xf]
        %v3658 = vld [vmem:[%s3649 + $0x20] sm:$0xf]
        %v3659 = vld [vmem:[%s3649 + $0x24] sm:$0xf]
        %v3660 = vld [vmem:[%s3649 + $0x28] sm:$0xf]
        %v3661 = vld [vmem:[%s3649 + $0x2c] sm:$0xf]
        %v3662 = vld [vmem:[%s3649 + $0x30] sm:$0xf]
        %v3663 = vld [vmem:[%s3649 + $0x34] sm:$0xf]
        %v3664 = vld [vmem:[%s3649 + $0x38] sm:$0xf]
        %v3665 = vld [vmem:[%s3649 + $0x3c] sm:$0xf]
        %v3666 = vld [vmem:[%s3649 + $0x40] sm:$0xf]
        %v3667 = vld [vmem:[%s3649 + $0x44] sm:$0xf]
        %v3668 = vld [vmem:[%s3649 + $0x48] sm:$0xf]
        %v3669 = vld [vmem:[%s3649 + $0x4c] sm:$0xf]
        %v3670 = vld [vmem:[%s3649 + $0x50] sm:$0xf]
        %v3671 = vld [vmem:[%s3649 + $0x54] sm:$0xf]
        %v3672 = vld [vmem:[%s3649 + $0x58] sm:$0xf]
        %v3673 = vld [vmem:[%s3649 + $0x5c] sm:$0xf]
        %v3674 = vld [vmem:[%s3649 + $0x60] sm:$0xf]
        %v3675 = vld [vmem:[%s3649 + $0x64] sm:$0xf]
        %v3676 = vld [vmem:[%s3649 + $0x68] sm:$0xf]
        %v3677 = vld [vmem:[%s3649 + $0x6c] sm:$0xf]
        %v3678 = vld [vmem:[%s3649 + $0x70] sm:$0xf]
        %v3679 = vld [vmem:[%s3649 + $0x74] sm:$0xf]
        %v3680 = vld [vmem:[%s3649 + $0x78] sm:$0xf]
        %v3681 = vld [vmem:[%s3649 + $0x7c] sm:$0xf]
        %v3682 = vld [vmem:[%s3649 + $0x80] sm:$0xf]
        %v3683 = vld [vmem:[%s3649 + $0x84] sm:$0xf]
        %v3684 = vld [vmem:[%s3649 + $0x88] sm:$0xf]
        %v3685 = vld [vmem:[%s3649 + $0x8c] sm:$0xf]
        %v3686 = vld [vmem:[%s3649 + $0x90] sm:$0xf]
        %v3687 = vld [vmem:[%s3649 + $0x94] sm:$0xf]
        %v3688 = vld [vmem:[%s3649 + $0x98] sm:$0xf]
        %v3689 = vld [vmem:[%s3649 + $0x9c] sm:$0xf]
        %v3690 = vld [vmem:[%s3649 + $0xa0] sm:$0xf]
        %v3691 = vld [vmem:[%s3649 + $0xa4] sm:$0xf]
        %v3692 = vld [vmem:[%s3649 + $0xa8] sm:$0xf]
        %v3693 = vld [vmem:[%s3649 + $0xac] sm:$0xf]
        %v3694 = vld [vmem:[%s3649 + $0xb0] sm:$0xf]
        %v3695 = vld [vmem:[%s3649 + $0xb4] sm:$0xf]
        %v3696 = vld [vmem:[%s3649 + $0xb8] sm:$0xf]
        %v3697 = vld [vmem:[%s3649 + $0xbc] sm:$0xf]
        %v3746 = vunpack.c.l.b16 %v3650
        %v3747 = vunpack.c.l.b16 %v3651
        %v3748 = vunpack.c.l.b16 %v3652
        %v3749 = vunpack.c.l.b16 %v3653
        %v3750 = vunpack.c.l.b16 %v3654
        %v3751 = vunpack.c.l.b16 %v3655
        %v3752 = vunpack.c.l.b16 %v3656
        %v3753 = vunpack.c.l.b16 %v3657
        %v3754 = vunpack.c.l.b16 %v3658
        %v3755 = vunpack.c.l.b16 %v3659
        %v3756 = vunpack.c.l.b16 %v3660
        %v3757 = vunpack.c.l.b16 %v3661
        %v3758 = vunpack.c.l.b16 %v3662
        %v3759 = vunpack.c.l.b16 %v3663
        %v3760 = vunpack.c.l.b16 %v3664
        %v3761 = vunpack.c.l.b16 %v3665
        %v3762 = vunpack.c.l.b16 %v3666
        %v3763 = vunpack.c.l.b16 %v3667
        %v3764 = vunpack.c.l.b16 %v3668
        %v3765 = vunpack.c.l.b16 %v3669
        %v3766 = vunpack.c.l.b16 %v3670
        %v3767 = vunpack.c.l.b16 %v3671
        %v3768 = vunpack.c.l.b16 %v3672
        %v3769 = vunpack.c.l.b16 %v3673
        %v3770 = vunpack.c.l.b16 %v3674
        %v3771 = vunpack.c.l.b16 %v3675
        %v3772 = vunpack.c.l.b16 %v3676
        %v3773 = vunpack.c.l.b16 %v3677
        %v3774 = vunpack.c.l.b16 %v3678
        %v3775 = vunpack.c.l.b16 %v3679
        %v3776 = vunpack.c.l.b16 %v3680
        %v3777 = vunpack.c.l.b16 %v3681
        %v3778 = vunpack.c.l.b16 %v3682
        %v3779 = vunpack.c.l.b16 %v3683
        %v3780 = vunpack.c.l.b16 %v3684
        %v3781 = vunpack.c.l.b16 %v3685
        %v3782 = vunpack.c.l.b16 %v3686
        %v3783 = vunpack.c.l.b16 %v3687
        %v3784 = vunpack.c.l.b16 %v3688
        %v3785 = vunpack.c.l.b16 %v3689
        %v3786 = vunpack.c.l.b16 %v3690
        %v3787 = vunpack.c.l.b16 %v3691
        %v3788 = vunpack.c.l.b16 %v3692
        %v3789 = vunpack.c.l.b16 %v3693
        %v3790 = vunpack.c.l.b16 %v3694
        %v3791 = vunpack.c.l.b16 %v3695
        %v3792 = vunpack.c.l.b16 %v3696
        %v3793 = vunpack.c.l.b16 %v3697
        %v3794 = vpack.c.b16 %v3747, %v3746
        %v3795 = vpack.c.b16 %v3749, %v3748
        %v3796 = vpack.c.b16 %v3751, %v3750
        %v3797 = vpack.c.b16 %v3753, %v3752
        %v3798 = vpack.c.b16 %v3755, %v3754
        %v3799 = vpack.c.b16 %v3757, %v3756
        %v3800 = vpack.c.b16 %v3759, %v3758
        %v3801 = vpack.c.b16 %v3761, %v3760
        %v3802 = vpack.c.b16 %v3763, %v3762
        %v3803 = vpack.c.b16 %v3765, %v3764
        %v3804 = vpack.c.b16 %v3767, %v3766
        %v3805 = vpack.c.b16 %v3769, %v3768
        %v3806 = vpack.c.b16 %v3771, %v3770
        %v3807 = vpack.c.b16 %v3773, %v3772
        %v3808 = vpack.c.b16 %v3775, %v3774
        %v3809 = vpack.c.b16 %v3777, %v3776
        %v3810 = vpack.c.b16 %v3779, %v3778
        %v3811 = vpack.c.b16 %v3781, %v3780
        %v3812 = vpack.c.b16 %v3783, %v3782
        %v3813 = vpack.c.b16 %v3785, %v3784
        %v3814 = vpack.c.b16 %v3787, %v3786
        %v3815 = vpack.c.b16 %v3789, %v3788
        %v3816 = vpack.c.b16 %v3791, %v3790
        %v3817 = vpack.c.b16 %v3793, %v3792
        %3842 = vmatprep.subr.bf16.mxu0 0
        %3843 = vmatpush1.bf16.msra.mxu0 %v3794
        %3844 = vmatprep.subr.bf16.mxu0 0
        %3845 = vmatpush1.bf16.msra.mxu0 %v3795
        %3846 = vmatprep.subr.bf16.mxu0 0
        %3847 = vmatpush1.bf16.msra.mxu0 %v3796
        %3848 = vmatprep.subr.bf16.mxu0 0
        %3849 = vmatpush1.bf16.msra.mxu0 %v3797
        %3850 = vmatprep.subr.bf16.mxu0 0
        %3851 = vmatpush1.bf16.msra.mxu0 %v3798
        %3852 = vmatprep.subr.bf16.mxu0 0
        %3853 = vmatpush1.bf16.msra.mxu0 %v3799
        %3854 = vmatprep.subr.bf16.mxu0 0
        %3855 = vmatpush1.bf16.msra.mxu0 %v3800
        %3856 = vmatprep.subr.bf16.mxu0 0
        %3857 = vmatpush1.bf16.msra.mxu0 %v3801
        %3858 = vmatprep.subr.bf16.mxu0 0
        %3859 = vmatpush1.bf16.msra.mxu0 %v3802
        %3860 = vmatprep.subr.bf16.mxu0 0
        %3861 = vmatpush1.bf16.msra.mxu0 %v3803
        %3862 = vmatprep.subr.bf16.mxu0 0
        %3863 = vmatpush1.bf16.msra.mxu0 %v3804
        %3864 = vmatprep.subr.bf16.mxu0 0
        %3865 = vmatpush1.bf16.msra.mxu0 %v3805
        %3866 = vmatprep.subr.bf16.mxu0 0
        %3867 = vmatpush1.bf16.msra.mxu0 %v3806
        %3868 = vmatprep.subr.bf16.mxu0 0
        %3869 = vmatpush1.bf16.msra.mxu0 %v3807
        %3870 = vmatprep.subr.bf16.mxu0 0
        %3871 = vmatpush1.bf16.msra.mxu0 %v3808
        %3872 = vmatprep.subr.bf16.mxu0 0
        %3873 = vmatpush1.bf16.msra.mxu0 %v3809
        %3874 = vmatprep.mubr.bf16.mxu0 %v2586
        %3875 = vmatmul.mubr.bf16.gmra.mrb[0].mxu0 %v2568
        %v3876 = vpop.f32.mrb[0].mxu0
        %v3877 = vadd.f32 0.0, %v3876
        %v3878 = vpop.f32.mrb[0].mxu0
        %v3879 = vpop.f32.mrb[0].mxu0
        %v3880 = vadd.f32 0.0, %v3879
        %v3881 = vpop.f32.mrb[0].mxu0
        %3882 = vmatprep.mubr.bf16.mxu0 %v2587
        %3883 = vmatmul.mubr.bf16.gmra.mrb[0].mxu0 %v2569
        %v3884 = vpop.f32.mrb[0].mxu0
        %v3885 = vadd.f32 0.0, %v3884
        %v3886 = vpop.f32.mrb[0].mxu0
        %v3887 = vpop.f32.mrb[0].mxu0
        %v3888 = vadd.f32 0.0, %v3887
        %v3889 = vpop.f32.mrb[0].mxu0
        %3890 = vmatprep.mubr.bf16.mxu0 %v2588
        %3891 = vmatmul.mubr.bf16.gmra.mrb[0].mxu0 %v2570
        %v3892 = vpop.f32.mrb[0].mxu0
        %v3893 = vadd.f32 0.0, %v3892
        %v3894 = vpop.f32.mrb[0].mxu0
        %v3895 = vpop.f32.mrb[0].mxu0
        %v3896 = vadd.f32 0.0, %v3895
        %v3897 = vpop.f32.mrb[0].mxu0
        %3898 = vmatprep.mubr.bf16.mxu0 %v2589
        %3899 = vmatmul.mubr.bf16.gmra.mrb[0].mxu0 %v2571
        %v3900 = vpop.f32.mrb[0].mxu0
        %v3901 = vadd.f32 0.0, %v3900
        %v3902 = vpop.f32.mrb[0].mxu0
        %v3903 = vpop.f32.mrb[0].mxu0
        %v3904 = vadd.f32 0.0, %v3903
        %v3905 = vpop.f32.mrb[0].mxu0
        %3906 = vmatprep.mubr.bf16.mxu0 %v2590
        %3907 = vmatmul.mubr.bf16.gmra.mrb[0].mxu0 %v2572
        %v3908 = vpop.f32.mrb[0].mxu0
        %v3909 = vadd.f32 0.0, %v3908
        %v3910 = vpop.f32.mrb[0].mxu0
        %v3911 = vpop.f32.mrb[0].mxu0
        %v3912 = vadd.f32 0.0, %v3911
        %v3913 = vpop.f32.mrb[0].mxu0
        %3914 = vmatprep.mubr.bf16.mxu0 %v2591
        %3915 = vmatmul.mubr.bf16.gmra.mrb[0].mxu0 %v2573
        %v3916 = vpop.f32.mrb[0].mxu0
        %v3917 = vadd.f32 0.0, %v3916
        %v3918 = vpop.f32.mrb[0].mxu0
        %v3919 = vpop.f32.mrb[0].mxu0
        %v3920 = vadd.f32 0.0, %v3919
        %v3921 = vpop.f32.mrb[0].mxu0
        %3922 = vmatprep.mubr.bf16.mxu0 %v2592
        %3923 = vmatmul.mubr.bf16.gmra.mrb[0].mxu0 %v2574
        %v3924 = vpop.f32.mrb[0].mxu0
        %v3925 = vadd.f32 0.0, %v3924
        %v3926 = vpop.f32.mrb[0].mxu0
        %v3927 = vpop.f32.mrb[0].mxu0
        %v3928 = vadd.f32 0.0, %v3927
        %v3929 = vpop.f32.mrb[0].mxu0
        %3930 = vmatprep.mubr.bf16.mxu0 %v2593
        %3931 = vmatmul.mubr.bf16.gmra.mrb[0].mxu0 %v2575
        %v3932 = vpop.f32.mrb[0].mxu0
        %v3933 = vadd.f32 0.0, %v3932
        %v3934 = vpop.f32.mrb[0].mxu0
        %v3935 = vpop.f32.mrb[0].mxu0
        %v3936 = vadd.f32 0.0, %v3935
        %v3937 = vpop.f32.mrb[0].mxu0
        %3938 = vmatprep.mubr.bf16.mxu0 %v2594
        %3939 = vmatmul.mubr.bf16.gmra.mrb[0].mxu0 %v2576
        %v3940 = vpop.f32.mrb[0].mxu0
        %v3941 = vadd.f32 0.0, %v3940
        %v3942 = vpop.f32.mrb[0].mxu0
        %v3943 = vpop.f32.mrb[0].mxu0
        %v3944 = vadd.f32 0.0, %v3943
        %v3945 = vpop.f32.mrb[0].mxu0
        %3946 = vmatprep.mubr.bf16.mxu0 %v2595
        %3947 = vmatmul.mubr.bf16.gmra.mrb[0].mxu0 %v2577
        %v3948 = vpop.f32.mrb[0].mxu0
        %v3949 = vadd.f32 0.0, %v3948
        %v3950 = vpop.f32.mrb[0].mxu0
        %v3951 = vpop.f32.mrb[0].mxu0
        %v3952 = vadd.f32 0.0, %v3951
        %v3953 = vpop.f32.mrb[0].mxu0
        %3954 = vmatprep.mubr.bf16.mxu0 %v2596
        %3955 = vmatmul.mubr.bf16.gmra.mrb[0].mxu0 %v2578
        %v3956 = vpop.f32.mrb[0].mxu0
        %v3957 = vadd.f32 0.0, %v3956
        %v3958 = vpop.f32.mrb[0].mxu0
        %v3959 = vpop.f32.mrb[0].mxu0
        %v3960 = vadd.f32 0.0, %v3959
        %v3961 = vpop.f32.mrb[0].mxu0
        %3962 = vmatprep.mubr.bf16.mxu0 %v2597
        %3963 = vmatmul.mubr.bf16.gmra.mrb[0].mxu0 %v2579
        %v3964 = vpop.f32.mrb[0].mxu0
        %v3965 = vadd.f32 0.0, %v3964
        %v3966 = vpop.f32.mrb[0].mxu0
        %v3967 = vpop.f32.mrb[0].mxu0
        %v3968 = vadd.f32 0.0, %v3967
        %v3969 = vpop.f32.mrb[0].mxu0
        %3970 = vmatprep.mubr.bf16.mxu0 %v2598
        %3971 = vmatmul.mubr.bf16.gmra.mrb[0].mxu0 %v2580
        %v3972 = vpop.f32.mrb[0].mxu0
        %v3973 = vadd.f32 0.0, %v3972
        %v3974 = vpop.f32.mrb[0].mxu0
        %v3975 = vpop.f32.mrb[0].mxu0
        %v3976 = vadd.f32 0.0, %v3975
        %v3977 = vpop.f32.mrb[0].mxu0
        %3978 = vmatprep.mubr.bf16.mxu0 %v2599
        %3979 = vmatmul.mubr.bf16.gmra.mrb[0].mxu0 %v2581
        %v3980 = vpop.f32.mrb[0].mxu0
        %v3981 = vadd.f32 0.0, %v3980
        %v3982 = vpop.f32.mrb[0].mxu0
        %v3983 = vpop.f32.mrb[0].mxu0
        %v3984 = vadd.f32 0.0, %v3983
        %v3985 = vpop.f32.mrb[0].mxu0
        %3986 = vmatprep.mubr.bf16.mxu0 %v2600
        %3987 = vmatmul.mubr.bf16.gmra.mrb[0].mxu0 %v2582
        %v3988 = vpop.f32.mrb[0].mxu0
        %v3989 = vadd.f32 0.0, %v3988
        %v3990 = vpop.f32.mrb[0].mxu0
        %v3991 = vpop.f32.mrb[0].mxu0
        %v3992 = vadd.f32 0.0, %v3991
        %v3993 = vpop.f32.mrb[0].mxu0
        %3994 = vmatprep.mubr.bf16.mxu0 %v2601
        %3995 = vmatmul.mubr.bf16.gmra.mrb[0].mxu0 %v2583
        %v3996 = vpop.f32.mrb[0].mxu0
        %v3997 = vadd.f32 0.0, %v3996
        %v3998 = vpop.f32.mrb[0].mxu0
        %v3999 = vpop.f32.mrb[0].mxu0
        %v4000 = vadd.f32 0.0, %v3999
        %v4001 = vpop.f32.mrb[0].mxu0
        %4002 = vdwg.mxu0
        %4003 = vmatprep.subr.bf16.mxu0 0
        %4004 = vmatpush1.bf16.msra.mxu0 %v3810
        %4005 = vmatprep.subr.bf16.mxu0 0
        %4006 = vmatpush1.bf16.msra.mxu0 %v3811
        %4007 = vmatprep.subr.bf16.mxu0 0
        %4008 = vmatpush1.bf16.msra.mxu0 %v3812
        %4009 = vmatprep.subr.bf16.mxu0 0
        %4010 = vmatpush1.bf16.msra.mxu0 %v3813
        %4011 = vmatprep.subr.bf16.mxu0 0
        %4012 = vmatpush1.bf16.msra.mxu0 %v3814
        %4013 = vmatprep.subr.bf16.mxu0 0
        %4014 = vmatpush1.bf16.msra.mxu0 %v3815
        %4015 = vmatprep.subr.bf16.mxu0 0
        %4016 = vmatpush1.bf16.msra.mxu0 %v3816
        %4017 = vmatprep.subr.bf16.mxu0 0
        %4018 = vmatpush1.bf16.msra.mxu0 %v3817
        %4019 = vmatprep.subr.bf16.mxu0 0
        %4020 = vmatpush1.bf16.msra.mxu0 0
        %4021 = vmatprep.subr.bf16.mxu0 0
        %4022 = vmatpush1.bf16.msra.mxu0 0
        %4023 = vmatprep.subr.bf16.mxu0 0
        %4024 = vmatpush1.bf16.msra.mxu0 0
        %4025 = vmatprep.subr.bf16.mxu0 0
        %4026 = vmatpush1.bf16.msra.mxu0 0
        %4027 = vmatprep.subr.bf16.mxu0 0
        %4028 = vmatpush1.bf16.msra.mxu0 0
        %4029 = vmatprep.subr.bf16.mxu0 0
        %4030 = vmatpush1.bf16.msra.mxu0 0
        %4031 = vmatprep.subr.bf16.mxu0 0
        %4032 = vmatpush1.bf16.msra.mxu0 0
        %4033 = vmatprep.subr.bf16.mxu0 0
        %4034 = vmatpush1.bf16.msra.mxu0 0
        %4035 = vmatprep.mubr.bf16.mxu0 0
        %4036 = vmatmul.mubr.bf16.gmra.mrb[0].mxu0 %v2604
        %v4037 = vpop.f32.mrb[0].mxu0
        %v4038 = vadd.f32 %v3877, %v4037
        %v4039 = vpop.f32.mrb[0].mxu0
        %v4040 = vpop.f32.mrb[0].mxu0
        %v4041 = vadd.f32 %v3880, %v4040
        %v4042 = vpop.f32.mrb[0].mxu0
        %4043 = vmatprep.mubr.bf16.mxu0 0
        %4044 = vmatmul.mubr.bf16.gmra.mrb[0].mxu0 %v2605
        %v4045 = vpop.f32.mrb[0].mxu0
        %v4046 = vadd.f32 %v3885, %v4045
        %v4047 = vpop.f32.mrb[0].mxu0
        %v4048 = vpop.f32.mrb[0].mxu0
        %v4049 = vadd.f32 %v3888, %v4048
        %v4050 = vpop.f32.mrb[0].mxu0
        %4051 = vmatprep.mubr.bf16.mxu0 0
        %4052 = vmatmul.mubr.bf16.gmra.mrb[0].mxu0 %v2606
        %v4053 = vpop.f32.mrb[0].mxu0
        %v4054 = vadd.f32 %v3893, %v4053
        %v4055 = vpop.f32.mrb[0].mxu0
        %v4056 = vpop.f32.mrb[0].mxu0
        %v4057 = vadd.f32 %v3896, %v4056
        %v4058 = vpop.f32.mrb[0].mxu0
        %4059 = vmatprep.mubr.bf16.mxu0 0
        %4060 = vmatmul.mubr.bf16.gmra.mrb[0].mxu0 %v2607
        %v4061 = vpop.f32.mrb[0].mxu0
        %v4062 = vadd.f32 %v3901, %v4061
        %v4063 = vpop.f32.mrb[0].mxu0
        %v4064 = vpop.f32.mrb[0].mxu0
        %v4065 = vadd.f32 %v3904, %v4064
        %v4066 = vpop.f32.mrb[0].mxu0
        %4067 = vmatprep.mubr.bf16.mxu0 0
        %4068 = vmatmul.mubr.bf16.gmra.mrb[0].mxu0 %v2608
        %v4069 = vpop.f32.mrb[0].mxu0
        %v4070 = vadd.f32 %v3909, %v4069
        %v4071 = vpop.f32.mrb[0].mxu0
        %v4072 = vpop.f32.mrb[0].mxu0
        %v4073 = vadd.f32 %v3912, %v4072
        %v4074 = vpop.f32.mrb[0].mxu0
        %4075 = vmatprep.mubr.bf16.mxu0 0
        %4076 = vmatmul.mubr.bf16.gmra.mrb[0].mxu0 %v2609
        %v4077 = vpop.f32.mrb[0].mxu0
        %v4078 = vadd.f32 %v3917, %v4077
        %v4079 = vpop.f32.mrb[0].mxu0
        %v4080 = vpop.f32.mrb[0].mxu0
        %v4081 = vadd.f32 %v3920, %v4080
        %v4082 = vpop.f32.mrb[0].mxu0
        %4083 = vmatprep.mubr.bf16.mxu0 0
        %4084 = vmatmul.mubr.bf16.gmra.mrb[0].mxu0 %v2610
        %v4085 = vpop.f32.mrb[0].mxu0
        %v4086 = vadd.f32 %v3925, %v4085
        %v4087 = vpop.f32.mrb[0].mxu0
        %v4088 = vpop.f32.mrb[0].mxu0
        %v4089 = vadd.f32 %v3928, %v4088
        %v4090 = vpop.f32.mrb[0].mxu0
        %4091 = vmatprep.mubr.bf16.mxu0 0
        %4092 = vmatmul.mubr.bf16.gmra.mrb[0].mxu0 %v2611
        %v4093 = vpop.f32.mrb[0].mxu0
        %v4094 = vadd.f32 %v3933, %v4093
        %v4095 = vpop.f32.mrb[0].mxu0
        %v4096 = vpop.f32.mrb[0].mxu0
        %v4097 = vadd.f32 %v3936, %v4096
        %v4098 = vpop.f32.mrb[0].mxu0
        %4099 = vmatprep.mubr.bf16.mxu0 0
        %4100 = vmatmul.mubr.bf16.gmra.mrb[0].mxu0 %v2612
        %v4101 = vpop.f32.mrb[0].mxu0
        %v4102 = vadd.f32 %v3941, %v4101
        %v4103 = vpop.f32.mrb[0].mxu0
        %v4104 = vpop.f32.mrb[0].mxu0
        %v4105 = vadd.f32 %v3944, %v4104
        %v4106 = vpop.f32.mrb[0].mxu0
        %4107 = vmatprep.mubr.bf16.mxu0 0
        %4108 = vmatmul.mubr.bf16.gmra.mrb[0].mxu0 %v2613
        %v4109 = vpop.f32.mrb[0].mxu0
        %v4110 = vadd.f32 %v3949, %v4109
        %v4111 = vpop.f32.mrb[0].mxu0
        %v4112 = vpop.f32.mrb[0].mxu0
        %v4113 = vadd.f32 %v3952, %v4112
        %v4114 = vpop.f32.mrb[0].mxu0
        %4115 = vmatprep.mubr.bf16.mxu0 0
        %4116 = vmatmul.mubr.bf16.gmra.mrb[0].mxu0 %v2614
        %v4117 = vpop.f32.mrb[0].mxu0
        %v4118 = vadd.f32 %v3957, %v4117
        %v4119 = vpop.f32.mrb[0].mxu0
        %v4120 = vpop.f32.mrb[0].mxu0
        %v4121 = vadd.f32 %v3960, %v4120
        %v4122 = vpop.f32.mrb[0].mxu0
        %4123 = vmatprep.mubr.bf16.mxu0 0
        %4124 = vmatmul.mubr.bf16.gmra.mrb[0].mxu0 %v2615
        %v4125 = vpop.f32.mrb[0].mxu0
        %v4126 = vadd.f32 %v3965, %v4125
        %v4127 = vpop.f32.mrb[0].mxu0
        %v4128 = vpop.f32.mrb[0].mxu0
        %v4129 = vadd.f32 %v3968, %v4128
        %v4130 = vpop.f32.mrb[0].mxu0
        %4131 = vmatprep.mubr.bf16.mxu0 0
        %4132 = vmatmul.mubr.bf16.gmra.mrb[0].mxu0 %v2616
        %v4133 = vpop.f32.mrb[0].mxu0
        %v4134 = vadd.f32 %v3973, %v4133
        %v4135 = vpop.f32.mrb[0].mxu0
        %v4136 = vpop.f32.mrb[0].mxu0
        %v4137 = vadd.f32 %v3976, %v4136
        %v4138 = vpop.f32.mrb[0].mxu0
        %4139 = vmatprep.mubr.bf16.mxu0 0
        %4140 = vmatmul.mubr.bf16.gmra.mrb[0].mxu0 %v2617
        %v4141 = vpop.f32.mrb[0].mxu0
        %v4142 = vadd.f32 %v3981, %v4141
        %v4143 = vpop.f32.mrb[0].mxu0
        %v4144 = vpop.f32.mrb[0].mxu0
        %v4145 = vadd.f32 %v3984, %v4144
        %v4146 = vpop.f32.mrb[0].mxu0
        %4147 = vmatprep.mubr.bf16.mxu0 0
        %4148 = vmatmul.mubr.bf16.gmra.mrb[0].mxu0 %v2618
        %v4149 = vpop.f32.mrb[0].mxu0
        %v4150 = vadd.f32 %v3989, %v4149
        %v4151 = vpop.f32.mrb[0].mxu0
        %v4152 = vpop.f32.mrb[0].mxu0
        %v4153 = vadd.f32 %v3992, %v4152
        %v4154 = vpop.f32.mrb[0].mxu0
        %4155 = vmatprep.mubr.bf16.mxu0 0
        %4156 = vmatmul.mubr.bf16.gmra.mrb[0].mxu0 %v2619
        %v4157 = vpop.f32.mrb[0].mxu0
        %v4158 = vadd.f32 %v3997, %v4157
        %v4159 = vpop.f32.mrb[0].mxu0
        %v4160 = vpop.f32.mrb[0].mxu0
        %v4161 = vadd.f32 %v4000, %v4160
        %v4162 = vpop.f32.mrb[0].mxu0
        %4163 = vdwg.mxu0
        %v4164 = vadd.f32 %v3523, %v4038
        %v4165 = vadd.f32 %v3526, %v4041
        %v4166 = vadd.f32 %v3531, %v4046
        %v4167 = vadd.f32 %v3534, %v4049
        %v4168 = vadd.f32 %v3539, %v4054
        %v4169 = vadd.f32 %v3542, %v4057
        %v4170 = vadd.f32 %v3547, %v4062
        %v4171 = vadd.f32 %v3550, %v4065
        %v4172 = vadd.f32 %v3555, %v4070
        %v4173 = vadd.f32 %v3558, %v4073
        %v4174 = vadd.f32 %v3563, %v4078
        %v4175 = vadd.f32 %v3566, %v4081
        %v4176 = vadd.f32 %v3571, %v4086
        %v4177 = vadd.f32 %v3574, %v4089
        %v4178 = vadd.f32 %v3579, %v4094
        %v4179 = vadd.f32 %v3582, %v4097
        %v4180 = vadd.f32 %v3587, %v4102
        %v4181 = vadd.f32 %v3590, %v4105
        %v4182 = vadd.f32 %v3595, %v4110
        %v4183 = vadd.f32 %v3598, %v4113
        %v4184 = vadd.f32 %v3603, %v4118
        %v4185 = vadd.f32 %v3606, %v4121
        %v4186 = vadd.f32 %v3611, %v4126
        %v4187 = vadd.f32 %v3614, %v4129
        %v4188 = vadd.f32 %v3619, %v4134
        %v4189 = vadd.f32 %v3622, %v4137
        %v4190 = vadd.f32 %v3627, %v4142
        %v4191 = vadd.f32 %v3630, %v4145
        %v4192 = vadd.f32 %v3635, %v4150
        %v4193 = vadd.f32 %v3638, %v4153
        %v4194 = vadd.f32 %v3643, %v4158
        %v4195 = vadd.f32 %v3646, %v4161
        %v4196 = vld [vmem:[#allocation14] sm:$0x1]
        %v4198 = vlaneseq
        %v4199 = vshrl.u32 %v4198, 7
        %v4200 = vsub.s32 0, %v4199
        %v4201 = vrot.slane %v4196, %v4200
        %v4203 = vmul.f32 %v4164, %v4201
        %v4204 = vmul.f32 %v4165, %v4201
        %v4205 = vmul.f32 %v4166, %v4201
        %v4206 = vmul.f32 %v4167, %v4201
        %v4207 = vmul.f32 %v4168, %v4201
        %v4208 = vmul.f32 %v4169, %v4201
        %v4209 = vmul.f32 %v4170, %v4201
        %v4210 = vmul.f32 %v4171, %v4201
        %v4211 = vmul.f32 %v4172, %v4201
        %v4212 = vmul.f32 %v4173, %v4201
        %v4213 = vmul.f32 %v4174, %v4201
        %v4214 = vmul.f32 %v4175, %v4201
        %v4215 = vmul.f32 %v4176, %v4201
        %v4216 = vmul.f32 %v4177, %v4201
        %v4217 = vmul.f32 %v4178, %v4201
        %v4218 = vmul.f32 %v4179, %v4201
        %v4219 = vmul.f32 %v4180, %v4201
        %v4220 = vmul.f32 %v4181, %v4201
        %v4221 = vmul.f32 %v4182, %v4201
        %v4222 = vmul.f32 %v4183, %v4201
        %v4223 = vmul.f32 %v4184, %v4201
        %v4224 = vmul.f32 %v4185, %v4201
        %v4225 = vmul.f32 %v4186, %v4201
        %v4226 = vmul.f32 %v4187, %v4201
        %v4227 = vmul.f32 %v4188, %v4201
        %v4228 = vmul.f32 %v4189, %v4201
        %v4229 = vmul.f32 %v4190, %v4201
        %v4230 = vmul.f32 %v4191, %v4201
        %v4231 = vmul.f32 %v4192, %v4201
        %v4232 = vmul.f32 %v4193, %v4201
        %v4233 = vmul.f32 %v4194, %v4201
        %v4234 = vmul.f32 %v4195, %v4201
        %v4235 = vld [vmem:[#allocation16] sm:$0x1]
        %v4237 = vlaneseq
        %v4238 = vshrl.u32 %v4237, 7
        %v4239 = vsub.s32 0, %v4238
        %v4240 = vrot.slane %v4235, %v4239
        %v4242 = vadd.f32 %v4203, %v4240
        %v4243 = vadd.f32 %v4204, %v4240
        %v4244 = vadd.f32 %v4205, %v4240
        %v4245 = vadd.f32 %v4206, %v4240
        %v4246 = vadd.f32 %v4207, %v4240
        %v4247 = vadd.f32 %v4208, %v4240
        %v4248 = vadd.f32 %v4209, %v4240
        %v4249 = vadd.f32 %v4210, %v4240
        %v4250 = vadd.f32 %v4211, %v4240
        %v4251 = vadd.f32 %v4212, %v4240
        %v4252 = vadd.f32 %v4213, %v4240
        %v4253 = vadd.f32 %v4214, %v4240
        %v4254 = vadd.f32 %v4215, %v4240
        %v4255 = vadd.f32 %v4216, %v4240
        %v4256 = vadd.f32 %v4217, %v4240
        %v4257 = vadd.f32 %v4218, %v4240
        %v4258 = vadd.f32 %v4219, %v4240
        %v4259 = vadd.f32 %v4220, %v4240
        %v4260 = vadd.f32 %v4221, %v4240
        %v4261 = vadd.f32 %v4222, %v4240
        %v4262 = vadd.f32 %v4223, %v4240
        %v4263 = vadd.f32 %v4224, %v4240
        %v4264 = vadd.f32 %v4225, %v4240
        %v4265 = vadd.f32 %v4226, %v4240
        %v4266 = vadd.f32 %v4227, %v4240
        %v4267 = vadd.f32 %v4228, %v4240
        %v4268 = vadd.f32 %v4229, %v4240
        %v4269 = vadd.f32 %v4230, %v4240
        %v4270 = vadd.f32 %v4231, %v4240
        %v4271 = vadd.f32 %v4232, %v4240
        %v4272 = vadd.f32 %v4233, %v4240
        %v4273 = vadd.f32 %v4234, %v4240
        %v4274 = vmax.f32 %v4242, 0.0
        %v4275 = vmax.f32 %v4243, 0.0
        %v4276 = vmax.f32 %v4244, 0.0
        %v4277 = vmax.f32 %v4245, 0.0
        %v4278 = vmax.f32 %v4246, 0.0
        %v4279 = vmax.f32 %v4247, 0.0
        %v4280 = vmax.f32 %v4248, 0.0
        %v4281 = vmax.f32 %v4249, 0.0
        %v4282 = vmax.f32 %v4250, 0.0
        %v4283 = vmax.f32 %v4251, 0.0
        %v4284 = vmax.f32 %v4252, 0.0
        %v4285 = vmax.f32 %v4253, 0.0
        %v4286 = vmax.f32 %v4254, 0.0
        %v4287 = vmax.f32 %v4255, 0.0
        %v4288 = vmax.f32 %v4256, 0.0
        %v4289 = vmax.f32 %v4257, 0.0
        %v4290 = vmax.f32 %v4258, 0.0
        %v4291 = vmax.f32 %v4259, 0.0
        %v4292 = vmax.f32 %v4260, 0.0
        %v4293 = vmax.f32 %v4261, 0.0
        %v4294 = vmax.f32 %v4262, 0.0
        %v4295 = vmax.f32 %v4263, 0.0
        %v4296 = vmax.f32 %v4264, 0.0
        %v4297 = vmax.f32 %v4265, 0.0
        %v4298 = vmax.f32 %v4266, 0.0
        %v4299 = vmax.f32 %v4267, 0.0
        %v4300 = vmax.f32 %v4268, 0.0
        %v4301 = vmax.f32 %v4269, 0.0
        %v4302 = vmax.f32 %v4270, 0.0
        %v4303 = vmax.f32 %v4271, 0.0
        %v4304 = vmax.f32 %v4272, 0.0
        %v4305 = vmax.f32 %v4273, 0.0
        %v4306 = vpack.c.bf16 %v4275, %v4274
        %v4307 = vpack.c.bf16 %v4277, %v4276
        %v4308 = vpack.c.bf16 %v4279, %v4278
        %v4309 = vpack.c.bf16 %v4281, %v4280
        %v4310 = vpack.c.bf16 %v4283, %v4282
        %v4311 = vpack.c.bf16 %v4285, %v4284
        %v4312 = vpack.c.bf16 %v4287, %v4286
        %v4313 = vpack.c.bf16 %v4289, %v4288
        %v4314 = vpack.c.bf16 %v4291, %v4290
        %v4315 = vpack.c.bf16 %v4293, %v4292
        %v4316 = vpack.c.bf16 %v4295, %v4294
        %v4317 = vpack.c.bf16 %v4297, %v4296
        %v4318 = vpack.c.bf16 %v4299, %v4298
        %v4319 = vpack.c.bf16 %v4301, %v4300
        %v4320 = vpack.c.bf16 %v4303, %v4302
        %v4321 = vpack.c.bf16 %v4305, %v4304
        %v4322 = vld [vmem:[#allocation17] sm:$0xf]
        %v4323 = vld [vmem:[#allocation17 + $0x4] sm:$0xf]
        %v4324 = vld [vmem:[#allocation17 + $0x8] sm:$0xf]
        %v4325 = vld [vmem:[#allocation17 + $0xc] sm:$0xf]
        %v4326 = vld [vmem:[#allocation17 + $0x10] sm:$0xf]
        %v4327 = vld [vmem:[#allocation17 + $0x14] sm:$0xf]
        %v4328 = vld [vmem:[#allocation17 + $0x18] sm:$0xf]
        %v4329 = vld [vmem:[#allocation17 + $0x1c] sm:$0xf]
        %v4330 = vld [vmem:[#allocation17 + $0x20] sm:$0xf]
        %v4331 = vld [vmem:[#allocation17 + $0x24] sm:$0xf]
        %v4332 = vld [vmem:[#allocation17 + $0x28] sm:$0xf]
        %v4333 = vld [vmem:[#allocation17 + $0x2c] sm:$0xf]
        %v4334 = vld [vmem:[#allocation17 + $0x30] sm:$0xf]
        %v4335 = vld [vmem:[#allocation17 + $0x34] sm:$0xf]
        %v4336 = vld [vmem:[#allocation17 + $0x38] sm:$0xf]
        %v4337 = vld [vmem:[#allocation17 + $0x3c] sm:$0xf]
        %v4354 = vunpack.c.l.b16 %v4322
        %v4355 = vunpack.c.l.b16 %v4323
        %v4356 = vunpack.c.l.b16 %v4324
        %v4357 = vunpack.c.l.b16 %v4325
        %v4358 = vunpack.c.l.b16 %v4326
        %v4359 = vunpack.c.l.b16 %v4327
        %v4360 = vunpack.c.l.b16 %v4328
        %v4361 = vunpack.c.l.b16 %v4329
        %v4362 = vunpack.c.l.b16 %v4330
        %v4363 = vunpack.c.l.b16 %v4331
        %v4364 = vunpack.c.l.b16 %v4332
        %v4365 = vunpack.c.l.b16 %v4333
        %v4366 = vunpack.c.l.b16 %v4334
        %v4367 = vunpack.c.l.b16 %v4335
        %v4368 = vunpack.c.l.b16 %v4336
        %v4369 = vunpack.c.l.b16 %v4337
        %v4370 = vpack.c.b16 %v4355, %v4354
        %v4371 = vpack.c.b16 %v4357, %v4356
        %v4372 = vpack.c.b16 %v4359, %v4358
        %v4373 = vpack.c.b16 %v4361, %v4360
        %v4374 = vpack.c.b16 %v4363, %v4362
        %v4375 = vpack.c.b16 %v4365, %v4364
        %v4376 = vpack.c.b16 %v4367, %v4366
        %v4377 = vpack.c.b16 %v4369, %v4368
        %4386 = vmatprep.subr.bf16.mxu0 0
        %4387 = vmatpush1.bf16.msra.mxu0 %v4370
        %4388 = vmatprep.subr.bf16.mxu0 0
        %4389 = vmatpush1.bf16.msra.mxu0 %v4371
        %4390 = vmatprep.subr.bf16.mxu0 0
        %4391 = vmatpush1.bf16.msra.mxu0 %v4372
        %4392 = vmatprep.subr.bf16.mxu0 0
        %4393 = vmatpush1.bf16.msra.mxu0 %v4373
        %4394 = vmatprep.subr.bf16.mxu0 0
        %4395 = vmatpush1.bf16.msra.mxu0 %v4374
        %4396 = vmatprep.subr.bf16.mxu0 0
        %4397 = vmatpush1.bf16.msra.mxu0 %v4375
        %4398 = vmatprep.subr.bf16.mxu0 0
        %4399 = vmatpush1.bf16.msra.mxu0 %v4376
        %4400 = vmatprep.subr.bf16.mxu0 0
        %4401 = vmatpush1.bf16.msra.mxu0 %v4377
        %4402 = vmatprep.subr.bf16.mxu0 0
        %4403 = vmatpush1.bf16.msra.mxu0 0
        %4404 = vmatprep.subr.bf16.mxu0 0
        %4405 = vmatpush1.bf16.msra.mxu0 0
        %4406 = vmatprep.subr.bf16.mxu0 0
        %4407 = vmatpush1.bf16.msra.mxu0 0
        %4408 = vmatprep.subr.bf16.mxu0 0
        %4409 = vmatpush1.bf16.msra.mxu0 0
        %4410 = vmatprep.subr.bf16.mxu0 0
        %4411 = vmatpush1.bf16.msra.mxu0 0
        %4412 = vmatprep.subr.bf16.mxu0 0
        %4413 = vmatpush1.bf16.msra.mxu0 0
        %4414 = vmatprep.subr.bf16.mxu0 0
        %4415 = vmatpush1.bf16.msra.mxu0 0
        %4416 = vmatprep.subr.bf16.mxu0 0
        %4417 = vmatpush1.bf16.msra.mxu0 0
        %4418 = vmatprep.mubr.bf16.mxu0 0
        %4419 = vmatmul.mubr.bf16.gmra.mrb[0].mxu0 %v4306
        %v4420 = vpop.f32.mrb[0].mxu0
        %v4421 = vadd.f32 0.0, %v4420
        %v4422 = vpop.f32.mrb[0].mxu0
        %v4423 = vpop.f32.mrb[0].mxu0
        %v4424 = vadd.f32 0.0, %v4423
        %v4425 = vpop.f32.mrb[0].mxu0
        %4426 = vmatprep.mubr.bf16.mxu0 0
        %4427 = vmatmul.mubr.bf16.gmra.mrb[0].mxu0 %v4307
        %v4428 = vpop.f32.mrb[0].mxu0
        %v4429 = vadd.f32 0.0, %v4428
        %v4430 = vpop.f32.mrb[0].mxu0
        %v4431 = vpop.f32.mrb[0].mxu0
        %v4432 = vadd.f32 0.0, %v4431
        %v4433 = vpop.f32.mrb[0].mxu0
        %4434 = vmatprep.mubr.bf16.mxu0 0
        %4435 = vmatmul.mubr.bf16.gmra.mrb[0].mxu0 %v4308
        %v4436 = vpop.f32.mrb[0].mxu0
        %v4437 = vadd.f32 0.0, %v4436
        %v4438 = vpop.f32.mrb[0].mxu0
        %v4439 = vpop.f32.mrb[0].mxu0
        %v4440 = vadd.f32 0.0, %v4439
        %v4441 = vpop.f32.mrb[0].mxu0
        %4442 = vmatprep.mubr.bf16.mxu0 0
        %4443 = vmatmul.mubr.bf16.gmra.mrb[0].mxu0 %v4309
        %v4444 = vpop.f32.mrb[0].mxu0
        %v4445 = vadd.f32 0.0, %v4444
        %v4446 = vpop.f32.mrb[0].mxu0
        %v4447 = vpop.f32.mrb[0].mxu0
        %v4448 = vadd.f32 0.0, %v4447
        %v4449 = vpop.f32.mrb[0].mxu0
        %4450 = vmatprep.mubr.bf16.mxu0 0
        %4451 = vmatmul.mubr.bf16.gmra.mrb[0].mxu0 %v4310
        %v4452 = vpop.f32.mrb[0].mxu0
        %v4453 = vadd.f32 0.0, %v4452
        %v4454 = vpop.f32.mrb[0].mxu0
        %v4455 = vpop.f32.mrb[0].mxu0
        %v4456 = vadd.f32 0.0, %v4455
        %v4457 = vpop.f32.mrb[0].mxu0
        %4458 = vmatprep.mubr.bf16.mxu0 0
        %4459 = vmatmul.mubr.bf16.gmra.mrb[0].mxu0 %v4311
        %v4460 = vpop.f32.mrb[0].mxu0
        %v4461 = vadd.f32 0.0, %v4460
        %v4462 = vpop.f32.mrb[0].mxu0
        %v4463 = vpop.f32.mrb[0].mxu0
        %v4464 = vadd.f32 0.0, %v4463
        %v4465 = vpop.f32.mrb[0].mxu0
        %4466 = vmatprep.mubr.bf16.mxu0 0
        %4467 = vmatmul.mubr.bf16.gmra.mrb[0].mxu0 %v4312
        %v4468 = vpop.f32.mrb[0].mxu0
        %v4469 = vadd.f32 0.0, %v4468
        %v4470 = vpop.f32.mrb[0].mxu0
        %v4471 = vpop.f32.mrb[0].mxu0
        %v4472 = vadd.f32 0.0, %v4471
        %v4473 = vpop.f32.mrb[0].mxu0
        %4474 = vmatprep.mubr.bf16.mxu0 0
        %4475 = vmatmul.mubr.bf16.gmra.mrb[0].mxu0 %v4313
        %v4476 = vpop.f32.mrb[0].mxu0
        %v4477 = vadd.f32 0.0, %v4476
        %v4478 = vpop.f32.mrb[0].mxu0
        %v4479 = vpop.f32.mrb[0].mxu0
        %v4480 = vadd.f32 0.0, %v4479
        %v4481 = vpop.f32.mrb[0].mxu0
        %4482 = vmatprep.mubr.bf16.mxu0 0
        %4483 = vmatmul.mubr.bf16.gmra.mrb[0].mxu0 %v4314
        %v4484 = vpop.f32.mrb[0].mxu0
        %v4485 = vadd.f32 0.0, %v4484
        %v4486 = vpop.f32.mrb[0].mxu0
        %v4487 = vpop.f32.mrb[0].mxu0
        %v4488 = vadd.f32 0.0, %v4487
        %v4489 = vpop.f32.mrb[0].mxu0
        %4490 = vmatprep.mubr.bf16.mxu0 0
        %4491 = vmatmul.mubr.bf16.gmra.mrb[0].mxu0 %v4315
        %v4492 = vpop.f32.mrb[0].mxu0
        %v4493 = vadd.f32 0.0, %v4492
        %v4494 = vpop.f32.mrb[0].mxu0
        %v4495 = vpop.f32.mrb[0].mxu0
        %v4496 = vadd.f32 0.0, %v4495
        %v4497 = vpop.f32.mrb[0].mxu0
        %4498 = vmatprep.mubr.bf16.mxu0 0
        %4499 = vmatmul.mubr.bf16.gmra.mrb[0].mxu0 %v4316
        %v4500 = vpop.f32.mrb[0].mxu0
        %v4501 = vadd.f32 0.0, %v4500
        %v4502 = vpop.f32.mrb[0].mxu0
        %v4503 = vpop.f32.mrb[0].mxu0
        %v4504 = vadd.f32 0.0, %v4503
        %v4505 = vpop.f32.mrb[0].mxu0
        %4506 = vmatprep.mubr.bf16.mxu0 0
        %4507 = vmatmul.mubr.bf16.gmra.mrb[0].mxu0 %v4317
        %v4508 = vpop.f32.mrb[0].mxu0
        %v4509 = vadd.f32 0.0, %v4508
        %v4510 = vpop.f32.mrb[0].mxu0
        %v4511 = vpop.f32.mrb[0].mxu0
        %v4512 = vadd.f32 0.0, %v4511
        %v4513 = vpop.f32.mrb[0].mxu0
        %4514 = vmatprep.mubr.bf16.mxu0 0
        %4515 = vmatmul.mubr.bf16.gmra.mrb[0].mxu0 %v4318
        %v4516 = vpop.f32.mrb[0].mxu0
        %v4517 = vadd.f32 0.0, %v4516
        %v4518 = vpop.f32.mrb[0].mxu0
        %v4519 = vpop.f32.mrb[0].mxu0
        %v4520 = vadd.f32 0.0, %v4519
        %v4521 = vpop.f32.mrb[0].mxu0
        %4522 = vmatprep.mubr.bf16.mxu0 0
        %4523 = vmatmul.mubr.bf16.gmra.mrb[0].mxu0 %v4319
        %v4524 = vpop.f32.mrb[0].mxu0
        %v4525 = vadd.f32 0.0, %v4524
        %v4526 = vpop.f32.mrb[0].mxu0
        %v4527 = vpop.f32.mrb[0].mxu0
        %v4528 = vadd.f32 0.0, %v4527
        %v4529 = vpop.f32.mrb[0].mxu0
        %4530 = vmatprep.mubr.bf16.mxu0 0
        %4531 = vmatmul.mubr.bf16.gmra.mrb[0].mxu0 %v4320
        %v4532 = vpop.f32.mrb[0].mxu0
        %v4533 = vadd.f32 0.0, %v4532
        %v4534 = vpop.f32.mrb[0].mxu0
        %v4535 = vpop.f32.mrb[0].mxu0
        %v4536 = vadd.f32 0.0, %v4535
        %v4537 = vpop.f32.mrb[0].mxu0
        %4538 = vmatprep.mubr.bf16.mxu0 0
        %4539 = vmatmul.mubr.bf16.gmra.mrb[0].mxu0 %v4321
        %v4540 = vpop.f32.mrb[0].mxu0
        %v4541 = vadd.f32 0.0, %v4540
        %v4542 = vpop.f32.mrb[0].mxu0
        %v4543 = vpop.f32.mrb[0].mxu0
        %v4544 = vadd.f32 0.0, %v4543
        %v4545 = vpop.f32.mrb[0].mxu0
        %4546 = vdwg.mxu0
        %v4547 = vld [vmem:[#allocation19] sm:$0x1]
        %v4549 = vlaneseq
        %v4550 = vshrl.u32 %v4549, 7
        %v4551 = vsub.s32 0, %v4550
        %v4552 = vrot.slane %v4547, %v4551
        %v4554 = vmul.f32 %v4421, %v4552
        %v4555 = vmul.f32 %v4424, %v4552
        %v4556 = vmul.f32 %v4429, %v4552
        %v4557 = vmul.f32 %v4432, %v4552
        %v4558 = vmul.f32 %v4437, %v4552
        %v4559 = vmul.f32 %v4440, %v4552
        %v4560 = vmul.f32 %v4445, %v4552
        %v4561 = vmul.f32 %v4448, %v4552
        %v4562 = vmul.f32 %v4453, %v4552
        %v4563 = vmul.f32 %v4456, %v4552
        %v4564 = vmul.f32 %v4461, %v4552
        %v4565 = vmul.f32 %v4464, %v4552
        %v4566 = vmul.f32 %v4469, %v4552
        %v4567 = vmul.f32 %v4472, %v4552
        %v4568 = vmul.f32 %v4477, %v4552
        %v4569 = vmul.f32 %v4480, %v4552
        %v4570 = vmul.f32 %v4485, %v4552
        %v4571 = vmul.f32 %v4488, %v4552
        %v4572 = vmul.f32 %v4493, %v4552
        %v4573 = vmul.f32 %v4496, %v4552
        %v4574 = vmul.f32 %v4501, %v4552
        %v4575 = vmul.f32 %v4504, %v4552
        %v4576 = vmul.f32 %v4509, %v4552
        %v4577 = vmul.f32 %v4512, %v4552
        %v4578 = vmul.f32 %v4517, %v4552
        %v4579 = vmul.f32 %v4520, %v4552
        %v4580 = vmul.f32 %v4525, %v4552
        %v4581 = vmul.f32 %v4528, %v4552
        %v4582 = vmul.f32 %v4533, %v4552
        %v4583 = vmul.f32 %v4536, %v4552
        %v4584 = vmul.f32 %v4541, %v4552
        %v4585 = vmul.f32 %v4544, %v4552
        %v4586 = vld [vmem:[#allocation20] sm:$0x1]
        %v4588 = vlaneseq
        %v4589 = vshrl.u32 %v4588, 7
        %v4590 = vsub.s32 0, %v4589
        %v4591 = vrot.slane %v4586, %v4590
        %v4593 = vadd.f32 %v4554, %v4591
        %v4594 = vadd.f32 %v4555, %v4591
        %v4595 = vadd.f32 %v4556, %v4591
        %v4596 = vadd.f32 %v4557, %v4591
        %v4597 = vadd.f32 %v4558, %v4591
        %v4598 = vadd.f32 %v4559, %v4591
        %v4599 = vadd.f32 %v4560, %v4591
        %v4600 = vadd.f32 %v4561, %v4591
        %v4601 = vadd.f32 %v4562, %v4591
        %v4602 = vadd.f32 %v4563, %v4591
        %v4603 = vadd.f32 %v4564, %v4591
        %v4604 = vadd.f32 %v4565, %v4591
        %v4605 = vadd.f32 %v4566, %v4591
        %v4606 = vadd.f32 %v4567, %v4591
        %v4607 = vadd.f32 %v4568, %v4591
        %v4608 = vadd.f32 %v4569, %v4591
        %v4609 = vadd.f32 %v4570, %v4591
        %v4610 = vadd.f32 %v4571, %v4591
        %v4611 = vadd.f32 %v4572, %v4591
        %v4612 = vadd.f32 %v4573, %v4591
        %v4613 = vadd.f32 %v4574, %v4591
        %v4614 = vadd.f32 %v4575, %v4591
        %v4615 = vadd.f32 %v4576, %v4591
        %v4616 = vadd.f32 %v4577, %v4591
        %v4617 = vadd.f32 %v4578, %v4591
        %v4618 = vadd.f32 %v4579, %v4591
        %v4619 = vadd.f32 %v4580, %v4591
        %v4620 = vadd.f32 %v4581, %v4591
        %v4621 = vadd.f32 %v4582, %v4591
        %v4622 = vadd.f32 %v4583, %v4591
        %v4623 = vadd.f32 %v4584, %v4591
        %v4624 = vadd.f32 %v4585, %v4591
        %v4625 = vunpack.c.l.bf16 %v803
        %v4626 = vunpack.c.l.bf16 %v804
        %v4627 = vunpack.c.l.bf16 %v805
        %v4628 = vunpack.c.l.bf16 %v806
        %v4629 = vunpack.c.l.bf16 %v807
        %v4630 = vunpack.c.l.bf16 %v808
        %v4631 = vunpack.c.l.bf16 %v809
        %v4632 = vunpack.c.l.bf16 %v810
        %v4633 = vunpack.c.l.bf16 %v811
        %v4634 = vunpack.c.l.bf16 %v812
        %v4635 = vunpack.c.l.bf16 %v813
        %v4636 = vunpack.c.l.bf16 %v814
        %v4637 = vunpack.c.l.bf16 %v815
        %v4638 = vunpack.c.l.bf16 %v816
        %v4639 = vunpack.c.l.bf16 %v817
        %v4640 = vunpack.c.l.bf16 %v818
        %v4641 = vunpack.c.l.bf16 %v819
        %v4642 = vunpack.c.l.bf16 %v820
        %v4643 = vunpack.c.l.bf16 %v821
        %v4644 = vunpack.c.l.bf16 %v822
        %v4645 = vunpack.c.l.bf16 %v823
        %v4646 = vunpack.c.l.bf16 %v824
        %v4647 = vunpack.c.l.bf16 %v825
        %v4648 = vunpack.c.l.bf16 %v826
        %v4649 = vunpack.c.l.bf16 %v827
        %v4650 = vunpack.c.l.bf16 %v828
        %v4651 = vunpack.c.l.bf16 %v829
        %v4652 = vunpack.c.l.bf16 %v830
        %v4653 = vunpack.c.l.bf16 %v831
        %v4654 = vunpack.c.l.bf16 %v832
        %v4655 = vunpack.c.l.bf16 %v833
        %v4656 = vunpack.c.l.bf16 %v834
        %v4657 = vadd.f32 %v4593, %v4625
        %v4658 = vadd.f32 %v4594, %v4626
        %v4659 = vadd.f32 %v4595, %v4627
        %v4660 = vadd.f32 %v4596, %v4628
        %v4661 = vadd.f32 %v4597, %v4629
        %v4662 = vadd.f32 %v4598, %v4630
        %v4663 = vadd.f32 %v4599, %v4631
        %v4664 = vadd.f32 %v4600, %v4632
        %v4665 = vadd.f32 %v4601, %v4633
        %v4666 = vadd.f32 %v4602, %v4634
        %v4667 = vadd.f32 %v4603, %v4635
        %v4668 = vadd.f32 %v4604, %v4636
        %v4669 = vadd.f32 %v4605, %v4637
        %v4670 = vadd.f32 %v4606, %v4638
        %v4671 = vadd.f32 %v4607, %v4639
        %v4672 = vadd.f32 %v4608, %v4640
        %v4673 = vadd.f32 %v4609, %v4641
        %v4674 = vadd.f32 %v4610, %v4642
        %v4675 = vadd.f32 %v4611, %v4643
        %v4676 = vadd.f32 %v4612, %v4644
        %v4677 = vadd.f32 %v4613, %v4645
        %v4678 = vadd.f32 %v4614, %v4646
        %v4679 = vadd.f32 %v4615, %v4647
        %v4680 = vadd.f32 %v4616, %v4648
        %v4681 = vadd.f32 %v4617, %v4649
        %v4682 = vadd.f32 %v4618, %v4650
        %v4683 = vadd.f32 %v4619, %v4651
        %v4684 = vadd.f32 %v4620, %v4652
        %v4685 = vadd.f32 %v4621, %v4653
        %v4686 = vadd.f32 %v4622, %v4654
        %v4687 = vadd.f32 %v4623, %v4655
        %v4688 = vadd.f32 %v4624, %v4656
        %v4689 = vmax.f32 %v4657, 0.0
        %v4690 = vmax.f32 %v4658, 0.0
        %v4691 = vmax.f32 %v4659, 0.0
        %v4692 = vmax.f32 %v4660, 0.0
        %v4693 = vmax.f32 %v4661, 0.0
        %v4694 = vmax.f32 %v4662, 0.0
        %v4695 = vmax.f32 %v4663, 0.0
        %v4696 = vmax.f32 %v4664, 0.0
        %v4697 = vmax.f32 %v4665, 0.0
        %v4698 = vmax.f32 %v4666, 0.0
        %v4699 = vmax.f32 %v4667, 0.0
        %v4700 = vmax.f32 %v4668, 0.0
        %v4701 = vmax.f32 %v4669, 0.0
        %v4702 = vmax.f32 %v4670, 0.0
        %v4703 = vmax.f32 %v4671, 0.0
        %v4704 = vmax.f32 %v4672, 0.0
        %v4705 = vmax.f32 %v4673, 0.0
        %v4706 = vmax.f32 %v4674, 0.0
        %v4707 = vmax.f32 %v4675, 0.0
        %v4708 = vmax.f32 %v4676, 0.0
        %v4709 = vmax.f32 %v4677, 0.0
        %v4710 = vmax.f32 %v4678, 0.0
        %v4711 = vmax.f32 %v4679, 0.0
        %v4712 = vmax.f32 %v4680, 0.0
        %v4713 = vmax.f32 %v4681, 0.0
        %v4714 = vmax.f32 %v4682, 0.0
        %v4715 = vmax.f32 %v4683, 0.0
        %v4716 = vmax.f32 %v4684, 0.0
        %v4717 = vmax.f32 %v4685, 0.0
        %v4718 = vmax.f32 %v4686, 0.0
        %v4719 = vmax.f32 %v4687, 0.0
        %v4720 = vmax.f32 %v4688, 0.0
        %v4721 = vpack.c.bf16 %v4690, %v4689
        %v4722 = vpack.c.bf16 %v4692, %v4691
        %v4723 = vpack.c.bf16 %v4694, %v4693
        %v4724 = vpack.c.bf16 %v4696, %v4695
        %v4725 = vpack.c.bf16 %v4698, %v4697
        %v4726 = vpack.c.bf16 %v4700, %v4699
        %v4727 = vpack.c.bf16 %v4702, %v4701
        %v4728 = vpack.c.bf16 %v4704, %v4703
        %v4729 = vpack.c.bf16 %v4706, %v4705
        %v4730 = vpack.c.bf16 %v4708, %v4707
        %v4731 = vpack.c.bf16 %v4710, %v4709
        %v4732 = vpack.c.bf16 %v4712, %v4711
        %v4733 = vpack.c.bf16 %v4714, %v4713
        %v4734 = vpack.c.bf16 %v4716, %v4715
        %v4735 = vpack.c.bf16 %v4718, %v4717
        %v4736 = vpack.c.bf16 %v4720, %v4719
        %v4753 = vunpack.c.l.b16 %v4721
        %v4754 = vunpack.c.h.b16 %v4721
        %v4755 = vunpack.c.l.b16 %v4722
        %v4756 = vunpack.c.h.b16 %v4722
        %v4757 = vunpack.c.l.b16 %v4723
        %v4758 = vunpack.c.h.b16 %v4723
        %v4759 = vunpack.c.l.b16 %v4724
        %v4760 = vunpack.c.h.b16 %v4724
        %v4761 = vunpack.c.l.b16 %v4725
        %v4762 = vunpack.c.h.b16 %v4725
        %v4763 = vunpack.c.l.b16 %v4726
        %v4764 = vunpack.c.h.b16 %v4726
        %v4765 = vunpack.c.l.b16 %v4727
        %v4766 = vunpack.c.h.b16 %v4727
        %v4767 = vunpack.c.l.b16 %v4728
        %v4768 = vunpack.c.h.b16 %v4728
        %v4769 = vunpack.c.l.b16 %v4729
        %v4770 = vunpack.c.h.b16 %v4729
        %v4771 = vunpack.c.l.b16 %v4730
        %v4772 = vunpack.c.h.b16 %v4730
        %v4773 = vunpack.c.l.b16 %v4731
        %v4774 = vunpack.c.h.b16 %v4731
        %v4775 = vunpack.c.l.b16 %v4732
        %v4776 = vunpack.c.h.b16 %v4732
        %v4777 = vunpack.c.l.b16 %v4733
        %v4778 = vunpack.c.h.b16 %v4733
        %v4779 = vunpack.c.l.b16 %v4734
        %v4780 = vunpack.c.h.b16 %v4734
        %v4781 = vunpack.c.l.b16 %v4735
        %v4782 = vunpack.c.h.b16 %v4735
        %v4783 = vunpack.c.l.b16 %v4736
        %v4784 = vunpack.c.h.b16 %v4736
        %v4785 = vpack.c.b16 %v4753, %v4753
        %v4786 = vpack.c.b16 %v4754, %v4754
        %v4787 = vpack.c.b16 %v4755, %v4755
        %v4788 = vpack.c.b16 %v4756, %v4756
        %v4789 = vpack.c.b16 %v4757, %v4757
        %v4790 = vpack.c.b16 %v4758, %v4758
        %v4791 = vpack.c.b16 %v4759, %v4759
        %v4792 = vpack.c.b16 %v4760, %v4760
        %v4793 = vpack.c.b16 %v4761, %v4761
        %v4794 = vpack.c.b16 %v4762, %v4762
        %v4795 = vpack.c.b16 %v4763, %v4763
        %v4796 = vpack.c.b16 %v4764, %v4764
        %v4797 = vpack.c.b16 %v4765, %v4765
        %v4798 = vpack.c.b16 %v4766, %v4766
        %v4799 = vpack.c.b16 %v4767, %v4767
        %v4800 = vpack.c.b16 %v4768, %v4768
        %v4801 = vpack.c.b16 %v4769, %v4769
        %v4802 = vpack.c.b16 %v4770, %v4770
        %v4803 = vpack.c.b16 %v4771, %v4771
        %v4804 = vpack.c.b16 %v4772, %v4772
        %v4805 = vpack.c.b16 %v4773, %v4773
        %v4806 = vpack.c.b16 %v4774, %v4774
        %v4807 = vpack.c.b16 %v4775, %v4775
        %v4808 = vpack.c.b16 %v4776, %v4776
        %v4809 = vpack.c.b16 %v4777, %v4777
        %v4810 = vpack.c.b16 %v4778, %v4778
        %v4811 = vpack.c.b16 %v4779, %v4779
        %v4812 = vpack.c.b16 %v4780, %v4780
        %v4813 = vpack.c.b16 %v4781, %v4781
        %v4814 = vpack.c.b16 %v4782, %v4782
        %v4815 = vpack.c.b16 %v4783, %v4783
        %v4816 = vpack.c.b16 %v4784, %v4784
        %4849 = vst [vmem:[%s678] sm:$0xf] %v4785
        %4850 = vst [vmem:[%s678 + $0x4] sm:$0xf] %v4786
        %4851 = vst [vmem:[%s678 + $0x8] sm:$0xf] %v4787
        %4852 = vst [vmem:[%s678 + $0xc] sm:$0xf] %v4788
        %4853 = vst [vmem:[%s678 + $0x10] sm:$0xf] %v4789
        %4854 = vst [vmem:[%s678 + $0x14] sm:$0xf] %v4790
        %4855 = vst [vmem:[%s678 + $0x18] sm:$0xf] %v4791
        %4856 = vst [vmem:[%s678 + $0x1c] sm:$0xf] %v4792
        %4857 = vst [vmem:[%s678 + $0x20] sm:$0xf] %v4793
        %4858 = vst [vmem:[%s678 + $0x24] sm:$0xf] %v4794
        %4859 = vst [vmem:[%s678 + $0x28] sm:$0xf] %v4795
        %4860 = vst [vmem:[%s678 + $0x2c] sm:$0xf] %v4796
        %4861 = vst [vmem:[%s678 + $0x30] sm:$0xf] %v4797
        %4862 = vst [vmem:[%s678 + $0x34] sm:$0xf] %v4798
        %4863 = vst [vmem:[%s678 + $0x38] sm:$0xf] %v4799
        %4864 = vst [vmem:[%s678 + $0x3c] sm:$0xf] %v4800
        %4865 = vst [vmem:[%s678 + $0x40] sm:$0xf] %v4801
        %4866 = vst [vmem:[%s678 + $0x44] sm:$0xf] %v4802
        %4867 = vst [vmem:[%s678 + $0x48] sm:$0xf] %v4803
        %4868 = vst [vmem:[%s678 + $0x4c] sm:$0xf] %v4804
        %4869 = vst [vmem:[%s678 + $0x50] sm:$0xf] %v4805
        %4870 = vst [vmem:[%s678 + $0x54] sm:$0xf] %v4806
        %4871 = vst [vmem:[%s678 + $0x58] sm:$0xf] %v4807
        %4872 = vst [vmem:[%s678 + $0x5c] sm:$0xf] %v4808
        %4873 = vst [vmem:[%s678 + $0x60] sm:$0xf] %v4809
        %4874 = vst [vmem:[%s678 + $0x64] sm:$0xf] %v4810
        %4875 = vst [vmem:[%s678 + $0x68] sm:$0xf] %v4811
        %4876 = vst [vmem:[%s678 + $0x6c] sm:$0xf] %v4812
        %4877 = vst [vmem:[%s678 + $0x70] sm:$0xf] %v4813
        %4878 = vst [vmem:[%s678 + $0x74] sm:$0xf] %v4814
        %4879 = vst [vmem:[%s678 + $0x78] sm:$0xf] %v4815
        %4880 = vst [vmem:[%s678 + $0x7c] sm:$0xf] %v4816
        %s4881 = sand.u32 %s348, 1
        %s4882 = scalar_lea.sflag [#allocation4], %s4881
        %s4883 = sand.u32 %s348, 1
        %s4884 = smul.addr %s4883, 128
        %s4885 = scalar_lea.vmem [#allocation22], %s4884
        // Predicated region
        $region117: #{tpu_custom_call.1} parent=67 // pred_check
          %p4886 = pneg %p358
        $region118: #{tpu_custom_call.1} parent=67 // pred_check_branch
          %4888 = sbr.rel (%p4886) target = $region120
        $region119: #{tpu_custom_call.1} parent=67 // pred_region
          %s4889 = smul.u32 16, %s42
          %s4891 = ssub.s32 2048, 2048
          %4892 = vsyncadd %s4882, %s4891
          %s4893 = smul.addr %s4889, 2
          %s4894 = smul.addr %s41, 32
          %s4895 = sadd.s32 %s4893, %s4894
          %s4896 = smul.addr %s4895, 64
          %s4897 = scalar_lea.hbm %s12, %s4896
          %s4898 = sshll.u32 %s4885, 4
          %s4899 = int_to_ptr.vmem [resolvable:$true] %s4898
          %4904 = dma.vmem_to_hbm [thread:$0]  %s4899, 2048, %s4897, %s4882, 64, 64, 4
        $region120: #{tpu_custom_call.1} parent=67 // pred_fallthru
          _
      $region68: #{tpu_custom_call.1} parent=5 // pred_fallthru
        _
      %p4905 = scmp.le.s32.totalorder 2, %s32
      // Predicated region
      $region121: #{tpu_custom_call.1} parent=5 // pred_check
        %p4906 = pneg %p4905
      $region122: #{tpu_custom_call.1} parent=5 // pred_check_branch
        %4908 = sbr.rel (%p4906) target = $region124
      $region123: #{tpu_custom_call.1} parent=5 // pred_region
        %s4909 = ssub.s32 %s32, 2
        // Predicated region
        $region125: #{tpu_custom_call.1} parent=123 // pred_check
          %p4910 = pneg %p364
        $region126: #{tpu_custom_call.1} parent=123 // pred_check_branch
          %4912 = sbr.rel (%p4910) target = $region128
        $region127: #{tpu_custom_call.1} parent=123 // pred_region
          %s4913 = sand.u32 %s349, 1
          %s4914 = scalar_lea.sflag [#allocation4], %s4913
          %s4915 = sand.u32 %s349, 1
          %s4916 = smul.addr %s4915, 128
          %s4917 = scalar_lea.vmem [#allocation22], %s4916
          %4918 = dma.done %s4914, 2048
        $region128: #{tpu_custom_call.1} parent=123 // pred_fallthru
          _
      $region124: #{tpu_custom_call.1} parent=5 // pred_fallthru
        _
    $region6: #{tpu_custom_call.1} parent=1 // loop_footer
      %s36 = sadd.s32 1, %s32
    $region7: #{tpu_custom_call.1} parent=1 // loop_footer_branch
      %31 = sbr.rel target = $region3
    $region8: #{tpu_custom_call.1} parent=1 // loop_exit
      _
    %4919 = vsyncpa [#allocation3], 1
    %s4920 = scalar_lea.sflag [#allocation3], 1
    %4921 = vsyncpa %s4920, 1
    %4922 = vsyncpa [#allocation6], 1
    %s4923 = scalar_lea.sflag [#allocation6], 1
    %4924 = vsyncpa %s4923, 1
    %4925 = vsyncpa [#allocation9], 1
    %4926 = vsyncpa [#allocation12], 1
    %4927 = vsyncpa [#allocation15], 1
    %4928 = vsyncpa [#allocation18], 1
    %4929 = vsyncpa [#allocation21], 1
    %4930 = vsyncpa [#allocation4], 1
    %s4931 = scalar_lea.sflag [#allocation4], 1
    %4932 = vsyncpa %s4931, 1

</llo_original>
